<compile_context>
chip_gen: v7x
topology: tpu7x:2x2x1
jax: 0.10.0
libtpu: 0.0.40
codegen_flags: <defaults>
</compile_context>

<pallas_src>
import functools

import jax
import jax.numpy as jnp
from jax.experimental import pallas as pl
from jax.experimental.pallas import tpu as pltpu

EPS = 1e-5
NEG_SLOPE = 0.01        # F.leaky_relu default
HIDDEN = 256
TM = 256                # node (output-row) tile
TK = 256                # aggregation reduction tile (columns of A_norm)


def _round_up(v, m):
    return ((v + m - 1) // m) * m


def _sage_layer_kernel(a_ref, xk_ref, xi_ref, mu_ref, rstd_ref, g_ref, be_ref,
                       wl_ref, wr_ref, bl_ref, out_ref, acc_ref,
                       *, apply_softmax, valid_out):
    """One fused layer: BN (precomputed stats) -> SAGEConv(mean) -> LeakyReLU
    (-> masked softmax for the last layer)."""
    k = pl.program_id(1)

    @pl.when(k == 0)
    def _():
        acc_ref[...] = jnp.zeros_like(acc_ref)

    # BatchNorm on the neighbor (k) block, then one [TM,TK]x[TK,F] slice of the
    # mean-aggregation matmul on the MXU in bf16 (f32 accumulate).
    xn_k = (xk_ref[...] - mu_ref[...]) * rstd_ref[...] * g_ref[...] + be_ref[...]
    acc_ref[...] += jnp.dot(a_ref[...], xn_k.astype(jnp.bfloat16),
                            preferred_element_type=jnp.float32)

    @pl.when(k == pl.num_programs(1) - 1)
    def _():
        # Root term + projection only once per node tile.
        xn_i = (xi_ref[...] - mu_ref[...]) * rstd_ref[...] * g_ref[...] + be_ref[...]
        h = (jnp.dot(acc_ref[...], wl_ref[...], preferred_element_type=jnp.float32)
             + bl_ref[...]
             + jnp.dot(xn_i, wr_ref[...], preferred_element_type=jnp.float32))
        h = jnp.where(h > 0, h, NEG_SLOPE * h)                    # leaky_relu
        if apply_softmax:
            col = jax.lax.broadcasted_iota(jnp.int32, h.shape, 1)
            h = jnp.where(col < valid_out, h, -jnp.inf)           # mask pad lanes
            m = jnp.max(h, axis=1, keepdims=True)
            e = jnp.exp(h - m)
            s = jnp.sum(e, axis=1, keepdims=True)
            h = e * pl.reciprocal(s, approx=True)                 # EUP divide
        out_ref[...] = h.astype(out_ref.dtype)


def _sage_layer(a_pad, x_pad, mu, rstd, g, be, wl, wr, bl,
                *, out_width, apply_softmax, valid_out):
    np_, fp = x_pad.shape
    grid = (np_ // TM, np_ // TK)

    kernel = functools.partial(_sage_layer_kernel,
                               apply_softmax=apply_softmax, valid_out=valid_out)

    return pl.pallas_call(
        kernel,
        out_shape=jax.ShapeDtypeStruct((np_, out_width), jnp.float32),
        grid_spec=pltpu.PrefetchScalarGridSpec(
            num_scalar_prefetch=0,
            grid=grid,
            in_specs=[
                pl.BlockSpec((TM, TK), lambda i, k: (i, k)),          # A tile (bf16)
                pl.BlockSpec((TK, fp), lambda i, k: (k, 0)),          # x neighbor block
                pl.BlockSpec((TM, fp), lambda i, k: (i, 0)),          # x root block
                pl.BlockSpec((1, fp), lambda i, k: (0, 0)),           # BN mean
                pl.BlockSpec((1, fp), lambda i, k: (0, 0)),           # BN inv-std
                pl.BlockSpec((1, fp), lambda i, k: (0, 0)),           # BN gamma
                pl.BlockSpec((1, fp), lambda i, k: (0, 0)),           # BN beta
                pl.BlockSpec((fp, out_width), lambda i, k: (0, 0)),   # W_l
                pl.BlockSpec((fp, out_width), lambda i, k: (0, 0)),   # W_r
                pl.BlockSpec((1, out_width), lambda i, k: (0, 0)),    # b_l
            ],
            out_specs=pl.BlockSpec((TM, out_width), lambda i, k: (i, 0)),
            scratch_shapes=[pltpu.VMEM((TM, fp), jnp.float32)],       # agg accumulator
        ),
        compiler_params=pltpu.CompilerParams(
            dimension_semantics=("parallel", "arbitrary")),
    )(a_pad, x_pad, x_pad, mu, rstd, g, be, wl, wr, bl)


def _batch_stats(x_real, f_pad):
    """BatchNorm1d training-mode batch statistics (biased var), padded to f_pad."""
    mu = jnp.mean(x_real, axis=0, keepdims=True)
    var = jnp.mean((x_real - mu) ** 2, axis=0, keepdims=True)
    rstd = jax.lax.rsqrt(var + EPS)
    pad = f_pad - x_real.shape[1]
    mu = jnp.pad(mu, ((0, 0), (0, pad)))
    rstd = jnp.pad(rstd, ((0, 0), (0, pad)), constant_values=1.0)
    return mu, rstd


@functools.partial(jax.jit, static_argnames=("out_dim",))
def regc_forward(x, edge_index, params, out_dim):
    """x: [N, F_in] float32, edge_index: [2, E] int32 (row0=src, row1=dst)."""
    n, f_in = x.shape
    (g1, be1, wl1, wr1, bl1, g2, be2, wl2, wr2, bl2) = params

    np_ = _round_up(n, max(TM, TK))
    fp = _round_up(f_in, 128)
    out_p = _round_up(out_dim, 128)

    # Dense row-normalized adjacency for PyG scatter_mean aggregation, bf16 in HBM.
    # TODO(synk): for genuinely sparse graphs (E << N^2), replace the dense A_norm
    # with a CSR neighbor table + scalar-prefetch gather inside the kernel.
    src, dst = edge_index[0], edge_index[1]
    adj = jnp.zeros((n, n), jnp.float32).at[dst, src].add(1.0)
    deg = jnp.sum(adj, axis=1, keepdims=True)
    a_norm = adj / jnp.maximum(deg, 1.0)     # isolated nodes aggregate to 0
    a_pad = jnp.zeros((np_, np_), jnp.bfloat16).at[:n, :n].set(
        a_norm.astype(jnp.bfloat16))

    # Lane-dense padding of activations / params (padded feature cols produce 0).
    x_pad = jnp.zeros((np_, fp), jnp.float32).at[:n, :f_in].set(x)
    g1p = jnp.pad(g1, ((0, 0), (0, fp - f_in)))
    be1p = jnp.pad(be1, ((0, 0), (0, fp - f_in)))
    wl1p = jnp.pad(wl1, ((0, fp - f_in), (0, 0)))
    wr1p = jnp.pad(wr1, ((0, fp - f_in), (0, 0)))
    wl2p = jnp.pad(wl2, ((0, 0), (0, out_p - out_dim)))
    wr2p = jnp.pad(wr2, ((0, 0), (0, out_p - out_dim)))
    bl2p = jnp.pad(bl2, ((0, 0), (0, out_p - out_dim)))

    # Hoisted BatchNorm batch statistics (tiny O(N*F) reductions) so the kernel
    # tiles over nodes without a cross-tile dependency.
    mu1, rstd1 = _batch_stats(x, fp)

    h1 = _sage_layer(a_pad, x_pad, mu1, rstd1, g1p, be1p, wl1p, wr1p, bl1,
                     out_width=HIDDEN, apply_softmax=False, valid_out=HIDDEN)

    mu2, rstd2 = _batch_stats(h1[:n], HIDDEN)

    out_pad = _sage_layer(a_pad, h1, mu2, rstd2, g2, be2, wl2p, wr2p, bl2p,
                          out_width=out_p, apply_softmax=True, valid_out=out_dim)

    return out_pad[:n, :out_dim]


def init_params(key, input_dim, out_dim, hidden=HIDDEN):
    """Deterministic synthetic parameters (shapes match REGC.__init__)."""
    ks = jax.random.split(key, 8)

    def lin(k, fan_in, fan_out):
        bound = 1.0 / jnp.sqrt(fan_in)
        return jax.random.uniform(k, (fan_in, fan_out), jnp.float32, -bound, bound)

    g1 = jnp.ones((1, input_dim), jnp.float32)
    be1 = jnp.zeros((1, input_dim), jnp.float32)
    wl1 = lin(ks[0], input_dim, hidden)
    wr1 = lin(ks[1], input_dim, hidden)
    bl1 = jax.random.uniform(ks[2], (1, hidden), jnp.float32,
                             -1.0 / jnp.sqrt(input_dim), 1.0 / jnp.sqrt(input_dim))
    g2 = jnp.ones((1, hidden), jnp.float32)
    be2 = jnp.zeros((1, hidden), jnp.float32)
    wl2 = lin(ks[3], hidden, out_dim)
    wr2 = lin(ks[4], hidden, out_dim)
    bl2 = jax.random.uniform(ks[5], (1, out_dim), jnp.float32,
                             -1.0 / jnp.sqrt(hidden), 1.0 / jnp.sqrt(hidden))
    return (g1, be1, wl1, wr1, bl1, g2, be2, wl2, wr2, bl2)


if __name__ == "__main__":
    key = jax.random.PRNGKey(0)
    k_x, k_e, k_p = jax.random.split(key, 3)

    num_nodes = 8
    input_dim = 32
    out_dim = 8
    num_edges = 16

    x = jax.random.normal(k_x, (num_nodes, input_dim), jnp.float32)
    edge_index = jax.random.randint(k_e, (2, num_edges), 0, num_nodes, jnp.int32)
    params = init_params(k_p, input_dim, out_dim)

    out = regc_forward(x, edge_index, params, out_dim)
    out = jax.block_until_ready(out)

    # Sanity: softmax rows sum to 1 (loose tol: approx EUP reciprocal, bf16 agg).
    assert out.shape == (num_nodes, out_dim)
    assert bool(jnp.all(jnp.abs(jnp.sum(out, axis=1) - 1.0) < 1e-2))
    assert bool(jnp.all(jnp.isfinite(out)))

    print("KERNEL_OK")
</pallas_src>

<mosaic_0001>
module attributes {stable_mosaic.version = 11 : i64} {
  func.func private @main(%arg0: i32) attributes {dimension_semantics = [#tpu.dimension_semantics<core_parallel>], iteration_bounds = array<i64: 2>, tpu.core_type = #tpu.core_type<sc_scalar_subcore>, window_params = []} {
    return
  }
}

module attributes {stable_mosaic.version = 11 : i64} {
  func.func private @main(%arg0: i32) attributes {dimension_semantics = [#tpu.dimension_semantics<core_parallel>], iteration_bounds = array<i64: 2>, tpu.core_type = #tpu.core_type<sc_scalar_subcore>, window_params = []} {
    return
  }
}

module attributes {stable_mosaic.version = 11 : i64} {
  func.func @_sage_layer_kernel(%arg0: i32, %arg1: i32, %arg2: memref<256x256xbf16, #tpu.memory_space<vmem>>, %arg3: memref<256x128xf32, #tpu.memory_space<vmem>>, %arg4: memref<256x128xf32, #tpu.memory_space<vmem>>, %arg5: memref<1x128xf32, #tpu.memory_space<vmem>>, %arg6: memref<1x128xf32, #tpu.memory_space<vmem>>, %arg7: memref<1x128xf32, #tpu.memory_space<vmem>>, %arg8: memref<1x128xf32, #tpu.memory_space<vmem>>, %arg9: memref<128x256xf32, #tpu.memory_space<vmem>>, %arg10: memref<128x256xf32, #tpu.memory_space<vmem>>, %arg11: memref<1x256xf32, #tpu.memory_space<vmem>>, %arg12: memref<256x256xf32, #tpu.memory_space<vmem>>, %arg13: memref<256x128xf32, #tpu.memory_space<vmem>>) attributes {dimension_semantics = [#tpu.dimension_semantics<parallel>, #tpu.dimension_semantics<arbitrary>], iteration_bounds = array<i64: 1, 1>, scalar_prefetch = 0 : i64, scratch_operands = 1 : i64, tpu.core_type = #tpu.core_type<tc>, window_params = [{transform_indices = @transform_0, window_bounds = array<i64: 256, 256>}, {transform_indices = @transform_1, window_bounds = array<i64: 256, 128>}, {transform_indices = @transform_2, window_bounds = array<i64: 256, 128>}, {pipeline_mode = #tpu.pipeline_mode<synchronous>, transform_indices = @transform_3, window_bounds = array<i64: 1, 128>}, {pipeline_mode = #tpu.pipeline_mode<synchronous>, transform_indices = @transform_4, window_bounds = array<i64: 1, 128>}, {pipeline_mode = #tpu.pipeline_mode<synchronous>, transform_indices = @transform_5, window_bounds = array<i64: 1, 128>}, {pipeline_mode = #tpu.pipeline_mode<synchronous>, transform_indices = @transform_6, window_bounds = array<i64: 1, 128>}, {pipeline_mode = #tpu.pipeline_mode<synchronous>, transform_indices = @transform_7, window_bounds = array<i64: 128, 256>}, {pipeline_mode = #tpu.pipeline_mode<synchronous>, transform_indices = @transform_8, window_bounds = array<i64: 128, 256>}, {pipeline_mode = #tpu.pipeline_mode<synchronous>, transform_indices = @transform_9, window_bounds = array<i64: 1, 256>}, {transform_indices = @transform_10, window_bounds = array<i64: 256, 256>}]} {
    %c0_i32 = arith.constant 0 : i32
    %0 = arith.cmpi eq, %arg1, %c0_i32 : i32
    %1 = arith.extui %0 : i1 to i32
    %c0_i32_0 = arith.constant 0 : i32
    %2 = arith.cmpi ne, %1, %c0_i32_0 : i32
    scf.if %2 {
      %cst_18 = arith.constant 0.000000e+00 : f32
      %25 = vector.broadcast %cst_18 : f32 to vector<256x128xf32>
      %c0_19 = arith.constant 0 : index
      %c0_20 = arith.constant 0 : index
      %26 = vector.load %arg13[%c0_19, %c0_20] : memref<256x128xf32, #tpu.memory_space<vmem>>, vector<256x128xf32>
      tpu.vector_store %arg13[%c0_19, %c0_20], %25 {strides = array<i32>} : memref<256x128xf32, #tpu.memory_space<vmem>>, vector<256x128xf32>,
    } else {
    }
    %c0 = arith.constant 0 : index
    %c0_1 = arith.constant 0 : index
    %3 = vector.load %arg3[%c0, %c0_1] : memref<256x128xf32, #tpu.memory_space<vmem>>, vector<256x128xf32>
    %c0_2 = arith.constant 0 : index
    %c0_3 = arith.constant 0 : index
    %4 = vector.load %arg5[%c0_2, %c0_3] : memref<1x128xf32, #tpu.memory_space<vmem>>, vector<1x128xf32>
    %5 = vector.broadcast %4 : vector<1x128xf32> to vector<256x128xf32>
    %6 = arith.subf %3, %5 : vector<256x128xf32>
    %c0_4 = arith.constant 0 : index
    %c0_5 = arith.constant 0 : index
    %7 = vector.load %arg6[%c0_4, %c0_5] : memref<1x128xf32, #tpu.memory_space<vmem>>, vector<1x128xf32>
    %8 = vector.broadcast %7 : vector<1x128xf32> to vector<256x128xf32>
    %9 = arith.mulf %6, %8 : vector<256x128xf32>
    %c0_6 = arith.constant 0 : index
    %c0_7 = arith.constant 0 : index
    %10 = vector.load %arg7[%c0_6, %c0_7] : memref<1x128xf32, #tpu.memory_space<vmem>>, vector<1x128xf32>
    %11 = vector.broadcast %10 : vector<1x128xf32> to vector<256x128xf32>
    %12 = arith.mulf %9, %11 : vector<256x128xf32>
    %c0_8 = arith.constant 0 : index
    %c0_9 = arith.constant 0 : index
    %13 = vector.load %arg8[%c0_8, %c0_9] : memref<1x128xf32, #tpu.memory_space<vmem>>, vector<1x128xf32>
    %14 = vector.broadcast %13 : vector<1x128xf32> to vector<256x128xf32>
    %15 = arith.addf %12, %14 : vector<256x128xf32>
    %c0_10 = arith.constant 0 : index
    %c0_11 = arith.constant 0 : index
    %16 = vector.load %arg13[%c0_10, %c0_11] : memref<256x128xf32, #tpu.memory_space<vmem>>, vector<256x128xf32>
    %c0_12 = arith.constant 0 : index
    %c0_13 = arith.constant 0 : index
    %17 = vector.load %arg2[%c0_12, %c0_13] : memref<256x256xbf16, #tpu.memory_space<vmem>>, vector<256x256xbf16>
    %18 = arith.truncf %15 : vector<256x128xf32> to vector<256x128xbf16>
    %cst = arith.constant dense<0.000000e+00> : vector<256x128xf32>
    %19 = tpu.matmul %17, %18, %cst {dimension_numbers = #tpu.dot_dimension_numbers<[1], [0], [0], [1], [0, 0, 1, 1], [], []>} : vector<256x256xbf16>, vector<256x128xbf16>, vector<256x128xf32> -> vector<256x128xf32>
    %20 = arith.addf %16, %19 : vector<256x128xf32>
    %c0_14 = arith.constant 0 : index
    %c0_15 = arith.constant 0 : index
    %21 = vector.load %arg13[%c0_14, %c0_15] : memref<256x128xf32, #tpu.memory_space<vmem>>, vector<256x128xf32>
    tpu.vector_store %arg13[%c0_14, %c0_15], %20 {strides = array<i32>} : memref<256x128xf32, #tpu.memory_space<vmem>>, vector<256x128xf32>,
    %c0_i32_16 = arith.constant 0 : i32
    %22 = arith.cmpi eq, %arg1, %c0_i32_16 : i32
    %23 = arith.extui %22 : i1 to i32
    %c0_i32_17 = arith.constant 0 : i32
    %24 = arith.cmpi ne, %23, %c0_i32_17 : i32
    scf.if %24 {
      %c0_18 = arith.constant 0 : index
      %c0_19 = arith.constant 0 : index
      %25 = vector.load %arg4[%c0_18, %c0_19] : memref<256x128xf32, #tpu.memory_space<vmem>>, vector<256x128xf32>
      %c0_20 = arith.constant 0 : index
      %c0_21 = arith.constant 0 : index
      %26 = vector.load %arg5[%c0_20, %c0_21] : memref<1x128xf32, #tpu.memory_space<vmem>>, vector<1x128xf32>
      %27 = vector.broadcast %26 : vector<1x128xf32> to vector<256x128xf32>
      %28 = arith.subf %25, %27 : vector<256x128xf32>
      %c0_22 = arith.constant 0 : index
      %c0_23 = arith.constant 0 : index
      %29 = vector.load %arg6[%c0_22, %c0_23] : memref<1x128xf32, #tpu.memory_space<vmem>>, vector<1x128xf32>
      %30 = vector.broadcast %29 : vector<1x128xf32> to vector<256x128xf32>
      %31 = arith.mulf %28, %30 : vector<256x128xf32>
      %c0_24 = arith.constant 0 : index
      %c0_25 = arith.constant 0 : index
      %32 = vector.load %arg7[%c0_24, %c0_25] : memref<1x128xf32, #tpu.memory_space<vmem>>, vector<1x128xf32>
      %33 = vector.broadcast %32 : vector<1x128xf32> to vector<256x128xf32>
      %34 = arith.mulf %31, %33 : vector<256x128xf32>
      %c0_26 = arith.constant 0 : index
      %c0_27 = arith.constant 0 : index
      %35 = vector.load %arg8[%c0_26, %c0_27] : memref<1x128xf32, #tpu.memory_space<vmem>>, vector<1x128xf32>
      %36 = vector.broadcast %35 : vector<1x128xf32> to vector<256x128xf32>
      %37 = arith.addf %34, %36 : vector<256x128xf32>
      %c0_28 = arith.constant 0 : index
      %c0_29 = arith.constant 0 : index
      %38 = vector.load %arg13[%c0_28, %c0_29] : memref<256x128xf32, #tpu.memory_space<vmem>>, vector<256x128xf32>
      %c0_30 = arith.constant 0 : index
      %c0_31 = arith.constant 0 : index
      %39 = vector.load %arg9[%c0_30, %c0_31] : memref<128x256xf32, #tpu.memory_space<vmem>>, vector<128x256xf32>
      %cst_32 = arith.constant dense<0.000000e+00> : vector<256x256xf32>
      %40 = tpu.matmul %38, %39, %cst_32 {dimension_numbers = #tpu.dot_dimension_numbers<[1], [0], [0], [1], [0, 0, 1, 1], [], []>} : vector<256x128xf32>, vector<128x256xf32>, vector<256x256xf32> -> vector<256x256xf32>
      %c0_33 = arith.constant 0 : index
      %c0_34 = arith.constant 0 : index
      %41 = vector.load %arg11[%c0_33, %c0_34] : memref<1x256xf32, #tpu.memory_space<vmem>>, vector<1x256xf32>
      %42 = vector.broadcast %41 : vector<1x256xf32> to vector<256x256xf32>
      %43 = arith.addf %40, %42 : vector<256x256xf32>
      %c0_35 = arith.constant 0 : index
      %c0_36 = arith.constant 0 : index
      %44 = vector.load %arg10[%c0_35, %c0_36] : memref<128x256xf32, #tpu.memory_space<vmem>>, vector<128x256xf32>
      %cst_37 = arith.constant dense<0.000000e+00> : vector<256x256xf32>
      %45 = tpu.matmul %37, %44, %cst_37 {dimension_numbers = #tpu.dot_dimension_numbers<[1], [0], [0], [1], [0, 0, 1, 1], [], []>} : vector<256x128xf32>, vector<128x256xf32>, vector<256x256xf32> -> vector<256x256xf32>
      %46 = arith.addf %43, %45 : vector<256x256xf32>
      %cst_38 = arith.constant 0.000000e+00 : f32
      %47 = vector.broadcast %cst_38 : f32 to vector<256x256xf32>
      %48 = arith.cmpf ogt, %46, %47 : vector<256x256xf32>
      %cst_39 = arith.constant 0.00999999977 : f32
      %49 = vector.broadcast %cst_39 : f32 to vector<256x256xf32>
      %50 = arith.mulf %49, %46 : vector<256x256xf32>
      %51 = arith.select %48, %46, %50 : vector<256x256xi1>, vector<256x256xf32>
      %c0_40 = arith.constant 0 : index
      %c0_41 = arith.constant 0 : index
      %52 = vector.load %arg12[%c0_40, %c0_41] : memref<256x256xf32, #tpu.memory_space<vmem>>, vector<256x256xf32>
      tpu.vector_store %arg12[%c0_40, %c0_41], %51 {strides = array<i32>} : memref<256x256xf32, #tpu.memory_space<vmem>>, vector<256x256xf32>,
    } else {
    }
    return
  }
  func.func @transform_0(%arg0: i32, %arg1: i32) -> (i32, i32) {
    %c0_i32 = arith.constant 0 : i32
    return %arg0, %arg1 : i32, i32
  }
  func.func @transform_1(%arg0: i32, %arg1: i32) -> (i32, i32) {
    %c0_i32 = arith.constant 0 : i32
    %c0_i32_0 = arith.constant 0 : i32
    return %arg1, %c0_i32 : i32, i32
  }
  func.func @transform_2(%arg0: i32, %arg1: i32) -> (i32, i32) {
    %c0_i32 = arith.constant 0 : i32
    %c0_i32_0 = arith.constant 0 : i32
    return %arg0, %c0_i32 : i32, i32
  }
  func.func @transform_3(%arg0: i32, %arg1: i32) -> (i32, i32) {
    %c0_i32 = arith.constant 0 : i32
    %c0_i32_0 = arith.constant 0 : i32
    %c0_i32_1 = arith.constant 0 : i32
    return %c0_i32, %c0_i32_0 : i32, i32
  }
  func.func @transform_4(%arg0: i32, %arg1: i32) -> (i32, i32) {
    %c0_i32 = arith.constant 0 : i32
    %c0_i32_0 = arith.constant 0 : i32
    %c0_i32_1 = arith.constant 0 : i32
    return %c0_i32, %c0_i32_0 : i32, i32
  }
  func.func @transform_5(%arg0: i32, %arg1: i32) -> (i32, i32) {
    %c0_i32 = arith.constant 0 : i32
    %c0_i32_0 = arith.constant 0 : i32
    %c0_i32_1 = arith.constant 0 : i32
    return %c0_i32, %c0_i32_0 : i32, i32
  }
  func.func @transform_6(%arg0: i32, %arg1: i32) -> (i32, i32) {
    %c0_i32 = arith.constant 0 : i32
    %c0_i32_0 = arith.constant 0 : i32
    %c0_i32_1 = arith.constant 0 : i32
    return %c0_i32, %c0_i32_0 : i32, i32
  }
  func.func @transform_7(%arg0: i32, %arg1: i32) -> (i32, i32) {
    %c0_i32 = arith.constant 0 : i32
    %c0_i32_0 = arith.constant 0 : i32
    %c0_i32_1 = arith.constant 0 : i32
    return %c0_i32, %c0_i32_0 : i32, i32
  }
  func.func @transform_8(%arg0: i32, %arg1: i32) -> (i32, i32) {
    %c0_i32 = arith.constant 0 : i32
    %c0_i32_0 = arith.constant 0 : i32
    %c0_i32_1 = arith.constant 0 : i32
    return %c0_i32, %c0_i32_0 : i32, i32
  }
  func.func @transform_9(%arg0: i32, %arg1: i32) -> (i32, i32) {
    %c0_i32 = arith.constant 0 : i32
    %c0_i32_0 = arith.constant 0 : i32
    %c0_i32_1 = arith.constant 0 : i32
    return %c0_i32, %c0_i32_0 : i32, i32
  }
  func.func @transform_10(%arg0: i32, %arg1: i32) -> (i32, i32) {
    %c0_i32 = arith.constant 0 : i32
    %c0_i32_0 = arith.constant 0 : i32
    return %arg0, %c0_i32 : i32, i32
  }
}

module attributes {stable_mosaic.version = 11 : i64} {
  func.func @_sage_layer_kernel(%arg0: i32, %arg1: i32, %arg2: memref<256x256xbf16, #tpu.memory_space<vmem>>, %arg3: memref<256x256xf32, #tpu.memory_space<vmem>>, %arg4: memref<256x256xf32, #tpu.memory_space<vmem>>, %arg5: memref<1x256xf32, #tpu.memory_space<vmem>>, %arg6: memref<1x256xf32, #tpu.memory_space<vmem>>, %arg7: memref<1x256xf32, #tpu.memory_space<vmem>>, %arg8: memref<1x256xf32, #tpu.memory_space<vmem>>, %arg9: memref<256x128xf32, #tpu.memory_space<vmem>>, %arg10: memref<256x128xf32, #tpu.memory_space<vmem>>, %arg11: memref<1x128xf32, #tpu.memory_space<vmem>>, %arg12: memref<256x128xf32, #tpu.memory_space<vmem>>, %arg13: memref<256x256xf32, #tpu.memory_space<vmem>>) attributes {dimension_semantics = [#tpu.dimension_semantics<parallel>, #tpu.dimension_semantics<arbitrary>], iteration_bounds = array<i64: 1, 1>, scalar_prefetch = 0 : i64, scratch_operands = 1 : i64, tpu.core_type = #tpu.core_type<tc>, window_params = [{transform_indices = @transform_0, window_bounds = array<i64: 256, 256>}, {transform_indices = @transform_1, window_bounds = array<i64: 256, 256>}, {transform_indices = @transform_2, window_bounds = array<i64: 256, 256>}, {pipeline_mode = #tpu.pipeline_mode<synchronous>, transform_indices = @transform_3, window_bounds = array<i64: 1, 256>}, {pipeline_mode = #tpu.pipeline_mode<synchronous>, transform_indices = @transform_4, window_bounds = array<i64: 1, 256>}, {pipeline_mode = #tpu.pipeline_mode<synchronous>, transform_indices = @transform_5, window_bounds = array<i64: 1, 256>}, {pipeline_mode = #tpu.pipeline_mode<synchronous>, transform_indices = @transform_6, window_bounds = array<i64: 1, 256>}, {pipeline_mode = #tpu.pipeline_mode<synchronous>, transform_indices = @transform_7, window_bounds = array<i64: 256, 128>}, {pipeline_mode = #tpu.pipeline_mode<synchronous>, transform_indices = @transform_8, window_bounds = array<i64: 256, 128>}, {pipeline_mode = #tpu.pipeline_mode<synchronous>, transform_indices = @transform_9, window_bounds = array<i64: 1, 128>}, {transform_indices = @transform_10, window_bounds = array<i64: 256, 128>}]} {
    %c0_i32 = arith.constant 0 : i32
    %0 = arith.cmpi eq, %arg1, %c0_i32 : i32
    %1 = arith.extui %0 : i1 to i32
    %c0_i32_0 = arith.constant 0 : i32
    %2 = arith.cmpi ne, %1, %c0_i32_0 : i32
    scf.if %2 {
      %cst_18 = arith.constant 0.000000e+00 : f32
      %25 = vector.broadcast %cst_18 : f32 to vector<256x256xf32>
      %c0_19 = arith.constant 0 : index
      %c0_20 = arith.constant 0 : index
      %26 = vector.load %arg13[%c0_19, %c0_20] : memref<256x256xf32, #tpu.memory_space<vmem>>, vector<256x256xf32>
      tpu.vector_store %arg13[%c0_19, %c0_20], %25 {strides = array<i32>} : memref<256x256xf32, #tpu.memory_space<vmem>>, vector<256x256xf32>,
    } else {
    }
    %c0 = arith.constant 0 : index
    %c0_1 = arith.constant 0 : index
    %3 = vector.load %arg3[%c0, %c0_1] : memref<256x256xf32, #tpu.memory_space<vmem>>, vector<256x256xf32>
    %c0_2 = arith.constant 0 : index
    %c0_3 = arith.constant 0 : index
    %4 = vector.load %arg5[%c0_2, %c0_3] : memref<1x256xf32, #tpu.memory_space<vmem>>, vector<1x256xf32>
    %5 = vector.broadcast %4 : vector<1x256xf32> to vector<256x256xf32>
    %6 = arith.subf %3, %5 : vector<256x256xf32>
    %c0_4 = arith.constant 0 : index
    %c0_5 = arith.constant 0 : index
    %7 = vector.load %arg6[%c0_4, %c0_5] : memref<1x256xf32, #tpu.memory_space<vmem>>, vector<1x256xf32>
    %8 = vector.broadcast %7 : vector<1x256xf32> to vector<256x256xf32>
    %9 = arith.mulf %6, %8 : vector<256x256xf32>
    %c0_6 = arith.constant 0 : index
    %c0_7 = arith.constant 0 : index
    %10 = vector.load %arg7[%c0_6, %c0_7] : memref<1x256xf32, #tpu.memory_space<vmem>>, vector<1x256xf32>
    %11 = vector.broadcast %10 : vector<1x256xf32> to vector<256x256xf32>
    %12 = arith.mulf %9, %11 : vector<256x256xf32>
    %c0_8 = arith.constant 0 : index
    %c0_9 = arith.constant 0 : index
    %13 = vector.load %arg8[%c0_8, %c0_9] : memref<1x256xf32, #tpu.memory_space<vmem>>, vector<1x256xf32>
    %14 = vector.broadcast %13 : vector<1x256xf32> to vector<256x256xf32>
    %15 = arith.addf %12, %14 : vector<256x256xf32>
    %c0_10 = arith.constant 0 : index
    %c0_11 = arith.constant 0 : index
    %16 = vector.load %arg13[%c0_10, %c0_11] : memref<256x256xf32, #tpu.memory_space<vmem>>, vector<256x256xf32>
    %c0_12 = arith.constant 0 : index
    %c0_13 = arith.constant 0 : index
    %17 = vector.load %arg2[%c0_12, %c0_13] : memref<256x256xbf16, #tpu.memory_space<vmem>>, vector<256x256xbf16>
    %18 = arith.truncf %15 : vector<256x256xf32> to vector<256x256xbf16>
    %cst = arith.constant dense<0.000000e+00> : vector<256x256xf32>
    %19 = tpu.matmul %17, %18, %cst {dimension_numbers = #tpu.dot_dimension_numbers<[1], [0], [0], [1], [0, 0, 1, 1], [], []>} : vector<256x256xbf16>, vector<256x256xbf16>, vector<256x256xf32> -> vector<256x256xf32>
    %20 = arith.addf %16, %19 : vector<256x256xf32>
    %c0_14 = arith.constant 0 : index
    %c0_15 = arith.constant 0 : index
    %21 = vector.load %arg13[%c0_14, %c0_15] : memref<256x256xf32, #tpu.memory_space<vmem>>, vector<256x256xf32>
    tpu.vector_store %arg13[%c0_14, %c0_15], %20 {strides = array<i32>} : memref<256x256xf32, #tpu.memory_space<vmem>>, vector<256x256xf32>,
    %c0_i32_16 = arith.constant 0 : i32
    %22 = arith.cmpi eq, %arg1, %c0_i32_16 : i32
    %23 = arith.extui %22 : i1 to i32
    %c0_i32_17 = arith.constant 0 : i32
    %24 = arith.cmpi ne, %23, %c0_i32_17 : i32
    scf.if %24 {
      %c0_18 = arith.constant 0 : index
      %c0_19 = arith.constant 0 : index
      %25 = vector.load %arg4[%c0_18, %c0_19] : memref<256x256xf32, #tpu.memory_space<vmem>>, vector<256x256xf32>
      %c0_20 = arith.constant 0 : index
      %c0_21 = arith.constant 0 : index
      %26 = vector.load %arg5[%c0_20, %c0_21] : memref<1x256xf32, #tpu.memory_space<vmem>>, vector<1x256xf32>
      %27 = vector.broadcast %26 : vector<1x256xf32> to vector<256x256xf32>
      %28 = arith.subf %25, %27 : vector<256x256xf32>
      %c0_22 = arith.constant 0 : index
      %c0_23 = arith.constant 0 : index
      %29 = vector.load %arg6[%c0_22, %c0_23] : memref<1x256xf32, #tpu.memory_space<vmem>>, vector<1x256xf32>
      %30 = vector.broadcast %29 : vector<1x256xf32> to vector<256x256xf32>
      %31 = arith.mulf %28, %30 : vector<256x256xf32>
      %c0_24 = arith.constant 0 : index
      %c0_25 = arith.constant 0 : index
      %32 = vector.load %arg7[%c0_24, %c0_25] : memref<1x256xf32, #tpu.memory_space<vmem>>, vector<1x256xf32>
      %33 = vector.broadcast %32 : vector<1x256xf32> to vector<256x256xf32>
      %34 = arith.mulf %31, %33 : vector<256x256xf32>
      %c0_26 = arith.constant 0 : index
      %c0_27 = arith.constant 0 : index
      %35 = vector.load %arg8[%c0_26, %c0_27] : memref<1x256xf32, #tpu.memory_space<vmem>>, vector<1x256xf32>
      %36 = vector.broadcast %35 : vector<1x256xf32> to vector<256x256xf32>
      %37 = arith.addf %34, %36 : vector<256x256xf32>
      %c0_28 = arith.constant 0 : index
      %c0_29 = arith.constant 0 : index
      %38 = vector.load %arg13[%c0_28, %c0_29] : memref<256x256xf32, #tpu.memory_space<vmem>>, vector<256x256xf32>
      %c0_30 = arith.constant 0 : index
      %c0_31 = arith.constant 0 : index
      %39 = vector.load %arg9[%c0_30, %c0_31] : memref<256x128xf32, #tpu.memory_space<vmem>>, vector<256x128xf32>
      %cst_32 = arith.constant dense<0.000000e+00> : vector<256x128xf32>
      %40 = tpu.matmul %38, %39, %cst_32 {dimension_numbers = #tpu.dot_dimension_numbers<[1], [0], [0], [1], [0, 0, 1, 1], [], []>} : vector<256x256xf32>, vector<256x128xf32>, vector<256x128xf32> -> vector<256x128xf32>
      %c0_33 = arith.constant 0 : index
      %c0_34 = arith.constant 0 : index
      %41 = vector.load %arg11[%c0_33, %c0_34] : memref<1x128xf32, #tpu.memory_space<vmem>>, vector<1x128xf32>
      %42 = vector.broadcast %41 : vector<1x128xf32> to vector<256x128xf32>
      %43 = arith.addf %40, %42 : vector<256x128xf32>
      %c0_35 = arith.constant 0 : index
      %c0_36 = arith.constant 0 : index
      %44 = vector.load %arg10[%c0_35, %c0_36] : memref<256x128xf32, #tpu.memory_space<vmem>>, vector<256x128xf32>
      %cst_37 = arith.constant dense<0.000000e+00> : vector<256x128xf32>
      %45 = tpu.matmul %37, %44, %cst_37 {dimension_numbers = #tpu.dot_dimension_numbers<[1], [0], [0], [1], [0, 0, 1, 1], [], []>} : vector<256x256xf32>, vector<256x128xf32>, vector<256x128xf32> -> vector<256x128xf32>
      %46 = arith.addf %43, %45 : vector<256x128xf32>
      %cst_38 = arith.constant 0.000000e+00 : f32
      %47 = vector.broadcast %cst_38 : f32 to vector<256x128xf32>
      %48 = arith.cmpf ogt, %46, %47 : vector<256x128xf32>
      %cst_39 = arith.constant 0.00999999977 : f32
      %49 = vector.broadcast %cst_39 : f32 to vector<256x128xf32>
      %50 = arith.mulf %49, %46 : vector<256x128xf32>
      %51 = arith.select %48, %46, %50 : vector<256x128xi1>, vector<256x128xf32>
      %52 = tpu.iota {dimensions = array<i32: 1>} : vector<256x128xi32>
      %c8_i32 = arith.constant 8 : i32
      %53 = vector.broadcast %c8_i32 : i32 to vector<256x128xi32>
      %54 = arith.cmpi slt, %52, %53 : vector<256x128xi32>
      %cst_40 = arith.constant 0xFF800000 : f32
      %55 = vector.broadcast %cst_40 : f32 to vector<256x128xf32>
      %56 = arith.select %54, %51, %55 : vector<256x128xi1>, vector<256x128xf32>
      %cst_41 = arith.constant dense<0xFF800000> : vector<256xf32>
      %57 = vector.multi_reduction <maximumf>, %56, %cst_41 [1] : vector<256x128xf32> to vector<256xf32>
      %58 = vector.shape_cast %57 : vector<256xf32> to vector<256x1xf32>
      %59 = vector.broadcast %58 : vector<256x1xf32> to vector<256x128xf32>
      %60 = arith.subf %56, %59 : vector<256x128xf32>
      %61 = math.exp %60 : vector<256x128xf32>
      %cst_42 = arith.constant dense<0.000000e+00> : vector<256xf32>
      %62 = vector.multi_reduction <add>, %61, %cst_42 [1] : vector<256x128xf32> to vector<256xf32>
      %63 = vector.shape_cast %62 : vector<256xf32> to vector<256x1xf32>
      %64 = tpu.reciprocal %63 {approx = true} : vector<256x1xf32> -> vector<256x1xf32>
      %65 = vector.broadcast %64 : vector<256x1xf32> to vector<256x128xf32>
      %66 = arith.mulf %61, %65 : vector<256x128xf32>
      %c0_43 = arith.constant 0 : index
      %c0_44 = arith.constant 0 : index
      %67 = vector.load %arg12[%c0_43, %c0_44] : memref<256x128xf32, #tpu.memory_space<vmem>>, vector<256x128xf32>
      tpu.vector_store %arg12[%c0_43, %c0_44], %66 {strides = array<i32>} : memref<256x128xf32, #tpu.memory_space<vmem>>, vector<256x128xf32>,
    } else {
    }
    return
  }
  func.func @transform_0(%arg0: i32, %arg1: i32) -> (i32, i32) {
    %c0_i32 = arith.constant 0 : i32
    return %arg0, %arg1 : i32, i32
  }
  func.func @transform_1(%arg0: i32, %arg1: i32) -> (i32, i32) {
    %c0_i32 = arith.constant 0 : i32
    %c0_i32_0 = arith.constant 0 : i32
    return %arg1, %c0_i32 : i32, i32
  }
  func.func @transform_2(%arg0: i32, %arg1: i32) -> (i32, i32) {
    %c0_i32 = arith.constant 0 : i32
    %c0_i32_0 = arith.constant 0 : i32
    return %arg0, %c0_i32 : i32, i32
  }
  func.func @transform_3(%arg0: i32, %arg1: i32) -> (i32, i32) {
    %c0_i32 = arith.constant 0 : i32
    %c0_i32_0 = arith.constant 0 : i32
    %c0_i32_1 = arith.constant 0 : i32
    return %c0_i32, %c0_i32_0 : i32, i32
  }
  func.func @transform_4(%arg0: i32, %arg1: i32) -> (i32, i32) {
    %c0_i32 = arith.constant 0 : i32
    %c0_i32_0 = arith.constant 0 : i32
    %c0_i32_1 = arith.constant 0 : i32
    return %c0_i32, %c0_i32_0 : i32, i32
  }
  func.func @transform_5(%arg0: i32, %arg1: i32) -> (i32, i32) {
    %c0_i32 = arith.constant 0 : i32
    %c0_i32_0 = arith.constant 0 : i32
    %c0_i32_1 = arith.constant 0 : i32
    return %c0_i32, %c0_i32_0 : i32, i32
  }
  func.func @transform_6(%arg0: i32, %arg1: i32) -> (i32, i32) {
    %c0_i32 = arith.constant 0 : i32
    %c0_i32_0 = arith.constant 0 : i32
    %c0_i32_1 = arith.constant 0 : i32
    return %c0_i32, %c0_i32_0 : i32, i32
  }
  func.func @transform_7(%arg0: i32, %arg1: i32) -> (i32, i32) {
    %c0_i32 = arith.constant 0 : i32
    %c0_i32_0 = arith.constant 0 : i32
    %c0_i32_1 = arith.constant 0 : i32
    return %c0_i32, %c0_i32_0 : i32, i32
  }
  func.func @transform_8(%arg0: i32, %arg1: i32) -> (i32, i32) {
    %c0_i32 = arith.constant 0 : i32
    %c0_i32_0 = arith.constant 0 : i32
    %c0_i32_1 = arith.constant 0 : i32
    return %c0_i32, %c0_i32_0 : i32, i32
  }
  func.func @transform_9(%arg0: i32, %arg1: i32) -> (i32, i32) {
    %c0_i32 = arith.constant 0 : i32
    %c0_i32_0 = arith.constant 0 : i32
    %c0_i32_1 = arith.constant 0 : i32
    return %c0_i32, %c0_i32_0 : i32, i32
  }
  func.func @transform_10(%arg0: i32, %arg1: i32) -> (i32, i32) {
    %c0_i32 = arith.constant 0 : i32
    %c0_i32_0 = arith.constant 0 : i32
    return %arg0, %c0_i32 : i32, i32
  }
}

</mosaic_0001>

<llo_original>
// kernel: regc_forward.2
$region0: #{regc_forward.2}
  #allocation0 [shape = 'u32[]', space=smem, size = 0x4, offset = 0x4, fixed_abs, tag = 'smem constant byte address 0x4 - core index']
  #allocation1 [shape = 'u32[144,128]{1,0:T(1,128)}', space=vmem, size = 0x12000, scoped, tag = 'internal scratch']
  #allocation2 [shape = 'f32[256,128]{1,0:T(8,128)}', space=vmem, size = 0x20000, scoped, tag = 'scratch operand']
  %s0 = inlined_call_operand.vmem [shape: bf16[256,256], index: 0, kind: input, shape index: {}]
  %s1 = inlined_call_operand.vmem [shape: f32[256,128], index: 1, kind: input, shape index: {}, may-alias: {1,2}]
  %s2 = inlined_call_operand.vmem [shape: f32[256,128], index: 2, kind: input, shape index: {}, may-alias: {1,2}]
  %s3 = inlined_call_operand.vmem [shape: f32[1,128], index: 3, kind: input, shape index: {}]
  %s4 = inlined_call_operand.vmem [shape: f32[1,128], index: 4, kind: input, shape index: {}]
  %s5 = inlined_call_operand.vmem [shape: f32[1,128], index: 5, kind: input, shape index: {}]
  %s6 = inlined_call_operand.vmem [shape: f32[1,128], index: 6, kind: input, shape index: {}]
  %s7 = inlined_call_operand.vmem [shape: f32[128,256], index: 7, kind: input, shape index: {}]
  %s8 = inlined_call_operand.vmem [shape: f32[128,256], index: 8, kind: input, shape index: {}]
  %s9 = inlined_call_operand.vmem [shape: f32[1,256], index: 9, kind: input, shape index: {}]
  %s10 = inlined_call_operand.vmem [shape: f32[256,256], index: 10, kind: output, shape index: {}]
  %s11 = sld [smem:[#allocation0]]
  $region58: #{regc_forward.2} parent=0
    _
  %s13 = ssub.s32 1, %s11
  %s14 = scalar_select 0, %s13, %s11
  // Predicated region
  $region2: #{regc_forward.2} parent=0 // pred_check
    _
  $region3: #{regc_forward.2} parent=0 // pred_check_branch
    %16 = sbr.rel (0) target = $region5
  $region4: #{regc_forward.2} parent=0 // pred_region
    _
  $region5: #{regc_forward.2} parent=0 // pred_fallthru
    _
  // Predicated region
  $region6: #{regc_forward.2} parent=0 // pred_check
    _
  $region7: #{regc_forward.2} parent=0 // pred_check_branch
    %18 = sbr.rel (0) target = $region9
  $region8: #{regc_forward.2} parent=0 // pred_region
    _
  $region9: #{regc_forward.2} parent=0 // pred_fallthru
    _
  // Predicated region
  $region10: #{regc_forward.2} parent=0 // pred_check
    _
  $region11: #{regc_forward.2} parent=0 // pred_check_branch
    %20 = sbr.rel (0) target = $region13
  $region12: #{regc_forward.2} parent=0 // pred_region
    _
  $region13: #{regc_forward.2} parent=0 // pred_fallthru
    _
  // Predicated region
  $region14: #{regc_forward.2} parent=0 // pred_check
    _
  $region15: #{regc_forward.2} parent=0 // pred_check_branch
    %22 = sbr.rel (0) target = $region17
  $region16: #{regc_forward.2} parent=0 // pred_region
    _
  $region17: #{regc_forward.2} parent=0 // pred_fallthru
    _
  // Predicated region
  $region18: #{regc_forward.2} parent=0 // pred_check
    _
  $region19: #{regc_forward.2} parent=0 // pred_check_branch
    %24 = sbr.rel (0) target = $region21
  $region20: #{regc_forward.2} parent=0 // pred_region
    _
  $region21: #{regc_forward.2} parent=0 // pred_fallthru
    _
  // Predicated region
  $region22: #{regc_forward.2} parent=0 // pred_check
    _
  $region23: #{regc_forward.2} parent=0 // pred_check_branch
    %26 = sbr.rel (0) target = $region25
  $region24: #{regc_forward.2} parent=0 // pred_region
    _
  $region25: #{regc_forward.2} parent=0 // pred_fallthru
    _
  // Predicated region
  $region26: #{regc_forward.2} parent=0 // pred_check
    _
  $region27: #{regc_forward.2} parent=0 // pred_check_branch
    %28 = sbr.rel (0) target = $region29
  $region28: #{regc_forward.2} parent=0 // pred_region
    _
  $region29: #{regc_forward.2} parent=0 // pred_fallthru
    _
  // Predicated region
  $region30: #{regc_forward.2} parent=0 // pred_check
    _
  $region31: #{regc_forward.2} parent=0 // pred_check_branch
    %30 = sbr.rel (0) target = $region33
  $region32: #{regc_forward.2} parent=0 // pred_region
    _
  $region33: #{regc_forward.2} parent=0 // pred_fallthru
    _
  // Predicated region
  $region34: #{regc_forward.2} parent=0 // pred_check
    _
  $region35: #{regc_forward.2} parent=0 // pred_check_branch
    %32 = sbr.rel (0) target = $region37
  $region36: #{regc_forward.2} parent=0 // pred_region
    _
  $region37: #{regc_forward.2} parent=0 // pred_fallthru
    _
  // Predicated region
  $region38: #{regc_forward.2} parent=0 // pred_check
    _
  $region39: #{regc_forward.2} parent=0 // pred_check_branch
    %34 = sbr.rel (0) target = $region41
  $region40: #{regc_forward.2} parent=0 // pred_region
    _
  $region41: #{regc_forward.2} parent=0 // pred_fallthru
    _
  %p36 = scmp.eq.s32.totalorder 0, 0
  // Predicated region
  $region42: #{regc_forward.2} parent=0 // pred_check
    %p37 = pneg %p36
  $region43: #{regc_forward.2} parent=0 // pred_check_branch
    %39 = sbr.rel (%p37) target = $region45
  $region44: #{regc_forward.2} parent=0 // pred_region
    %40 = vst [vmem:[#allocation2] sm:$0xff] 0.0
    %41 = vst [vmem:[#allocation2 + $0x8] sm:$0xff] 0.0
    %42 = vst [vmem:[#allocation2 + $0x10] sm:$0xff] 0.0
    %43 = vst [vmem:[#allocation2 + $0x18] sm:$0xff] 0.0
    %44 = vst [vmem:[#allocation2 + $0x20] sm:$0xff] 0.0
    %45 = vst [vmem:[#allocation2 + $0x28] sm:$0xff] 0.0
    %46 = vst [vmem:[#allocation2 + $0x30] sm:$0xff] 0.0
    %47 = vst [vmem:[#allocation2 + $0x38] sm:$0xff] 0.0
    %48 = vst [vmem:[#allocation2 + $0x40] sm:$0xff] 0.0
    %49 = vst [vmem:[#allocation2 + $0x48] sm:$0xff] 0.0
    %50 = vst [vmem:[#allocation2 + $0x50] sm:$0xff] 0.0
    %51 = vst [vmem:[#allocation2 + $0x58] sm:$0xff] 0.0
    %52 = vst [vmem:[#allocation2 + $0x60] sm:$0xff] 0.0
    %53 = vst [vmem:[#allocation2 + $0x68] sm:$0xff] 0.0
    %54 = vst [vmem:[#allocation2 + $0x70] sm:$0xff] 0.0
    %55 = vst [vmem:[#allocation2 + $0x78] sm:$0xff] 0.0
    %56 = vst [vmem:[#allocation2 + $0x80] sm:$0xff] 0.0
    %57 = vst [vmem:[#allocation2 + $0x88] sm:$0xff] 0.0
    %58 = vst [vmem:[#allocation2 + $0x90] sm:$0xff] 0.0
    %59 = vst [vmem:[#allocation2 + $0x98] sm:$0xff] 0.0
    %60 = vst [vmem:[#allocation2 + $0xa0] sm:$0xff] 0.0
    %61 = vst [vmem:[#allocation2 + $0xa8] sm:$0xff] 0.0
    %62 = vst [vmem:[#allocation2 + $0xb0] sm:$0xff] 0.0
    %63 = vst [vmem:[#allocation2 + $0xb8] sm:$0xff] 0.0
    %64 = vst [vmem:[#allocation2 + $0xc0] sm:$0xff] 0.0
    %65 = vst [vmem:[#allocation2 + $0xc8] sm:$0xff] 0.0
    %66 = vst [vmem:[#allocation2 + $0xd0] sm:$0xff] 0.0
    %67 = vst [vmem:[#allocation2 + $0xd8] sm:$0xff] 0.0
    %68 = vst [vmem:[#allocation2 + $0xe0] sm:$0xff] 0.0
    %69 = vst [vmem:[#allocation2 + $0xe8] sm:$0xff] 0.0
    %70 = vst [vmem:[#allocation2 + $0xf0] sm:$0xff] 0.0
    %71 = vst [vmem:[#allocation2 + $0xf8] sm:$0xff] 0.0
  $region45: #{regc_forward.2} parent=0 // pred_fallthru
    _
  %v72 = vld [vmem:[%s1] sm:$0xff]
  %v73 = vld [vmem:[%s1 + $0x8] sm:$0xff]
  %v74 = vld [vmem:[%s1 + $0x10] sm:$0xff]
  %v75 = vld [vmem:[%s1 + $0x18] sm:$0xff]
  %v76 = vld [vmem:[%s1 + $0x20] sm:$0xff]
  %v77 = vld [vmem:[%s1 + $0x28] sm:$0xff]
  %v78 = vld [vmem:[%s1 + $0x30] sm:$0xff]
  %v79 = vld [vmem:[%s1 + $0x38] sm:$0xff]
  %v80 = vld [vmem:[%s1 + $0x40] sm:$0xff]
  %v81 = vld [vmem:[%s1 + $0x48] sm:$0xff]
  %v82 = vld [vmem:[%s1 + $0x50] sm:$0xff]
  %v83 = vld [vmem:[%s1 + $0x58] sm:$0xff]
  %v84 = vld [vmem:[%s1 + $0x60] sm:$0xff]
  %v85 = vld [vmem:[%s1 + $0x68] sm:$0xff]
  %v86 = vld [vmem:[%s1 + $0x70] sm:$0xff]
  %v87 = vld [vmem:[%s1 + $0x78] sm:$0xff]
  %v88 = vld [vmem:[%s1 + $0x80] sm:$0xff]
  %v89 = vld [vmem:[%s1 + $0x88] sm:$0xff]
  %v90 = vld [vmem:[%s1 + $0x90] sm:$0xff]
  %v91 = vld [vmem:[%s1 + $0x98] sm:$0xff]
  %v92 = vld [vmem:[%s1 + $0xa0] sm:$0xff]
  %v93 = vld [vmem:[%s1 + $0xa8] sm:$0xff]
  %v94 = vld [vmem:[%s1 + $0xb0] sm:$0xff]
  %v95 = vld [vmem:[%s1 + $0xb8] sm:$0xff]
  %v96 = vld [vmem:[%s1 + $0xc0] sm:$0xff]
  %v97 = vld [vmem:[%s1 + $0xc8] sm:$0xff]
  %v98 = vld [vmem:[%s1 + $0xd0] sm:$0xff]
  %v99 = vld [vmem:[%s1 + $0xd8] sm:$0xff]
  %v100 = vld [vmem:[%s1 + $0xe0] sm:$0xff]
  %v101 = vld [vmem:[%s1 + $0xe8] sm:$0xff]
  %v102 = vld [vmem:[%s1 + $0xf0] sm:$0xff]
  %v103 = vld [vmem:[%s1 + $0xf8] sm:$0xff]
  %v104 = vld [vmem:[%s3] sm:$0x1]
  %v106 = vlaneseq
  %v107 = vshrl.u32 %v106, 7
  %v108 = vsub.s32 0, %v107
  %v109 = vrot.slane %v104, %v108
  %v111 = vsub.f32 %v72, %v109
  %v112 = vsub.f32 %v73, %v109
  %v113 = vsub.f32 %v74, %v109
  %v114 = vsub.f32 %v75, %v109
  %v115 = vsub.f32 %v76, %v109
  %v116 = vsub.f32 %v77, %v109
  %v117 = vsub.f32 %v78, %v109
  %v118 = vsub.f32 %v79, %v109
  %v119 = vsub.f32 %v80, %v109
  %v120 = vsub.f32 %v81, %v109
  %v121 = vsub.f32 %v82, %v109
  %v122 = vsub.f32 %v83, %v109
  %v123 = vsub.f32 %v84, %v109
  %v124 = vsub.f32 %v85, %v109
  %v125 = vsub.f32 %v86, %v109
  %v126 = vsub.f32 %v87, %v109
  %v127 = vsub.f32 %v88, %v109
  %v128 = vsub.f32 %v89, %v109
  %v129 = vsub.f32 %v90, %v109
  %v130 = vsub.f32 %v91, %v109
  %v131 = vsub.f32 %v92, %v109
  %v132 = vsub.f32 %v93, %v109
  %v133 = vsub.f32 %v94, %v109
  %v134 = vsub.f32 %v95, %v109
  %v135 = vsub.f32 %v96, %v109
  %v136 = vsub.f32 %v97, %v109
  %v137 = vsub.f32 %v98, %v109
  %v138 = vsub.f32 %v99, %v109
  %v139 = vsub.f32 %v100, %v109
  %v140 = vsub.f32 %v101, %v109
  %v141 = vsub.f32 %v102, %v109
  %v142 = vsub.f32 %v103, %v109
  %v143 = vld [vmem:[%s4] sm:$0x1]
  %v145 = vlaneseq
  %v146 = vshrl.u32 %v145, 7
  %v147 = vsub.s32 0, %v146
  %v148 = vrot.slane %v143, %v147
  %v150 = vmul.f32 %v111, %v148
  %v151 = vmul.f32 %v112, %v148
  %v152 = vmul.f32 %v113, %v148
  %v153 = vmul.f32 %v114, %v148
  %v154 = vmul.f32 %v115, %v148
  %v155 = vmul.f32 %v116, %v148
  %v156 = vmul.f32 %v117, %v148
  %v157 = vmul.f32 %v118, %v148
  %v158 = vmul.f32 %v119, %v148
  %v159 = vmul.f32 %v120, %v148
  %v160 = vmul.f32 %v121, %v148
  %v161 = vmul.f32 %v122, %v148
  %v162 = vmul.f32 %v123, %v148
  %v163 = vmul.f32 %v124, %v148
  %v164 = vmul.f32 %v125, %v148
  %v165 = vmul.f32 %v126, %v148
  %v166 = vmul.f32 %v127, %v148
  %v167 = vmul.f32 %v128, %v148
  %v168 = vmul.f32 %v129, %v148
  %v169 = vmul.f32 %v130, %v148
  %v170 = vmul.f32 %v131, %v148
  %v171 = vmul.f32 %v132, %v148
  %v172 = vmul.f32 %v133, %v148
  %v173 = vmul.f32 %v134, %v148
  %v174 = vmul.f32 %v135, %v148
  %v175 = vmul.f32 %v136, %v148
  %v176 = vmul.f32 %v137, %v148
  %v177 = vmul.f32 %v138, %v148
  %v178 = vmul.f32 %v139, %v148
  %v179 = vmul.f32 %v140, %v148
  %v180 = vmul.f32 %v141, %v148
  %v181 = vmul.f32 %v142, %v148
  %v182 = vld [vmem:[%s5] sm:$0x1]
  %v184 = vlaneseq
  %v185 = vshrl.u32 %v184, 7
  %v186 = vsub.s32 0, %v185
  %v187 = vrot.slane %v182, %v186
  %v189 = vmul.f32 %v150, %v187
  %v190 = vmul.f32 %v151, %v187
  %v191 = vmul.f32 %v152, %v187
  %v192 = vmul.f32 %v153, %v187
  %v193 = vmul.f32 %v154, %v187
  %v194 = vmul.f32 %v155, %v187
  %v195 = vmul.f32 %v156, %v187
  %v196 = vmul.f32 %v157, %v187
  %v197 = vmul.f32 %v158, %v187
  %v198 = vmul.f32 %v159, %v187
  %v199 = vmul.f32 %v160, %v187
  %v200 = vmul.f32 %v161, %v187
  %v201 = vmul.f32 %v162, %v187
  %v202 = vmul.f32 %v163, %v187
  %v203 = vmul.f32 %v164, %v187
  %v204 = vmul.f32 %v165, %v187
  %v205 = vmul.f32 %v166, %v187
  %v206 = vmul.f32 %v167, %v187
  %v207 = vmul.f32 %v168, %v187
  %v208 = vmul.f32 %v169, %v187
  %v209 = vmul.f32 %v170, %v187
  %v210 = vmul.f32 %v171, %v187
  %v211 = vmul.f32 %v172, %v187
  %v212 = vmul.f32 %v173, %v187
  %v213 = vmul.f32 %v174, %v187
  %v214 = vmul.f32 %v175, %v187
  %v215 = vmul.f32 %v176, %v187
  %v216 = vmul.f32 %v177, %v187
  %v217 = vmul.f32 %v178, %v187
  %v218 = vmul.f32 %v179, %v187
  %v219 = vmul.f32 %v180, %v187
  %v220 = vmul.f32 %v181, %v187
  %v221 = vld [vmem:[%s6] sm:$0x1]
  %v223 = vlaneseq
  %v224 = vshrl.u32 %v223, 7
  %v225 = vsub.s32 0, %v224
  %v226 = vrot.slane %v221, %v225
  %v228 = vadd.f32 %v189, %v226
  %v229 = vadd.f32 %v190, %v226
  %v230 = vadd.f32 %v191, %v226
  %v231 = vadd.f32 %v192, %v226
  %v232 = vadd.f32 %v193, %v226
  %v233 = vadd.f32 %v194, %v226
  %v234 = vadd.f32 %v195, %v226
  %v235 = vadd.f32 %v196, %v226
  %v236 = vadd.f32 %v197, %v226
  %v237 = vadd.f32 %v198, %v226
  %v238 = vadd.f32 %v199, %v226
  %v239 = vadd.f32 %v200, %v226
  %v240 = vadd.f32 %v201, %v226
  %v241 = vadd.f32 %v202, %v226
  %v242 = vadd.f32 %v203, %v226
  %v243 = vadd.f32 %v204, %v226
  %v244 = vadd.f32 %v205, %v226
  %v245 = vadd.f32 %v206, %v226
  %v246 = vadd.f32 %v207, %v226
  %v247 = vadd.f32 %v208, %v226
  %v248 = vadd.f32 %v209, %v226
  %v249 = vadd.f32 %v210, %v226
  %v250 = vadd.f32 %v211, %v226
  %v251 = vadd.f32 %v212, %v226
  %v252 = vadd.f32 %v213, %v226
  %v253 = vadd.f32 %v214, %v226
  %v254 = vadd.f32 %v215, %v226
  %v255 = vadd.f32 %v216, %v226
  %v256 = vadd.f32 %v217, %v226
  %v257 = vadd.f32 %v218, %v226
  %v258 = vadd.f32 %v219, %v226
  %v259 = vadd.f32 %v220, %v226
  %v260 = vld [vmem:[#allocation2] sm:$0xff]
  %v261 = vld [vmem:[#allocation2 + $0x8] sm:$0xff]
  %v262 = vld [vmem:[#allocation2 + $0x10] sm:$0xff]
  %v263 = vld [vmem:[#allocation2 + $0x18] sm:$0xff]
  %v264 = vld [vmem:[#allocation2 + $0x20] sm:$0xff]
  %v265 = vld [vmem:[#allocation2 + $0x28] sm:$0xff]
  %v266 = vld [vmem:[#allocation2 + $0x30] sm:$0xff]
  %v267 = vld [vmem:[#allocation2 + $0x38] sm:$0xff]
  %v268 = vld [vmem:[#allocation2 + $0x40] sm:$0xff]
  %v269 = vld [vmem:[#allocation2 + $0x48] sm:$0xff]
  %v270 = vld [vmem:[#allocation2 + $0x50] sm:$0xff]
  %v271 = vld [vmem:[#allocation2 + $0x58] sm:$0xff]
  %v272 = vld [vmem:[#allocation2 + $0x60] sm:$0xff]
  %v273 = vld [vmem:[#allocation2 + $0x68] sm:$0xff]
  %v274 = vld [vmem:[#allocation2 + $0x70] sm:$0xff]
  %v275 = vld [vmem:[#allocation2 + $0x78] sm:$0xff]
  %v276 = vld [vmem:[#allocation2 + $0x80] sm:$0xff]
  %v277 = vld [vmem:[#allocation2 + $0x88] sm:$0xff]
  %v278 = vld [vmem:[#allocation2 + $0x90] sm:$0xff]
  %v279 = vld [vmem:[#allocation2 + $0x98] sm:$0xff]
  %v280 = vld [vmem:[#allocation2 + $0xa0] sm:$0xff]
  %v281 = vld [vmem:[#allocation2 + $0xa8] sm:$0xff]
  %v282 = vld [vmem:[#allocation2 + $0xb0] sm:$0xff]
  %v283 = vld [vmem:[#allocation2 + $0xb8] sm:$0xff]
  %v284 = vld [vmem:[#allocation2 + $0xc0] sm:$0xff]
  %v285 = vld [vmem:[#allocation2 + $0xc8] sm:$0xff]
  %v286 = vld [vmem:[#allocation2 + $0xd0] sm:$0xff]
  %v287 = vld [vmem:[#allocation2 + $0xd8] sm:$0xff]
  %v288 = vld [vmem:[#allocation2 + $0xe0] sm:$0xff]
  %v289 = vld [vmem:[#allocation2 + $0xe8] sm:$0xff]
  %v290 = vld [vmem:[#allocation2 + $0xf0] sm:$0xff]
  %v291 = vld [vmem:[#allocation2 + $0xf8] sm:$0xff]
  %v292 = vld [vmem:[%s0] sm:$0xff]
  %v293 = vld [vmem:[%s0 + $0x8] sm:$0xff]
  %v294 = vld [vmem:[%s0 + $0x10] sm:$0xff]
  %v295 = vld [vmem:[%s0 + $0x18] sm:$0xff]
  %v296 = vld [vmem:[%s0 + $0x20] sm:$0xff]
  %v297 = vld [vmem:[%s0 + $0x28] sm:$0xff]
  %v298 = vld [vmem:[%s0 + $0x30] sm:$0xff]
  %v299 = vld [vmem:[%s0 + $0x38] sm:$0xff]
  %v300 = vld [vmem:[%s0 + $0x40] sm:$0xff]
  %v301 = vld [vmem:[%s0 + $0x48] sm:$0xff]
  %v302 = vld [vmem:[%s0 + $0x50] sm:$0xff]
  %v303 = vld [vmem:[%s0 + $0x58] sm:$0xff]
  %v304 = vld [vmem:[%s0 + $0x60] sm:$0xff]
  %v305 = vld [vmem:[%s0 + $0x68] sm:$0xff]
  %v306 = vld [vmem:[%s0 + $0x70] sm:$0xff]
  %v307 = vld [vmem:[%s0 + $0x78] sm:$0xff]
  %v308 = vld [vmem:[%s0 + $0x80] sm:$0xff]
  %v309 = vld [vmem:[%s0 + $0x88] sm:$0xff]
  %v310 = vld [vmem:[%s0 + $0x90] sm:$0xff]
  %v311 = vld [vmem:[%s0 + $0x98] sm:$0xff]
  %v312 = vld [vmem:[%s0 + $0xa0] sm:$0xff]
  %v313 = vld [vmem:[%s0 + $0xa8] sm:$0xff]
  %v314 = vld [vmem:[%s0 + $0xb0] sm:$0xff]
  %v315 = vld [vmem:[%s0 + $0xb8] sm:$0xff]
  %v316 = vld [vmem:[%s0 + $0xc0] sm:$0xff]
  %v317 = vld [vmem:[%s0 + $0xc8] sm:$0xff]
  %v318 = vld [vmem:[%s0 + $0xd0] sm:$0xff]
  %v319 = vld [vmem:[%s0 + $0xd8] sm:$0xff]
  %v320 = vld [vmem:[%s0 + $0xe0] sm:$0xff]
  %v321 = vld [vmem:[%s0 + $0xe8] sm:$0xff]
  %v322 = vld [vmem:[%s0 + $0xf0] sm:$0xff]
  %v323 = vld [vmem:[%s0 + $0xf8] sm:$0xff]
  %v324 = vpack.c.bf16 %v229, %v228
  %v325 = vpack.c.bf16 %v231, %v230
  %v326 = vpack.c.bf16 %v233, %v232
  %v327 = vpack.c.bf16 %v235, %v234
  %v328 = vpack.c.bf16 %v237, %v236
  %v329 = vpack.c.bf16 %v239, %v238
  %v330 = vpack.c.bf16 %v241, %v240
  %v331 = vpack.c.bf16 %v243, %v242
  %v332 = vpack.c.bf16 %v245, %v244
  %v333 = vpack.c.bf16 %v247, %v246
  %v334 = vpack.c.bf16 %v249, %v248
  %v335 = vpack.c.bf16 %v251, %v250
  %v336 = vpack.c.bf16 %v253, %v252
  %v337 = vpack.c.bf16 %v255, %v254
  %v338 = vpack.c.bf16 %v257, %v256
  %v339 = vpack.c.bf16 %v259, %v258
  %v372 = vunpack.c.l.b16 %v292
  %v373 = vunpack.c.h.b16 %v292
  %v374 = vunpack.c.l.b16 %v293
  %v375 = vunpack.c.h.b16 %v293
  %v376 = vunpack.c.l.b16 %v294
  %v377 = vunpack.c.h.b16 %v294
  %v378 = vunpack.c.l.b16 %v295
  %v379 = vunpack.c.h.b16 %v295
  %v380 = vunpack.c.l.b16 %v296
  %v381 = vunpack.c.h.b16 %v296
  %v382 = vunpack.c.l.b16 %v297
  %v383 = vunpack.c.h.b16 %v297
  %v384 = vunpack.c.l.b16 %v298
  %v385 = vunpack.c.h.b16 %v298
  %v386 = vunpack.c.l.b16 %v299
  %v387 = vunpack.c.h.b16 %v299
  %v388 = vunpack.c.l.b16 %v300
  %v389 = vunpack.c.h.b16 %v300
  %v390 = vunpack.c.l.b16 %v301
  %v391 = vunpack.c.h.b16 %v301
  %v392 = vunpack.c.l.b16 %v302
  %v393 = vunpack.c.h.b16 %v302
  %v394 = vunpack.c.l.b16 %v303
  %v395 = vunpack.c.h.b16 %v303
  %v396 = vunpack.c.l.b16 %v304
  %v397 = vunpack.c.h.b16 %v304
  %v398 = vunpack.c.l.b16 %v305
  %v399 = vunpack.c.h.b16 %v305
  %v400 = vunpack.c.l.b16 %v306
  %v401 = vunpack.c.h.b16 %v306
  %v402 = vunpack.c.l.b16 %v307
  %v403 = vunpack.c.h.b16 %v307
  %v404 = vunpack.c.l.b16 %v308
  %v405 = vunpack.c.h.b16 %v308
  %v406 = vunpack.c.l.b16 %v309
  %v407 = vunpack.c.h.b16 %v309
  %v408 = vunpack.c.l.b16 %v310
  %v409 = vunpack.c.h.b16 %v310
  %v410 = vunpack.c.l.b16 %v311
  %v411 = vunpack.c.h.b16 %v311
  %v412 = vunpack.c.l.b16 %v312
  %v413 = vunpack.c.h.b16 %v312
  %v414 = vunpack.c.l.b16 %v313
  %v415 = vunpack.c.h.b16 %v313
  %v416 = vunpack.c.l.b16 %v314
  %v417 = vunpack.c.h.b16 %v314
  %v418 = vunpack.c.l.b16 %v315
  %v419 = vunpack.c.h.b16 %v315
  %v420 = vunpack.c.l.b16 %v316
  %v421 = vunpack.c.h.b16 %v316
  %v422 = vunpack.c.l.b16 %v317
  %v423 = vunpack.c.h.b16 %v317
  %v424 = vunpack.c.l.b16 %v318
  %v425 = vunpack.c.h.b16 %v318
  %v426 = vunpack.c.l.b16 %v319
  %v427 = vunpack.c.h.b16 %v319
  %v428 = vunpack.c.l.b16 %v320
  %v429 = vunpack.c.h.b16 %v320
  %v430 = vunpack.c.l.b16 %v321
  %v431 = vunpack.c.h.b16 %v321
  %v432 = vunpack.c.l.b16 %v322
  %v433 = vunpack.c.h.b16 %v322
  %v434 = vunpack.c.l.b16 %v323
  %v435 = vunpack.c.h.b16 %v323
  %v436 = vpack.c.b16 %v374, %v372
  %v437 = vpack.c.b16 %v375, %v373
  %v438 = vpack.c.b16 %v378, %v376
  %v439 = vpack.c.b16 %v379, %v377
  %v440 = vpack.c.b16 %v382, %v380
  %v441 = vpack.c.b16 %v383, %v381
  %v442 = vpack.c.b16 %v386, %v384
  %v443 = vpack.c.b16 %v387, %v385
  %v444 = vpack.c.b16 %v390, %v388
  %v445 = vpack.c.b16 %v391, %v389
  %v446 = vpack.c.b16 %v394, %v392
  %v447 = vpack.c.b16 %v395, %v393
  %v448 = vpack.c.b16 %v398, %v396
  %v449 = vpack.c.b16 %v399, %v397
  %v450 = vpack.c.b16 %v402, %v400
  %v451 = vpack.c.b16 %v403, %v401
  %v452 = vpack.c.b16 %v406, %v404
  %v453 = vpack.c.b16 %v407, %v405
  %v454 = vpack.c.b16 %v410, %v408
  %v455 = vpack.c.b16 %v411, %v409
  %v456 = vpack.c.b16 %v414, %v412
  %v457 = vpack.c.b16 %v415, %v413
  %v458 = vpack.c.b16 %v418, %v416
  %v459 = vpack.c.b16 %v419, %v417
  %v460 = vpack.c.b16 %v422, %v420
  %v461 = vpack.c.b16 %v423, %v421
  %v462 = vpack.c.b16 %v426, %v424
  %v463 = vpack.c.b16 %v427, %v425
  %v464 = vpack.c.b16 %v430, %v428
  %v465 = vpack.c.b16 %v431, %v429
  %v466 = vpack.c.b16 %v434, %v432
  %v467 = vpack.c.b16 %v435, %v433
  %500 = vmatprep.subr.bf16.mxu0 0
  %501 = vmatpush1.bf16.msra.mxu0 %v324
  %502 = vmatprep.subr.bf16.mxu0 0
  %503 = vmatpush1.bf16.msra.mxu0 %v325
  %504 = vmatprep.subr.bf16.mxu0 0
  %505 = vmatpush1.bf16.msra.mxu0 %v326
  %506 = vmatprep.subr.bf16.mxu0 0
  %507 = vmatpush1.bf16.msra.mxu0 %v327
  %508 = vmatprep.subr.bf16.mxu0 0
  %509 = vmatpush1.bf16.msra.mxu0 %v328
  %510 = vmatprep.subr.bf16.mxu0 0
  %511 = vmatpush1.bf16.msra.mxu0 %v329
  %512 = vmatprep.subr.bf16.mxu0 0
  %513 = vmatpush1.bf16.msra.mxu0 %v330
  %514 = vmatprep.subr.bf16.mxu0 0
  %515 = vmatpush1.bf16.msra.mxu0 %v331
  %516 = vmatprep.subr.bf16.mxu0 0
  %517 = vmatpush1.bf16.msra.mxu0 %v332
  %518 = vmatprep.subr.bf16.mxu0 0
  %519 = vmatpush1.bf16.msra.mxu0 %v333
  %520 = vmatprep.subr.bf16.mxu0 0
  %521 = vmatpush1.bf16.msra.mxu0 %v334
  %522 = vmatprep.subr.bf16.mxu0 0
  %523 = vmatpush1.bf16.msra.mxu0 %v335
  %524 = vmatprep.subr.bf16.mxu0 0
  %525 = vmatpush1.bf16.msra.mxu0 %v336
  %526 = vmatprep.subr.bf16.mxu0 0
  %527 = vmatpush1.bf16.msra.mxu0 %v337
  %528 = vmatprep.subr.bf16.mxu0 0
  %529 = vmatpush1.bf16.msra.mxu0 %v338
  %530 = vmatprep.subr.bf16.mxu0 0
  %531 = vmatpush1.bf16.msra.mxu0 %v339
  %532 = vmatprep.mubr.bf16.mxu0 %v437
  %533 = vmatmul.mubr.bf16.gmra.mrb[0].mxu0 %v436
  %v534 = vpop.f32.mrb[0].mxu0
  %v535 = vadd.f32 0.0, %v534
  %v536 = vpop.f32.mrb[0].mxu0
  %v537 = vpop.f32.mrb[0].mxu0
  %v538 = vadd.f32 0.0, %v537
  %v539 = vpop.f32.mrb[0].mxu0
  %540 = vmatprep.mubr.bf16.mxu0 %v439
  %541 = vmatmul.mubr.bf16.gmra.mrb[0].mxu0 %v438
  %v542 = vpop.f32.mrb[0].mxu0
  %v543 = vadd.f32 0.0, %v542
  %v544 = vpop.f32.mrb[0].mxu0
  %v545 = vpop.f32.mrb[0].mxu0
  %v546 = vadd.f32 0.0, %v545
  %v547 = vpop.f32.mrb[0].mxu0
  %548 = vmatprep.mubr.bf16.mxu0 %v441
  %549 = vmatmul.mubr.bf16.gmra.mrb[0].mxu0 %v440
  %v550 = vpop.f32.mrb[0].mxu0
  %v551 = vadd.f32 0.0, %v550
  %v552 = vpop.f32.mrb[0].mxu0
  %v553 = vpop.f32.mrb[0].mxu0
  %v554 = vadd.f32 0.0, %v553
  %v555 = vpop.f32.mrb[0].mxu0
  %556 = vmatprep.mubr.bf16.mxu0 %v443
  %557 = vmatmul.mubr.bf16.gmra.mrb[0].mxu0 %v442
  %v558 = vpop.f32.mrb[0].mxu0
  %v559 = vadd.f32 0.0, %v558
  %v560 = vpop.f32.mrb[0].mxu0
  %v561 = vpop.f32.mrb[0].mxu0
  %v562 = vadd.f32 0.0, %v561
  %v563 = vpop.f32.mrb[0].mxu0
  %564 = vmatprep.mubr.bf16.mxu0 %v445
  %565 = vmatmul.mubr.bf16.gmra.mrb[0].mxu0 %v444
  %v566 = vpop.f32.mrb[0].mxu0
  %v567 = vadd.f32 0.0, %v566
  %v568 = vpop.f32.mrb[0].mxu0
  %v569 = vpop.f32.mrb[0].mxu0
  %v570 = vadd.f32 0.0, %v569
  %v571 = vpop.f32.mrb[0].mxu0
  %572 = vmatprep.mubr.bf16.mxu0 %v447
  %573 = vmatmul.mubr.bf16.gmra.mrb[0].mxu0 %v446
  %v574 = vpop.f32.mrb[0].mxu0
  %v575 = vadd.f32 0.0, %v574
  %v576 = vpop.f32.mrb[0].mxu0
  %v577 = vpop.f32.mrb[0].mxu0
  %v578 = vadd.f32 0.0, %v577
  %v579 = vpop.f32.mrb[0].mxu0
  %580 = vmatprep.mubr.bf16.mxu0 %v449
  %581 = vmatmul.mubr.bf16.gmra.mrb[0].mxu0 %v448
  %v582 = vpop.f32.mrb[0].mxu0
  %v583 = vadd.f32 0.0, %v582
  %v584 = vpop.f32.mrb[0].mxu0
  %v585 = vpop.f32.mrb[0].mxu0
  %v586 = vadd.f32 0.0, %v585
  %v587 = vpop.f32.mrb[0].mxu0
  %588 = vmatprep.mubr.bf16.mxu0 %v451
  %589 = vmatmul.mubr.bf16.gmra.mrb[0].mxu0 %v450
  %v590 = vpop.f32.mrb[0].mxu0
  %v591 = vadd.f32 0.0, %v590
  %v592 = vpop.f32.mrb[0].mxu0
  %v593 = vpop.f32.mrb[0].mxu0
  %v594 = vadd.f32 0.0, %v593
  %v595 = vpop.f32.mrb[0].mxu0
  %596 = vmatprep.mubr.bf16.mxu0 %v453
  %597 = vmatmul.mubr.bf16.gmra.mrb[0].mxu0 %v452
  %v598 = vpop.f32.mrb[0].mxu0
  %v599 = vadd.f32 0.0, %v598
  %v600 = vpop.f32.mrb[0].mxu0
  %v601 = vpop.f32.mrb[0].mxu0
  %v602 = vadd.f32 0.0, %v601
  %v603 = vpop.f32.mrb[0].mxu0
  %604 = vmatprep.mubr.bf16.mxu0 %v455
  %605 = vmatmul.mubr.bf16.gmra.mrb[0].mxu0 %v454
  %v606 = vpop.f32.mrb[0].mxu0
  %v607 = vadd.f32 0.0, %v606
  %v608 = vpop.f32.mrb[0].mxu0
  %v609 = vpop.f32.mrb[0].mxu0
  %v610 = vadd.f32 0.0, %v609
  %v611 = vpop.f32.mrb[0].mxu0
  %612 = vmatprep.mubr.bf16.mxu0 %v457
  %613 = vmatmul.mubr.bf16.gmra.mrb[0].mxu0 %v456
  %v614 = vpop.f32.mrb[0].mxu0
  %v615 = vadd.f32 0.0, %v614
  %v616 = vpop.f32.mrb[0].mxu0
  %v617 = vpop.f32.mrb[0].mxu0
  %v618 = vadd.f32 0.0, %v617
  %v619 = vpop.f32.mrb[0].mxu0
  %620 = vmatprep.mubr.bf16.mxu0 %v459
  %621 = vmatmul.mubr.bf16.gmra.mrb[0].mxu0 %v458
  %v622 = vpop.f32.mrb[0].mxu0
  %v623 = vadd.f32 0.0, %v622
  %v624 = vpop.f32.mrb[0].mxu0
  %v625 = vpop.f32.mrb[0].mxu0
  %v626 = vadd.f32 0.0, %v625
  %v627 = vpop.f32.mrb[0].mxu0
  %628 = vmatprep.mubr.bf16.mxu0 %v461
  %629 = vmatmul.mubr.bf16.gmra.mrb[0].mxu0 %v460
  %v630 = vpop.f32.mrb[0].mxu0
  %v631 = vadd.f32 0.0, %v630
  %v632 = vpop.f32.mrb[0].mxu0
  %v633 = vpop.f32.mrb[0].mxu0
  %v634 = vadd.f32 0.0, %v633
  %v635 = vpop.f32.mrb[0].mxu0
  %636 = vmatprep.mubr.bf16.mxu0 %v463
  %637 = vmatmul.mubr.bf16.gmra.mrb[0].mxu0 %v462
  %v638 = vpop.f32.mrb[0].mxu0
  %v639 = vadd.f32 0.0, %v638
  %v640 = vpop.f32.mrb[0].mxu0
  %v641 = vpop.f32.mrb[0].mxu0
  %v642 = vadd.f32 0.0, %v641
  %v643 = vpop.f32.mrb[0].mxu0
  %644 = vmatprep.mubr.bf16.mxu0 %v465
  %645 = vmatmul.mubr.bf16.gmra.mrb[0].mxu0 %v464
  %v646 = vpop.f32.mrb[0].mxu0
  %v647 = vadd.f32 0.0, %v646
  %v648 = vpop.f32.mrb[0].mxu0
  %v649 = vpop.f32.mrb[0].mxu0
  %v650 = vadd.f32 0.0, %v649
  %v651 = vpop.f32.mrb[0].mxu0
  %652 = vmatprep.mubr.bf16.mxu0 %v467
  %653 = vmatmul.mubr.bf16.gmra.mrb[0].mxu0 %v466
  %v654 = vpop.f32.mrb[0].mxu0
  %v655 = vadd.f32 0.0, %v654
  %v656 = vpop.f32.mrb[0].mxu0
  %v657 = vpop.f32.mrb[0].mxu0
  %v658 = vadd.f32 0.0, %v657
  %v659 = vpop.f32.mrb[0].mxu0
  %660 = vdwg.mxu0
  %v661 = vadd.f32 %v260, %v535
  %v662 = vadd.f32 %v261, %v538
  %v663 = vadd.f32 %v262, %v543
  %v664 = vadd.f32 %v263, %v546
  %v665 = vadd.f32 %v264, %v551
  %v666 = vadd.f32 %v265, %v554
  %v667 = vadd.f32 %v266, %v559
  %v668 = vadd.f32 %v267, %v562
  %v669 = vadd.f32 %v268, %v567
  %v670 = vadd.f32 %v269, %v570
  %v671 = vadd.f32 %v270, %v575
  %v672 = vadd.f32 %v271, %v578
  %v673 = vadd.f32 %v272, %v583
  %v674 = vadd.f32 %v273, %v586
  %v675 = vadd.f32 %v274, %v591
  %v676 = vadd.f32 %v275, %v594
  %v677 = vadd.f32 %v276, %v599
  %v678 = vadd.f32 %v277, %v602
  %v679 = vadd.f32 %v278, %v607
  %v680 = vadd.f32 %v279, %v610
  %v681 = vadd.f32 %v280, %v615
  %v682 = vadd.f32 %v281, %v618
  %v683 = vadd.f32 %v282, %v623
  %v684 = vadd.f32 %v283, %v626
  %v685 = vadd.f32 %v284, %v631
  %v686 = vadd.f32 %v285, %v634
  %v687 = vadd.f32 %v286, %v639
  %v688 = vadd.f32 %v287, %v642
  %v689 = vadd.f32 %v288, %v647
  %v690 = vadd.f32 %v289, %v650
  %v691 = vadd.f32 %v290, %v655
  %v692 = vadd.f32 %v291, %v658
  %693 = vst [vmem:[#allocation2] sm:$0xff] %v661
  %694 = vst [vmem:[#allocation2 + $0x8] sm:$0xff] %v662
  %695 = vst [vmem:[#allocation2 + $0x10] sm:$0xff] %v663
  %696 = vst [vmem:[#allocation2 + $0x18] sm:$0xff] %v664
  %697 = vst [vmem:[#allocation2 + $0x20] sm:$0xff] %v665
  %698 = vst [vmem:[#allocation2 + $0x28] sm:$0xff] %v666
  %699 = vst [vmem:[#allocation2 + $0x30] sm:$0xff] %v667
  %700 = vst [vmem:[#allocation2 + $0x38] sm:$0xff] %v668
  %701 = vst [vmem:[#allocation2 + $0x40] sm:$0xff] %v669
  %702 = vst [vmem:[#allocation2 + $0x48] sm:$0xff] %v670
  %703 = vst [vmem:[#allocation2 + $0x50] sm:$0xff] %v671
  %704 = vst [vmem:[#allocation2 + $0x58] sm:$0xff] %v672
  %705 = vst [vmem:[#allocation2 + $0x60] sm:$0xff] %v673
  %706 = vst [vmem:[#allocation2 + $0x68] sm:$0xff] %v674
  %707 = vst [vmem:[#allocation2 + $0x70] sm:$0xff] %v675
  %708 = vst [vmem:[#allocation2 + $0x78] sm:$0xff] %v676
  %709 = vst [vmem:[#allocation2 + $0x80] sm:$0xff] %v677
  %710 = vst [vmem:[#allocation2 + $0x88] sm:$0xff] %v678
  %711 = vst [vmem:[#allocation2 + $0x90] sm:$0xff] %v679
  %712 = vst [vmem:[#allocation2 + $0x98] sm:$0xff] %v680
  %713 = vst [vmem:[#allocation2 + $0xa0] sm:$0xff] %v681
  %714 = vst [vmem:[#allocation2 + $0xa8] sm:$0xff] %v682
  %715 = vst [vmem:[#allocation2 + $0xb0] sm:$0xff] %v683
  %716 = vst [vmem:[#allocation2 + $0xb8] sm:$0xff] %v684
  %717 = vst [vmem:[#allocation2 + $0xc0] sm:$0xff] %v685
  %718 = vst [vmem:[#allocation2 + $0xc8] sm:$0xff] %v686
  %719 = vst [vmem:[#allocation2 + $0xd0] sm:$0xff] %v687
  %720 = vst [vmem:[#allocation2 + $0xd8] sm:$0xff] %v688
  %721 = vst [vmem:[#allocation2 + $0xe0] sm:$0xff] %v689
  %722 = vst [vmem:[#allocation2 + $0xe8] sm:$0xff] %v690
  %723 = vst [vmem:[#allocation2 + $0xf0] sm:$0xff] %v691
  %724 = vst [vmem:[#allocation2 + $0xf8] sm:$0xff] %v692
  // Predicated region
  $region46: #{regc_forward.2} parent=0 // pred_check
    %p725 = pneg %p36
  $region47: #{regc_forward.2} parent=0 // pred_check_branch
    %727 = sbr.rel (%p725) target = $region49
  $region48: #{regc_forward.2} parent=0 // pred_region
    %v728 = vld [vmem:[%s2] sm:$0xff]
    %v729 = vld [vmem:[%s2 + $0x8] sm:$0xff]
    %v730 = vld [vmem:[%s2 + $0x10] sm:$0xff]
    %v731 = vld [vmem:[%s2 + $0x18] sm:$0xff]
    %v732 = vld [vmem:[%s2 + $0x20] sm:$0xff]
    %v733 = vld [vmem:[%s2 + $0x28] sm:$0xff]
    %v734 = vld [vmem:[%s2 + $0x30] sm:$0xff]
    %v735 = vld [vmem:[%s2 + $0x38] sm:$0xff]
    %v736 = vld [vmem:[%s2 + $0x40] sm:$0xff]
    %v737 = vld [vmem:[%s2 + $0x48] sm:$0xff]
    %v738 = vld [vmem:[%s2 + $0x50] sm:$0xff]
    %v739 = vld [vmem:[%s2 + $0x58] sm:$0xff]
    %v740 = vld [vmem:[%s2 + $0x60] sm:$0xff]
    %v741 = vld [vmem:[%s2 + $0x68] sm:$0xff]
    %v742 = vld [vmem:[%s2 + $0x70] sm:$0xff]
    %v743 = vld [vmem:[%s2 + $0x78] sm:$0xff]
    %v744 = vld [vmem:[%s2 + $0x80] sm:$0xff]
    %v745 = vld [vmem:[%s2 + $0x88] sm:$0xff]
    %v746 = vld [vmem:[%s2 + $0x90] sm:$0xff]
    %v747 = vld [vmem:[%s2 + $0x98] sm:$0xff]
    %v748 = vld [vmem:[%s2 + $0xa0] sm:$0xff]
    %v749 = vld [vmem:[%s2 + $0xa8] sm:$0xff]
    %v750 = vld [vmem:[%s2 + $0xb0] sm:$0xff]
    %v751 = vld [vmem:[%s2 + $0xb8] sm:$0xff]
    %v752 = vld [vmem:[%s2 + $0xc0] sm:$0xff]
    %v753 = vld [vmem:[%s2 + $0xc8] sm:$0xff]
    %v754 = vld [vmem:[%s2 + $0xd0] sm:$0xff]
    %v755 = vld [vmem:[%s2 + $0xd8] sm:$0xff]
    %v756 = vld [vmem:[%s2 + $0xe0] sm:$0xff]
    %v757 = vld [vmem:[%s2 + $0xe8] sm:$0xff]
    %v758 = vld [vmem:[%s2 + $0xf0] sm:$0xff]
    %v759 = vld [vmem:[%s2 + $0xf8] sm:$0xff]
    %v760 = vld [vmem:[%s3] sm:$0x1]
    %v762 = vlaneseq
    %v763 = vshrl.u32 %v762, 7
    %v764 = vsub.s32 0, %v763
    %v765 = vrot.slane %v760, %v764
    %v767 = vsub.f32 %v728, %v765
    %v768 = vsub.f32 %v729, %v765
    %v769 = vsub.f32 %v730, %v765
    %v770 = vsub.f32 %v731, %v765
    %v771 = vsub.f32 %v732, %v765
    %v772 = vsub.f32 %v733, %v765
    %v773 = vsub.f32 %v734, %v765
    %v774 = vsub.f32 %v735, %v765
    %v775 = vsub.f32 %v736, %v765
    %v776 = vsub.f32 %v737, %v765
    %v777 = vsub.f32 %v738, %v765
    %v778 = vsub.f32 %v739, %v765
    %v779 = vsub.f32 %v740, %v765
    %v780 = vsub.f32 %v741, %v765
    %v781 = vsub.f32 %v742, %v765
    %v782 = vsub.f32 %v743, %v765
    %v783 = vsub.f32 %v744, %v765
    %v784 = vsub.f32 %v745, %v765
    %v785 = vsub.f32 %v746, %v765
    %v786 = vsub.f32 %v747, %v765
    %v787 = vsub.f32 %v748, %v765
    %v788 = vsub.f32 %v749, %v765
    %v789 = vsub.f32 %v750, %v765
    %v790 = vsub.f32 %v751, %v765
    %v791 = vsub.f32 %v752, %v765
    %v792 = vsub.f32 %v753, %v765
    %v793 = vsub.f32 %v754, %v765
    %v794 = vsub.f32 %v755, %v765
    %v795 = vsub.f32 %v756, %v765
    %v796 = vsub.f32 %v757, %v765
    %v797 = vsub.f32 %v758, %v765
    %v798 = vsub.f32 %v759, %v765
    %v799 = vld [vmem:[%s4] sm:$0x1]
    %v801 = vlaneseq
    %v802 = vshrl.u32 %v801, 7
    %v803 = vsub.s32 0, %v802
    %v804 = vrot.slane %v799, %v803
    %v806 = vmul.f32 %v767, %v804
    %v807 = vmul.f32 %v768, %v804
    %v808 = vmul.f32 %v769, %v804
    %v809 = vmul.f32 %v770, %v804
    %v810 = vmul.f32 %v771, %v804
    %v811 = vmul.f32 %v772, %v804
    %v812 = vmul.f32 %v773, %v804
    %v813 = vmul.f32 %v774, %v804
    %v814 = vmul.f32 %v775, %v804
    %v815 = vmul.f32 %v776, %v804
    %v816 = vmul.f32 %v777, %v804
    %v817 = vmul.f32 %v778, %v804
    %v818 = vmul.f32 %v779, %v804
    %v819 = vmul.f32 %v780, %v804
    %v820 = vmul.f32 %v781, %v804
    %v821 = vmul.f32 %v782, %v804
    %v822 = vmul.f32 %v783, %v804
    %v823 = vmul.f32 %v784, %v804
    %v824 = vmul.f32 %v785, %v804
    %v825 = vmul.f32 %v786, %v804
    %v826 = vmul.f32 %v787, %v804
    %v827 = vmul.f32 %v788, %v804
    %v828 = vmul.f32 %v789, %v804
    %v829 = vmul.f32 %v790, %v804
    %v830 = vmul.f32 %v791, %v804
    %v831 = vmul.f32 %v792, %v804
    %v832 = vmul.f32 %v793, %v804
    %v833 = vmul.f32 %v794, %v804
    %v834 = vmul.f32 %v795, %v804
    %v835 = vmul.f32 %v796, %v804
    %v836 = vmul.f32 %v797, %v804
    %v837 = vmul.f32 %v798, %v804
    %v838 = vld [vmem:[%s5] sm:$0x1]
    %v840 = vlaneseq
    %v841 = vshrl.u32 %v840, 7
    %v842 = vsub.s32 0, %v841
    %v843 = vrot.slane %v838, %v842
    %v845 = vmul.f32 %v806, %v843
    %v846 = vmul.f32 %v807, %v843
    %v847 = vmul.f32 %v808, %v843
    %v848 = vmul.f32 %v809, %v843
    %v849 = vmul.f32 %v810, %v843
    %v850 = vmul.f32 %v811, %v843
    %v851 = vmul.f32 %v812, %v843
    %v852 = vmul.f32 %v813, %v843
    %v853 = vmul.f32 %v814, %v843
    %v854 = vmul.f32 %v815, %v843
    %v855 = vmul.f32 %v816, %v843
    %v856 = vmul.f32 %v817, %v843
    %v857 = vmul.f32 %v818, %v843
    %v858 = vmul.f32 %v819, %v843
    %v859 = vmul.f32 %v820, %v843
    %v860 = vmul.f32 %v821, %v843
    %v861 = vmul.f32 %v822, %v843
    %v862 = vmul.f32 %v823, %v843
    %v863 = vmul.f32 %v824, %v843
    %v864 = vmul.f32 %v825, %v843
    %v865 = vmul.f32 %v826, %v843
    %v866 = vmul.f32 %v827, %v843
    %v867 = vmul.f32 %v828, %v843
    %v868 = vmul.f32 %v829, %v843
    %v869 = vmul.f32 %v830, %v843
    %v870 = vmul.f32 %v831, %v843
    %v871 = vmul.f32 %v832, %v843
    %v872 = vmul.f32 %v833, %v843
    %v873 = vmul.f32 %v834, %v843
    %v874 = vmul.f32 %v835, %v843
    %v875 = vmul.f32 %v836, %v843
    %v876 = vmul.f32 %v837, %v843
    %v877 = vld [vmem:[%s6] sm:$0x1]
    %v879 = vlaneseq
    %v880 = vshrl.u32 %v879, 7
    %v881 = vsub.s32 0, %v880
    %v882 = vrot.slane %v877, %v881
    %v884 = vadd.f32 %v845, %v882
    %v885 = vadd.f32 %v846, %v882
    %v886 = vadd.f32 %v847, %v882
    %v887 = vadd.f32 %v848, %v882
    %v888 = vadd.f32 %v849, %v882
    %v889 = vadd.f32 %v850, %v882
    %v890 = vadd.f32 %v851, %v882
    %v891 = vadd.f32 %v852, %v882
    %v892 = vadd.f32 %v853, %v882
    %v893 = vadd.f32 %v854, %v882
    %v894 = vadd.f32 %v855, %v882
    %v895 = vadd.f32 %v856, %v882
    %v896 = vadd.f32 %v857, %v882
    %v897 = vadd.f32 %v858, %v882
    %v898 = vadd.f32 %v859, %v882
    %v899 = vadd.f32 %v860, %v882
    %v900 = vadd.f32 %v861, %v882
    %v901 = vadd.f32 %v862, %v882
    %v902 = vadd.f32 %v863, %v882
    %v903 = vadd.f32 %v864, %v882
    %v904 = vadd.f32 %v865, %v882
    %v905 = vadd.f32 %v866, %v882
    %v906 = vadd.f32 %v867, %v882
    %v907 = vadd.f32 %v868, %v882
    %v908 = vadd.f32 %v869, %v882
    %v909 = vadd.f32 %v870, %v882
    %v910 = vadd.f32 %v871, %v882
    %v911 = vadd.f32 %v872, %v882
    %v912 = vadd.f32 %v873, %v882
    %v913 = vadd.f32 %v874, %v882
    %v914 = vadd.f32 %v875, %v882
    %v915 = vadd.f32 %v876, %v882
    %v916 = vld [vmem:[#allocation2] sm:$0xff]
    %v917 = vld [vmem:[#allocation2 + $0x8] sm:$0xff]
    %v918 = vld [vmem:[#allocation2 + $0x10] sm:$0xff]
    %v919 = vld [vmem:[#allocation2 + $0x18] sm:$0xff]
    %v920 = vld [vmem:[#allocation2 + $0x20] sm:$0xff]
    %v921 = vld [vmem:[#allocation2 + $0x28] sm:$0xff]
    %v922 = vld [vmem:[#allocation2 + $0x30] sm:$0xff]
    %v923 = vld [vmem:[#allocation2 + $0x38] sm:$0xff]
    %v924 = vld [vmem:[#allocation2 + $0x40] sm:$0xff]
    %v925 = vld [vmem:[#allocation2 + $0x48] sm:$0xff]
    %v926 = vld [vmem:[#allocation2 + $0x50] sm:$0xff]
    %v927 = vld [vmem:[#allocation2 + $0x58] sm:$0xff]
    %v928 = vld [vmem:[#allocation2 + $0x60] sm:$0xff]
    %v929 = vld [vmem:[#allocation2 + $0x68] sm:$0xff]
    %v930 = vld [vmem:[#allocation2 + $0x70] sm:$0xff]
    %v931 = vld [vmem:[#allocation2 + $0x78] sm:$0xff]
    %v932 = vld [vmem:[#allocation2 + $0x80] sm:$0xff]
    %v933 = vld [vmem:[#allocation2 + $0x88] sm:$0xff]
    %v934 = vld [vmem:[#allocation2 + $0x90] sm:$0xff]
    %v935 = vld [vmem:[#allocation2 + $0x98] sm:$0xff]
    %v936 = vld [vmem:[#allocation2 + $0xa0] sm:$0xff]
    %v937 = vld [vmem:[#allocation2 + $0xa8] sm:$0xff]
    %v938 = vld [vmem:[#allocation2 + $0xb0] sm:$0xff]
    %v939 = vld [vmem:[#allocation2 + $0xb8] sm:$0xff]
    %v940 = vld [vmem:[#allocation2 + $0xc0] sm:$0xff]
    %v941 = vld [vmem:[#allocation2 + $0xc8] sm:$0xff]
    %v942 = vld [vmem:[#allocation2 + $0xd0] sm:$0xff]
    %v943 = vld [vmem:[#allocation2 + $0xd8] sm:$0xff]
    %v944 = vld [vmem:[#allocation2 + $0xe0] sm:$0xff]
    %v945 = vld [vmem:[#allocation2 + $0xe8] sm:$0xff]
    %v946 = vld [vmem:[#allocation2 + $0xf0] sm:$0xff]
    %v947 = vld [vmem:[#allocation2 + $0xf8] sm:$0xff]
    %v948 = vld [vmem:[%s7] sm:$0xff]
    %v949 = vld [vmem:[%s7 + $0x8] sm:$0xff]
    %v950 = vld [vmem:[%s7 + $0x10] sm:$0xff]
    %v951 = vld [vmem:[%s7 + $0x18] sm:$0xff]
    %v952 = vld [vmem:[%s7 + $0x20] sm:$0xff]
    %v953 = vld [vmem:[%s7 + $0x28] sm:$0xff]
    %v954 = vld [vmem:[%s7 + $0x30] sm:$0xff]
    %v955 = vld [vmem:[%s7 + $0x38] sm:$0xff]
    %v956 = vld [vmem:[%s7 + $0x40] sm:$0xff]
    %v957 = vld [vmem:[%s7 + $0x48] sm:$0xff]
    %v958 = vld [vmem:[%s7 + $0x50] sm:$0xff]
    %v959 = vld [vmem:[%s7 + $0x58] sm:$0xff]
    %v960 = vld [vmem:[%s7 + $0x60] sm:$0xff]
    %v961 = vld [vmem:[%s7 + $0x68] sm:$0xff]
    %v962 = vld [vmem:[%s7 + $0x70] sm:$0xff]
    %v963 = vld [vmem:[%s7 + $0x78] sm:$0xff]
    %v964 = vld [vmem:[%s7 + $0x80] sm:$0xff]
    %v965 = vld [vmem:[%s7 + $0x88] sm:$0xff]
    %v966 = vld [vmem:[%s7 + $0x90] sm:$0xff]
    %v967 = vld [vmem:[%s7 + $0x98] sm:$0xff]
    %v968 = vld [vmem:[%s7 + $0xa0] sm:$0xff]
    %v969 = vld [vmem:[%s7 + $0xa8] sm:$0xff]
    %v970 = vld [vmem:[%s7 + $0xb0] sm:$0xff]
    %v971 = vld [vmem:[%s7 + $0xb8] sm:$0xff]
    %v972 = vld [vmem:[%s7 + $0xc0] sm:$0xff]
    %v973 = vld [vmem:[%s7 + $0xc8] sm:$0xff]
    %v974 = vld [vmem:[%s7 + $0xd0] sm:$0xff]
    %v975 = vld [vmem:[%s7 + $0xd8] sm:$0xff]
    %v976 = vld [vmem:[%s7 + $0xe0] sm:$0xff]
    %v977 = vld [vmem:[%s7 + $0xe8] sm:$0xff]
    %v978 = vld [vmem:[%s7 + $0xf0] sm:$0xff]
    %v979 = vld [vmem:[%s7 + $0xf8] sm:$0xff]
    %v980 = vld [vmem:[%s9] sm:$0x3]
    %v982 = vlaneseq
    %v983 = vshrl.u32 %v982, 7
    %v984 = vsub.s32 0, %v983
    %v985 = vrot.slane %v980, %v984
    %v986 = vlaneseq
    %v987 = vshrl.u32 %v986, 7
    %v988 = vsub.s32 1, %v987
    %v989 = vrot.slane %v980, %v988
    %992 = vmatprep.subr.mxu0 %v949
    %993 = vmatpush1.msra.mxu0 %v948
    %994 = vmatprep.subr.mxu0 %v951
    %995 = vmatpush1.msra.mxu0 %v950
    %996 = vmatprep.subr.mxu0 %v953
    %997 = vmatpush1.msra.mxu0 %v952
    %998 = vmatprep.subr.mxu0 %v955
    %999 = vmatpush1.msra.mxu0 %v954
    %1000 = vmatprep.subr.mxu0 %v957
    %1001 = vmatpush1.msra.mxu0 %v956
    %1002 = vmatprep.subr.mxu0 %v959
    %1003 = vmatpush1.msra.mxu0 %v958
    %1004 = vmatprep.subr.mxu0 %v961
    %1005 = vmatpush1.msra.mxu0 %v960
    %1006 = vmatprep.subr.mxu0 %v963
    %1007 = vmatpush1.msra.mxu0 %v962
    %1008 = vmatprep.subr.mxu0 %v965
    %1009 = vmatpush1.msra.mxu0 %v964
    %1010 = vmatprep.subr.mxu0 %v967
    %1011 = vmatpush1.msra.mxu0 %v966
    %1012 = vmatprep.subr.mxu0 %v969
    %1013 = vmatpush1.msra.mxu0 %v968
    %1014 = vmatprep.subr.mxu0 %v971
    %1015 = vmatpush1.msra.mxu0 %v970
    %1016 = vmatprep.subr.mxu0 %v973
    %1017 = vmatpush1.msra.mxu0 %v972
    %1018 = vmatprep.subr.mxu0 %v975
    %1019 = vmatpush1.msra.mxu0 %v974
    %1020 = vmatprep.subr.mxu0 %v977
    %1021 = vmatpush1.msra.mxu0 %v976
    %1022 = vmatprep.subr.mxu0 %v979
    %1023 = vmatpush1.msra.mxu0 %v978
    %1024 = vmatprep.subr.mxu0 0.0
    %1025 = vmatpush1.msra.mxu0 0.0
    %1026 = vmatprep.subr.mxu0 0.0
    %1027 = vmatpush1.msra.mxu0 0.0
    %1028 = vmatprep.subr.mxu0 0.0
    %1029 = vmatpush1.msra.mxu0 0.0
    %1030 = vmatprep.subr.mxu0 0.0
    %1031 = vmatpush1.msra.mxu0 0.0
    %1032 = vmatprep.subr.mxu0 0.0
    %1033 = vmatpush1.msra.mxu0 0.0
    %1034 = vmatprep.subr.mxu0 0.0
    %1035 = vmatpush1.msra.mxu0 0.0
    %1036 = vmatprep.subr.mxu0 0.0
    %1037 = vmatpush1.msra.mxu0 0.0
    %1038 = vmatprep.subr.mxu0 0.0
    %1039 = vmatpush1.msra.mxu0 0.0
    %1040 = vmatprep.subr.mxu0 0.0
    %1041 = vmatpush1.msra.mxu0 0.0
    %1042 = vmatprep.subr.mxu0 0.0
    %1043 = vmatpush1.msra.mxu0 0.0
    %1044 = vmatprep.subr.mxu0 0.0
    %1045 = vmatpush1.msra.mxu0 0.0
    %1046 = vmatprep.subr.mxu0 0.0
    %1047 = vmatpush1.msra.mxu0 0.0
    %1048 = vmatprep.subr.mxu0 0.0
    %1049 = vmatpush1.msra.mxu0 0.0
    %1050 = vmatprep.subr.mxu0 0.0
    %1051 = vmatpush1.msra.mxu0 0.0
    %1052 = vmatprep.subr.mxu0 0.0
    %1053 = vmatpush1.msra.mxu0 0.0
    %1054 = vmatprep.subr.mxu0 0.0
    %1055 = vmatpush1.msra.mxu0 0.0
    %1056 = vmatprep.mubr.f32.mxu0 0.0
    %1057 = vmatmul.mubr.f32.gmra.mrb[0].mxu0 %v916
    %v1058 = vpop.f32.mrb[0].mxu0
    %v1059 = vadd.f32 %v985, %v1058
    %v1060 = vpop.f32.mrb[0].mxu0
    %v1061 = vadd.f32 %v989, %v1060
    %1062 = vmatprep.mubr.f32.mxu0 0.0
    %1063 = vmatmul.mubr.f32.gmra.mrb[0].mxu0 %v917
    %v1064 = vpop.f32.mrb[0].mxu0
    %v1065 = vadd.f32 %v985, %v1064
    %v1066 = vpop.f32.mrb[0].mxu0
    %v1067 = vadd.f32 %v989, %v1066
    %1068 = vmatprep.mubr.f32.mxu0 0.0
    %1069 = vmatmul.mubr.f32.gmra.mrb[0].mxu0 %v918
    %v1070 = vpop.f32.mrb[0].mxu0
    %v1071 = vadd.f32 %v985, %v1070
    %v1072 = vpop.f32.mrb[0].mxu0
    %v1073 = vadd.f32 %v989, %v1072
    %1074 = vmatprep.mubr.f32.mxu0 0.0
    %1075 = vmatmul.mubr.f32.gmra.mrb[0].mxu0 %v919
    %v1076 = vpop.f32.mrb[0].mxu0
    %v1077 = vadd.f32 %v985, %v1076
    %v1078 = vpop.f32.mrb[0].mxu0
    %v1079 = vadd.f32 %v989, %v1078
    %1080 = vmatprep.mubr.f32.mxu0 0.0
    %1081 = vmatmul.mubr.f32.gmra.mrb[0].mxu0 %v920
    %v1082 = vpop.f32.mrb[0].mxu0
    %v1083 = vadd.f32 %v985, %v1082
    %v1084 = vpop.f32.mrb[0].mxu0
    %v1085 = vadd.f32 %v989, %v1084
    %1086 = vmatprep.mubr.f32.mxu0 0.0
    %1087 = vmatmul.mubr.f32.gmra.mrb[0].mxu0 %v921
    %v1088 = vpop.f32.mrb[0].mxu0
    %v1089 = vadd.f32 %v985, %v1088
    %v1090 = vpop.f32.mrb[0].mxu0
    %v1091 = vadd.f32 %v989, %v1090
    %1092 = vmatprep.mubr.f32.mxu0 0.0
    %1093 = vmatmul.mubr.f32.gmra.mrb[0].mxu0 %v922
    %v1094 = vpop.f32.mrb[0].mxu0
    %v1095 = vadd.f32 %v985, %v1094
    %v1096 = vpop.f32.mrb[0].mxu0
    %v1097 = vadd.f32 %v989, %v1096
    %1098 = vmatprep.mubr.f32.mxu0 0.0
    %1099 = vmatmul.mubr.f32.gmra.mrb[0].mxu0 %v923
    %v1100 = vpop.f32.mrb[0].mxu0
    %v1101 = vadd.f32 %v985, %v1100
    %v1102 = vpop.f32.mrb[0].mxu0
    %v1103 = vadd.f32 %v989, %v1102
    %1104 = vmatprep.mubr.f32.mxu0 0.0
    %1105 = vmatmul.mubr.f32.gmra.mrb[0].mxu0 %v924
    %v1106 = vpop.f32.mrb[0].mxu0
    %v1107 = vadd.f32 %v985, %v1106
    %v1108 = vpop.f32.mrb[0].mxu0
    %v1109 = vadd.f32 %v989, %v1108
    %1110 = vmatprep.mubr.f32.mxu0 0.0
    %1111 = vmatmul.mubr.f32.gmra.mrb[0].mxu0 %v925
    %v1112 = vpop.f32.mrb[0].mxu0
    %v1113 = vadd.f32 %v985, %v1112
    %v1114 = vpop.f32.mrb[0].mxu0
    %v1115 = vadd.f32 %v989, %v1114
    %1116 = vmatprep.mubr.f32.mxu0 0.0
    %1117 = vmatmul.mubr.f32.gmra.mrb[0].mxu0 %v926
    %v1118 = vpop.f32.mrb[0].mxu0
    %v1119 = vadd.f32 %v985, %v1118
    %v1120 = vpop.f32.mrb[0].mxu0
    %v1121 = vadd.f32 %v989, %v1120
    %1122 = vmatprep.mubr.f32.mxu0 0.0
    %1123 = vmatmul.mubr.f32.gmra.mrb[0].mxu0 %v927
    %v1124 = vpop.f32.mrb[0].mxu0
    %v1125 = vadd.f32 %v985, %v1124
    %v1126 = vpop.f32.mrb[0].mxu0
    %v1127 = vadd.f32 %v989, %v1126
    %1128 = vmatprep.mubr.f32.mxu0 0.0
    %1129 = vmatmul.mubr.f32.gmra.mrb[0].mxu0 %v928
    %v1130 = vpop.f32.mrb[0].mxu0
    %v1131 = vadd.f32 %v985, %v1130
    %v1132 = vpop.f32.mrb[0].mxu0
    %v1133 = vadd.f32 %v989, %v1132
    %1134 = vmatprep.mubr.f32.mxu0 0.0
    %1135 = vmatmul.mubr.f32.gmra.mrb[0].mxu0 %v929
    %v1136 = vpop.f32.mrb[0].mxu0
    %v1137 = vadd.f32 %v985, %v1136
    %v1138 = vpop.f32.mrb[0].mxu0
    %v1139 = vadd.f32 %v989, %v1138
    %1140 = vmatprep.mubr.f32.mxu0 0.0
    %1141 = vmatmul.mubr.f32.gmra.mrb[0].mxu0 %v930
    %v1142 = vpop.f32.mrb[0].mxu0
    %v1143 = vadd.f32 %v985, %v1142
    %v1144 = vpop.f32.mrb[0].mxu0
    %v1145 = vadd.f32 %v989, %v1144
    %1146 = vmatprep.mubr.f32.mxu0 0.0
    %1147 = vmatmul.mubr.f32.gmra.mrb[0].mxu0 %v931
    %v1148 = vpop.f32.mrb[0].mxu0
    %v1149 = vadd.f32 %v985, %v1148
    %v1150 = vpop.f32.mrb[0].mxu0
    %v1151 = vadd.f32 %v989, %v1150
    %1152 = vmatprep.mubr.f32.mxu0 0.0
    %1153 = vmatmul.mubr.f32.gmra.mrb[0].mxu0 %v932
    %v1154 = vpop.f32.mrb[0].mxu0
    %v1155 = vadd.f32 %v985, %v1154
    %v1156 = vpop.f32.mrb[0].mxu0
    %v1157 = vadd.f32 %v989, %v1156
    %1158 = vmatprep.mubr.f32.mxu0 0.0
    %1159 = vmatmul.mubr.f32.gmra.mrb[0].mxu0 %v933
    %v1160 = vpop.f32.mrb[0].mxu0
    %v1161 = vadd.f32 %v985, %v1160
    %v1162 = vpop.f32.mrb[0].mxu0
    %v1163 = vadd.f32 %v989, %v1162
    %1164 = vmatprep.mubr.f32.mxu0 0.0
    %1165 = vmatmul.mubr.f32.gmra.mrb[0].mxu0 %v934
    %v1166 = vpop.f32.mrb[0].mxu0
    %v1167 = vadd.f32 %v985, %v1166
    %v1168 = vpop.f32.mrb[0].mxu0
    %v1169 = vadd.f32 %v989, %v1168
    %1170 = vmatprep.mubr.f32.mxu0 0.0
    %1171 = vmatmul.mubr.f32.gmra.mrb[0].mxu0 %v935
    %v1172 = vpop.f32.mrb[0].mxu0
    %v1173 = vadd.f32 %v985, %v1172
    %v1174 = vpop.f32.mrb[0].mxu0
    %v1175 = vadd.f32 %v989, %v1174
    %1176 = vmatprep.mubr.f32.mxu0 0.0
    %1177 = vmatmul.mubr.f32.gmra.mrb[0].mxu0 %v936
    %v1178 = vpop.f32.mrb[0].mxu0
    %v1179 = vadd.f32 %v985, %v1178
    %v1180 = vpop.f32.mrb[0].mxu0
    %v1181 = vadd.f32 %v989, %v1180
    %1182 = vmatprep.mubr.f32.mxu0 0.0
    %1183 = vmatmul.mubr.f32.gmra.mrb[0].mxu0 %v937
    %v1184 = vpop.f32.mrb[0].mxu0
    %v1185 = vadd.f32 %v985, %v1184
    %v1186 = vpop.f32.mrb[0].mxu0
    %v1187 = vadd.f32 %v989, %v1186
    %1188 = vmatprep.mubr.f32.mxu0 0.0
    %1189 = vmatmul.mubr.f32.gmra.mrb[0].mxu0 %v938
    %v1190 = vpop.f32.mrb[0].mxu0
    %v1191 = vadd.f32 %v985, %v1190
    %v1192 = vpop.f32.mrb[0].mxu0
    %v1193 = vadd.f32 %v989, %v1192
    %1194 = vmatprep.mubr.f32.mxu0 0.0
    %1195 = vmatmul.mubr.f32.gmra.mrb[0].mxu0 %v939
    %v1196 = vpop.f32.mrb[0].mxu0
    %v1197 = vadd.f32 %v985, %v1196
    %v1198 = vpop.f32.mrb[0].mxu0
    %v1199 = vadd.f32 %v989, %v1198
    %1200 = vmatprep.mubr.f32.mxu0 0.0
    %1201 = vmatmul.mubr.f32.gmra.mrb[0].mxu0 %v940
    %v1202 = vpop.f32.mrb[0].mxu0
    %v1203 = vadd.f32 %v985, %v1202
    %v1204 = vpop.f32.mrb[0].mxu0
    %v1205 = vadd.f32 %v989, %v1204
    %1206 = vmatprep.mubr.f32.mxu0 0.0
    %1207 = vmatmul.mubr.f32.gmra.mrb[0].mxu0 %v941
    %v1208 = vpop.f32.mrb[0].mxu0
    %v1209 = vadd.f32 %v985, %v1208
    %v1210 = vpop.f32.mrb[0].mxu0
    %v1211 = vadd.f32 %v989, %v1210
    %1212 = vmatprep.mubr.f32.mxu0 0.0
    %1213 = vmatmul.mubr.f32.gmra.mrb[0].mxu0 %v942
    %v1214 = vpop.f32.mrb[0].mxu0
    %v1215 = vadd.f32 %v985, %v1214
    %v1216 = vpop.f32.mrb[0].mxu0
    %v1217 = vadd.f32 %v989, %v1216
    %1218 = vmatprep.mubr.f32.mxu0 0.0
    %1219 = vmatmul.mubr.f32.gmra.mrb[0].mxu0 %v943
    %v1220 = vpop.f32.mrb[0].mxu0
    %v1221 = vadd.f32 %v985, %v1220
    %v1222 = vpop.f32.mrb[0].mxu0
    %v1223 = vadd.f32 %v989, %v1222
    %1224 = vmatprep.mubr.f32.mxu0 0.0
    %1225 = vmatmul.mubr.f32.gmra.mrb[0].mxu0 %v944
    %v1226 = vpop.f32.mrb[0].mxu0
    %v1227 = vadd.f32 %v985, %v1226
    %v1228 = vpop.f32.mrb[0].mxu0
    %v1229 = vadd.f32 %v989, %v1228
    %1230 = vmatprep.mubr.f32.mxu0 0.0
    %1231 = vmatmul.mubr.f32.gmra.mrb[0].mxu0 %v945
    %v1232 = vpop.f32.mrb[0].mxu0
    %v1233 = vadd.f32 %v985, %v1232
    %v1234 = vpop.f32.mrb[0].mxu0
    %v1235 = vadd.f32 %v989, %v1234
    %1236 = vmatprep.mubr.f32.mxu0 0.0
    %1237 = vmatmul.mubr.f32.gmra.mrb[0].mxu0 %v946
    %v1238 = vpop.f32.mrb[0].mxu0
    %v1239 = vadd.f32 %v985, %v1238
    %v1240 = vpop.f32.mrb[0].mxu0
    %v1241 = vadd.f32 %v989, %v1240
    %1242 = vmatprep.mubr.f32.mxu0 0.0
    %1243 = vmatmul.mubr.f32.gmra.mrb[0].mxu0 %v947
    %v1244 = vpop.f32.mrb[0].mxu0
    %v1245 = vadd.f32 %v985, %v1244
    %v1246 = vpop.f32.mrb[0].mxu0
    %v1247 = vadd.f32 %v989, %v1246
    %1248 = vdwg.mxu0
    %v1249 = vld [vmem:[%s8] sm:$0xff]
    %v1250 = vld [vmem:[%s8 + $0x8] sm:$0xff]
    %v1251 = vld [vmem:[%s8 + $0x10] sm:$0xff]
    %v1252 = vld [vmem:[%s8 + $0x18] sm:$0xff]
    %v1253 = vld [vmem:[%s8 + $0x20] sm:$0xff]
    %v1254 = vld [vmem:[%s8 + $0x28] sm:$0xff]
    %v1255 = vld [vmem:[%s8 + $0x30] sm:$0xff]
    %v1256 = vld [vmem:[%s8 + $0x38] sm:$0xff]
    %v1257 = vld [vmem:[%s8 + $0x40] sm:$0xff]
    %v1258 = vld [vmem:[%s8 + $0x48] sm:$0xff]
    %v1259 = vld [vmem:[%s8 + $0x50] sm:$0xff]
    %v1260 = vld [vmem:[%s8 + $0x58] sm:$0xff]
    %v1261 = vld [vmem:[%s8 + $0x60] sm:$0xff]
    %v1262 = vld [vmem:[%s8 + $0x68] sm:$0xff]
    %v1263 = vld [vmem:[%s8 + $0x70] sm:$0xff]
    %v1264 = vld [vmem:[%s8 + $0x78] sm:$0xff]
    %v1265 = vld [vmem:[%s8 + $0x80] sm:$0xff]
    %v1266 = vld [vmem:[%s8 + $0x88] sm:$0xff]
    %v1267 = vld [vmem:[%s8 + $0x90] sm:$0xff]
    %v1268 = vld [vmem:[%s8 + $0x98] sm:$0xff]
    %v1269 = vld [vmem:[%s8 + $0xa0] sm:$0xff]
    %v1270 = vld [vmem:[%s8 + $0xa8] sm:$0xff]
    %v1271 = vld [vmem:[%s8 + $0xb0] sm:$0xff]
    %v1272 = vld [vmem:[%s8 + $0xb8] sm:$0xff]
    %v1273 = vld [vmem:[%s8 + $0xc0] sm:$0xff]
    %v1274 = vld [vmem:[%s8 + $0xc8] sm:$0xff]
    %v1275 = vld [vmem:[%s8 + $0xd0] sm:$0xff]
    %v1276 = vld [vmem:[%s8 + $0xd8] sm:$0xff]
    %v1277 = vld [vmem:[%s8 + $0xe0] sm:$0xff]
    %v1278 = vld [vmem:[%s8 + $0xe8] sm:$0xff]
    %v1279 = vld [vmem:[%s8 + $0xf0] sm:$0xff]
    %v1280 = vld [vmem:[%s8 + $0xf8] sm:$0xff]
    %1281 = vmatprep.subr.mxu0 %v1250
    %1282 = vmatpush1.msra.mxu0 %v1249
    %1283 = vmatprep.subr.mxu0 %v1252
    %1284 = vmatpush1.msra.mxu0 %v1251
    %1285 = vmatprep.subr.mxu0 %v1254
    %1286 = vmatpush1.msra.mxu0 %v1253
    %1287 = vmatprep.subr.mxu0 %v1256
    %1288 = vmatpush1.msra.mxu0 %v1255
    %1289 = vmatprep.subr.mxu0 %v1258
    %1290 = vmatpush1.msra.mxu0 %v1257
    %1291 = vmatprep.subr.mxu0 %v1260
    %1292 = vmatpush1.msra.mxu0 %v1259
    %1293 = vmatprep.subr.mxu0 %v1262
    %1294 = vmatpush1.msra.mxu0 %v1261
    %1295 = vmatprep.subr.mxu0 %v1264
    %1296 = vmatpush1.msra.mxu0 %v1263
    %1297 = vmatprep.subr.mxu0 %v1266
    %1298 = vmatpush1.msra.mxu0 %v1265
    %1299 = vmatprep.subr.mxu0 %v1268
    %1300 = vmatpush1.msra.mxu0 %v1267
    %1301 = vmatprep.subr.mxu0 %v1270
    %1302 = vmatpush1.msra.mxu0 %v1269
    %1303 = vmatprep.subr.mxu0 %v1272
    %1304 = vmatpush1.msra.mxu0 %v1271
    %1305 = vmatprep.subr.mxu0 %v1274
    %1306 = vmatpush1.msra.mxu0 %v1273
    %1307 = vmatprep.subr.mxu0 %v1276
    %1308 = vmatpush1.msra.mxu0 %v1275
    %1309 = vmatprep.subr.mxu0 %v1278
    %1310 = vmatpush1.msra.mxu0 %v1277
    %1311 = vmatprep.subr.mxu0 %v1280
    %1312 = vmatpush1.msra.mxu0 %v1279
    %1313 = vmatprep.subr.mxu0 0.0
    %1314 = vmatpush1.msra.mxu0 0.0
    %1315 = vmatprep.subr.mxu0 0.0
    %1316 = vmatpush1.msra.mxu0 0.0
    %1317 = vmatprep.subr.mxu0 0.0
    %1318 = vmatpush1.msra.mxu0 0.0
    %1319 = vmatprep.subr.mxu0 0.0
    %1320 = vmatpush1.msra.mxu0 0.0
    %1321 = vmatprep.subr.mxu0 0.0
    %1322 = vmatpush1.msra.mxu0 0.0
    %1323 = vmatprep.subr.mxu0 0.0
    %1324 = vmatpush1.msra.mxu0 0.0
    %1325 = vmatprep.subr.mxu0 0.0
    %1326 = vmatpush1.msra.mxu0 0.0
    %1327 = vmatprep.subr.mxu0 0.0
    %1328 = vmatpush1.msra.mxu0 0.0
    %1329 = vmatprep.subr.mxu0 0.0
    %1330 = vmatpush1.msra.mxu0 0.0
    %1331 = vmatprep.subr.mxu0 0.0
    %1332 = vmatpush1.msra.mxu0 0.0
    %1333 = vmatprep.subr.mxu0 0.0
    %1334 = vmatpush1.msra.mxu0 0.0
    %1335 = vmatprep.subr.mxu0 0.0
    %1336 = vmatpush1.msra.mxu0 0.0
    %1337 = vmatprep.subr.mxu0 0.0
    %1338 = vmatpush1.msra.mxu0 0.0
    %1339 = vmatprep.subr.mxu0 0.0
    %1340 = vmatpush1.msra.mxu0 0.0
    %1341 = vmatprep.subr.mxu0 0.0
    %1342 = vmatpush1.msra.mxu0 0.0
    %1343 = vmatprep.subr.mxu0 0.0
    %1344 = vmatpush1.msra.mxu0 0.0
    %1345 = vmatprep.mubr.f32.mxu0 0.0
    %1346 = vmatmul.mubr.f32.gmra.mrb[0].mxu0 %v884
    %v1347 = vpop.f32.mrb[0].mxu0
    %v1348 = vadd.f32 0.0, %v1347
    %v1349 = vpop.f32.mrb[0].mxu0
    %v1350 = vadd.f32 0.0, %v1349
    %1351 = vmatprep.mubr.f32.mxu0 0.0
    %1352 = vmatmul.mubr.f32.gmra.mrb[0].mxu0 %v885
    %v1353 = vpop.f32.mrb[0].mxu0
    %v1354 = vadd.f32 0.0, %v1353
    %v1355 = vpop.f32.mrb[0].mxu0
    %v1356 = vadd.f32 0.0, %v1355
    %1357 = vmatprep.mubr.f32.mxu0 0.0
    %1358 = vmatmul.mubr.f32.gmra.mrb[0].mxu0 %v886
    %v1359 = vpop.f32.mrb[0].mxu0
    %v1360 = vadd.f32 0.0, %v1359
    %v1361 = vpop.f32.mrb[0].mxu0
    %v1362 = vadd.f32 0.0, %v1361
    %1363 = vmatprep.mubr.f32.mxu0 0.0
    %1364 = vmatmul.mubr.f32.gmra.mrb[0].mxu0 %v887
    %v1365 = vpop.f32.mrb[0].mxu0
    %v1366 = vadd.f32 0.0, %v1365
    %v1367 = vpop.f32.mrb[0].mxu0
    %v1368 = vadd.f32 0.0, %v1367
    %1369 = vmatprep.mubr.f32.mxu0 0.0
    %1370 = vmatmul.mubr.f32.gmra.mrb[0].mxu0 %v888
    %v1371 = vpop.f32.mrb[0].mxu0
    %v1372 = vadd.f32 0.0, %v1371
    %v1373 = vpop.f32.mrb[0].mxu0
    %v1374 = vadd.f32 0.0, %v1373
    %1375 = vmatprep.mubr.f32.mxu0 0.0
    %1376 = vmatmul.mubr.f32.gmra.mrb[0].mxu0 %v889
    %v1377 = vpop.f32.mrb[0].mxu0
    %v1378 = vadd.f32 0.0, %v1377
    %v1379 = vpop.f32.mrb[0].mxu0
    %v1380 = vadd.f32 0.0, %v1379
    %1381 = vmatprep.mubr.f32.mxu0 0.0
    %1382 = vmatmul.mubr.f32.gmra.mrb[0].mxu0 %v890
    %v1383 = vpop.f32.mrb[0].mxu0
    %v1384 = vadd.f32 0.0, %v1383
    %v1385 = vpop.f32.mrb[0].mxu0
    %v1386 = vadd.f32 0.0, %v1385
    %1387 = vmatprep.mubr.f32.mxu0 0.0
    %1388 = vmatmul.mubr.f32.gmra.mrb[0].mxu0 %v891
    %v1389 = vpop.f32.mrb[0].mxu0
    %v1390 = vadd.f32 0.0, %v1389
    %v1391 = vpop.f32.mrb[0].mxu0
    %v1392 = vadd.f32 0.0, %v1391
    %1393 = vmatprep.mubr.f32.mxu0 0.0
    %1394 = vmatmul.mubr.f32.gmra.mrb[0].mxu0 %v892
    %v1395 = vpop.f32.mrb[0].mxu0
    %v1396 = vadd.f32 0.0, %v1395
    %v1397 = vpop.f32.mrb[0].mxu0
    %v1398 = vadd.f32 0.0, %v1397
    %1399 = vmatprep.mubr.f32.mxu0 0.0
    %1400 = vmatmul.mubr.f32.gmra.mrb[0].mxu0 %v893
    %v1401 = vpop.f32.mrb[0].mxu0
    %v1402 = vadd.f32 0.0, %v1401
    %v1403 = vpop.f32.mrb[0].mxu0
    %v1404 = vadd.f32 0.0, %v1403
    %1405 = vmatprep.mubr.f32.mxu0 0.0
    %1406 = vmatmul.mubr.f32.gmra.mrb[0].mxu0 %v894
    %v1407 = vpop.f32.mrb[0].mxu0
    %v1408 = vadd.f32 0.0, %v1407
    %v1409 = vpop.f32.mrb[0].mxu0
    %v1410 = vadd.f32 0.0, %v1409
    %1411 = vmatprep.mubr.f32.mxu0 0.0
    %1412 = vmatmul.mubr.f32.gmra.mrb[0].mxu0 %v895
    %v1413 = vpop.f32.mrb[0].mxu0
    %v1414 = vadd.f32 0.0, %v1413
    %v1415 = vpop.f32.mrb[0].mxu0
    %v1416 = vadd.f32 0.0, %v1415
    %1417 = vmatprep.mubr.f32.mxu0 0.0
    %1418 = vmatmul.mubr.f32.gmra.mrb[0].mxu0 %v896
    %v1419 = vpop.f32.mrb[0].mxu0
    %v1420 = vadd.f32 0.0, %v1419
    %v1421 = vpop.f32.mrb[0].mxu0
    %v1422 = vadd.f32 0.0, %v1421
    %1423 = vmatprep.mubr.f32.mxu0 0.0
    %1424 = vmatmul.mubr.f32.gmra.mrb[0].mxu0 %v897
    %v1425 = vpop.f32.mrb[0].mxu0
    %v1426 = vadd.f32 0.0, %v1425
    %v1427 = vpop.f32.mrb[0].mxu0
    %v1428 = vadd.f32 0.0, %v1427
    %1429 = vmatprep.mubr.f32.mxu0 0.0
    %1430 = vmatmul.mubr.f32.gmra.mrb[0].mxu0 %v898
    %v1431 = vpop.f32.mrb[0].mxu0
    %v1432 = vadd.f32 0.0, %v1431
    %v1433 = vpop.f32.mrb[0].mxu0
    %v1434 = vadd.f32 0.0, %v1433
    %1435 = vmatprep.mubr.f32.mxu0 0.0
    %1436 = vmatmul.mubr.f32.gmra.mrb[0].mxu0 %v899
    %v1437 = vpop.f32.mrb[0].mxu0
    %v1438 = vadd.f32 0.0, %v1437
    %v1439 = vpop.f32.mrb[0].mxu0
    %v1440 = vadd.f32 0.0, %v1439
    %1441 = vmatprep.mubr.f32.mxu0 0.0
    %1442 = vmatmul.mubr.f32.gmra.mrb[0].mxu0 %v900
    %v1443 = vpop.f32.mrb[0].mxu0
    %v1444 = vadd.f32 0.0, %v1443
    %v1445 = vpop.f32.mrb[0].mxu0
    %v1446 = vadd.f32 0.0, %v1445
    %1447 = vmatprep.mubr.f32.mxu0 0.0
    %1448 = vmatmul.mubr.f32.gmra.mrb[0].mxu0 %v901
    %v1449 = vpop.f32.mrb[0].mxu0
    %v1450 = vadd.f32 0.0, %v1449
    %v1451 = vpop.f32.mrb[0].mxu0
    %v1452 = vadd.f32 0.0, %v1451
    %1453 = vmatprep.mubr.f32.mxu0 0.0
    %1454 = vmatmul.mubr.f32.gmra.mrb[0].mxu0 %v902
    %v1455 = vpop.f32.mrb[0].mxu0
    %v1456 = vadd.f32 0.0, %v1455
    %v1457 = vpop.f32.mrb[0].mxu0
    %v1458 = vadd.f32 0.0, %v1457
    %1459 = vmatprep.mubr.f32.mxu0 0.0
    %1460 = vmatmul.mubr.f32.gmra.mrb[0].mxu0 %v903
    %v1461 = vpop.f32.mrb[0].mxu0
    %v1462 = vadd.f32 0.0, %v1461
    %v1463 = vpop.f32.mrb[0].mxu0
    %v1464 = vadd.f32 0.0, %v1463
    %1465 = vmatprep.mubr.f32.mxu0 0.0
    %1466 = vmatmul.mubr.f32.gmra.mrb[0].mxu0 %v904
    %v1467 = vpop.f32.mrb[0].mxu0
    %v1468 = vadd.f32 0.0, %v1467
    %v1469 = vpop.f32.mrb[0].mxu0
    %v1470 = vadd.f32 0.0, %v1469
    %1471 = vmatprep.mubr.f32.mxu0 0.0
    %1472 = vmatmul.mubr.f32.gmra.mrb[0].mxu0 %v905
    %v1473 = vpop.f32.mrb[0].mxu0
    %v1474 = vadd.f32 0.0, %v1473
    %v1475 = vpop.f32.mrb[0].mxu0
    %v1476 = vadd.f32 0.0, %v1475
    %1477 = vmatprep.mubr.f32.mxu0 0.0
    %1478 = vmatmul.mubr.f32.gmra.mrb[0].mxu0 %v906
    %v1479 = vpop.f32.mrb[0].mxu0
    %v1480 = vadd.f32 0.0, %v1479
    %v1481 = vpop.f32.mrb[0].mxu0
    %v1482 = vadd.f32 0.0, %v1481
    %1483 = vmatprep.mubr.f32.mxu0 0.0
    %1484 = vmatmul.mubr.f32.gmra.mrb[0].mxu0 %v907
    %v1485 = vpop.f32.mrb[0].mxu0
    %v1486 = vadd.f32 0.0, %v1485
    %v1487 = vpop.f32.mrb[0].mxu0
    %v1488 = vadd.f32 0.0, %v1487
    %1489 = vmatprep.mubr.f32.mxu0 0.0
    %1490 = vmatmul.mubr.f32.gmra.mrb[0].mxu0 %v908
    %v1491 = vpop.f32.mrb[0].mxu0
    %v1492 = vadd.f32 0.0, %v1491
    %v1493 = vpop.f32.mrb[0].mxu0
    %v1494 = vadd.f32 0.0, %v1493
    %1495 = vmatprep.mubr.f32.mxu0 0.0
    %1496 = vmatmul.mubr.f32.gmra.mrb[0].mxu0 %v909
    %v1497 = vpop.f32.mrb[0].mxu0
    %v1498 = vadd.f32 0.0, %v1497
    %v1499 = vpop.f32.mrb[0].mxu0
    %v1500 = vadd.f32 0.0, %v1499
    %1501 = vmatprep.mubr.f32.mxu0 0.0
    %1502 = vmatmul.mubr.f32.gmra.mrb[0].mxu0 %v910
    %v1503 = vpop.f32.mrb[0].mxu0
    %v1504 = vadd.f32 0.0, %v1503
    %v1505 = vpop.f32.mrb[0].mxu0
    %v1506 = vadd.f32 0.0, %v1505
    %1507 = vmatprep.mubr.f32.mxu0 0.0
    %1508 = vmatmul.mubr.f32.gmra.mrb[0].mxu0 %v911
    %v1509 = vpop.f32.mrb[0].mxu0
    %v1510 = vadd.f32 0.0, %v1509
    %v1511 = vpop.f32.mrb[0].mxu0
    %v1512 = vadd.f32 0.0, %v1511
    %1513 = vmatprep.mubr.f32.mxu0 0.0
    %1514 = vmatmul.mubr.f32.gmra.mrb[0].mxu0 %v912
    %v1515 = vpop.f32.mrb[0].mxu0
    %v1516 = vadd.f32 0.0, %v1515
    %v1517 = vpop.f32.mrb[0].mxu0
    %v1518 = vadd.f32 0.0, %v1517
    %1519 = vmatprep.mubr.f32.mxu0 0.0
    %1520 = vmatmul.mubr.f32.gmra.mrb[0].mxu0 %v913
    %v1521 = vpop.f32.mrb[0].mxu0
    %v1522 = vadd.f32 0.0, %v1521
    %v1523 = vpop.f32.mrb[0].mxu0
    %v1524 = vadd.f32 0.0, %v1523
    %1525 = vmatprep.mubr.f32.mxu0 0.0
    %1526 = vmatmul.mubr.f32.gmra.mrb[0].mxu0 %v914
    %v1527 = vpop.f32.mrb[0].mxu0
    %v1528 = vadd.f32 0.0, %v1527
    %v1529 = vpop.f32.mrb[0].mxu0
    %v1530 = vadd.f32 0.0, %v1529
    %1531 = vmatprep.mubr.f32.mxu0 0.0
    %1532 = vmatmul.mubr.f32.gmra.mrb[0].mxu0 %v915
    %v1533 = vpop.f32.mrb[0].mxu0
    %v1534 = vadd.f32 0.0, %v1533
    %v1535 = vpop.f32.mrb[0].mxu0
    %v1536 = vadd.f32 0.0, %v1535
    %1537 = vdwg.mxu0
    %v1538 = vadd.f32 %v1059, %v1348
    %v1539 = vadd.f32 %v1061, %v1350
    %v1540 = vadd.f32 %v1065, %v1354
    %v1541 = vadd.f32 %v1067, %v1356
    %v1542 = vadd.f32 %v1071, %v1360
    %v1543 = vadd.f32 %v1073, %v1362
    %v1544 = vadd.f32 %v1077, %v1366
    %v1545 = vadd.f32 %v1079, %v1368
    %v1546 = vadd.f32 %v1083, %v1372
    %v1547 = vadd.f32 %v1085, %v1374
    %v1548 = vadd.f32 %v1089, %v1378
    %v1549 = vadd.f32 %v1091, %v1380
    %v1550 = vadd.f32 %v1095, %v1384
    %v1551 = vadd.f32 %v1097, %v1386
    %v1552 = vadd.f32 %v1101, %v1390
    %v1553 = vadd.f32 %v1103, %v1392
    %v1554 = vadd.f32 %v1107, %v1396
    %v1555 = vadd.f32 %v1109, %v1398
    %v1556 = vadd.f32 %v1113, %v1402
    %v1557 = vadd.f32 %v1115, %v1404
    %v1558 = vadd.f32 %v1119, %v1408
    %v1559 = vadd.f32 %v1121, %v1410
    %v1560 = vadd.f32 %v1125, %v1414
    %v1561 = vadd.f32 %v1127, %v1416
    %v1562 = vadd.f32 %v1131, %v1420
    %v1563 = vadd.f32 %v1133, %v1422
    %v1564 = vadd.f32 %v1137, %v1426
    %v1565 = vadd.f32 %v1139, %v1428
    %v1566 = vadd.f32 %v1143, %v1432
    %v1567 = vadd.f32 %v1145, %v1434
    %v1568 = vadd.f32 %v1149, %v1438
    %v1569 = vadd.f32 %v1151, %v1440
    %v1570 = vadd.f32 %v1155, %v1444
    %v1571 = vadd.f32 %v1157, %v1446
    %v1572 = vadd.f32 %v1161, %v1450
    %v1573 = vadd.f32 %v1163, %v1452
    %v1574 = vadd.f32 %v1167, %v1456
    %v1575 = vadd.f32 %v1169, %v1458
    %v1576 = vadd.f32 %v1173, %v1462
    %v1577 = vadd.f32 %v1175, %v1464
    %v1578 = vadd.f32 %v1179, %v1468
    %v1579 = vadd.f32 %v1181, %v1470
    %v1580 = vadd.f32 %v1185, %v1474
    %v1581 = vadd.f32 %v1187, %v1476
    %v1582 = vadd.f32 %v1191, %v1480
    %v1583 = vadd.f32 %v1193, %v1482
    %v1584 = vadd.f32 %v1197, %v1486
    %v1585 = vadd.f32 %v1199, %v1488
    %v1586 = vadd.f32 %v1203, %v1492
    %v1587 = vadd.f32 %v1205, %v1494
    %v1588 = vadd.f32 %v1209, %v1498
    %v1589 = vadd.f32 %v1211, %v1500
    %v1590 = vadd.f32 %v1215, %v1504
    %v1591 = vadd.f32 %v1217, %v1506
    %v1592 = vadd.f32 %v1221, %v1510
    %v1593 = vadd.f32 %v1223, %v1512
    %v1594 = vadd.f32 %v1227, %v1516
    %v1595 = vadd.f32 %v1229, %v1518
    %v1596 = vadd.f32 %v1233, %v1522
    %v1597 = vadd.f32 %v1235, %v1524
    %v1598 = vadd.f32 %v1239, %v1528
    %v1599 = vadd.f32 %v1241, %v1530
    %v1600 = vadd.f32 %v1245, %v1534
    %v1601 = vadd.f32 %v1247, %v1536
    %vm1602 = vcmp.gt.f32.partialorder %v1538, 0.0
    %vm1603 = vcmp.gt.f32.partialorder %v1539, 0.0
    %vm1604 = vcmp.gt.f32.partialorder %v1540, 0.0
    %vm1605 = vcmp.gt.f32.partialorder %v1541, 0.0
    %vm1606 = vcmp.gt.f32.partialorder %v1542, 0.0
    %vm1607 = vcmp.gt.f32.partialorder %v1543, 0.0
    %vm1608 = vcmp.gt.f32.partialorder %v1544, 0.0
    %vm1609 = vcmp.gt.f32.partialorder %v1545, 0.0
    %vm1610 = vcmp.gt.f32.partialorder %v1546, 0.0
    %vm1611 = vcmp.gt.f32.partialorder %v1547, 0.0
    %vm1612 = vcmp.gt.f32.partialorder %v1548, 0.0
    %vm1613 = vcmp.gt.f32.partialorder %v1549, 0.0
    %vm1614 = vcmp.gt.f32.partialorder %v1550, 0.0
    %vm1615 = vcmp.gt.f32.partialorder %v1551, 0.0
    %vm1616 = vcmp.gt.f32.partialorder %v1552, 0.0
    %vm1617 = vcmp.gt.f32.partialorder %v1553, 0.0
    %vm1618 = vcmp.gt.f32.partialorder %v1554, 0.0
    %vm1619 = vcmp.gt.f32.partialorder %v1555, 0.0
    %vm1620 = vcmp.gt.f32.partialorder %v1556, 0.0
    %vm1621 = vcmp.gt.f32.partialorder %v1557, 0.0
    %vm1622 = vcmp.gt.f32.partialorder %v1558, 0.0
    %vm1623 = vcmp.gt.f32.partialorder %v1559, 0.0
    %vm1624 = vcmp.gt.f32.partialorder %v1560, 0.0
    %vm1625 = vcmp.gt.f32.partialorder %v1561, 0.0
    %vm1626 = vcmp.gt.f32.partialorder %v1562, 0.0
    %vm1627 = vcmp.gt.f32.partialorder %v1563, 0.0
    %vm1628 = vcmp.gt.f32.partialorder %v1564, 0.0
    %vm1629 = vcmp.gt.f32.partialorder %v1565, 0.0
    %vm1630 = vcmp.gt.f32.partialorder %v1566, 0.0
    %vm1631 = vcmp.gt.f32.partialorder %v1567, 0.0
    %vm1632 = vcmp.gt.f32.partialorder %v1568, 0.0
    %vm1633 = vcmp.gt.f32.partialorder %v1569, 0.0
    %vm1634 = vcmp.gt.f32.partialorder %v1570, 0.0
    %vm1635 = vcmp.gt.f32.partialorder %v1571, 0.0
    %vm1636 = vcmp.gt.f32.partialorder %v1572, 0.0
    %vm1637 = vcmp.gt.f32.partialorder %v1573, 0.0
    %vm1638 = vcmp.gt.f32.partialorder %v1574, 0.0
    %vm1639 = vcmp.gt.f32.partialorder %v1575, 0.0
    %vm1640 = vcmp.gt.f32.partialorder %v1576, 0.0
    %vm1641 = vcmp.gt.f32.partialorder %v1577, 0.0
    %vm1642 = vcmp.gt.f32.partialorder %v1578, 0.0
    %vm1643 = vcmp.gt.f32.partialorder %v1579, 0.0
    %vm1644 = vcmp.gt.f32.partialorder %v1580, 0.0
    %vm1645 = vcmp.gt.f32.partialorder %v1581, 0.0
    %vm1646 = vcmp.gt.f32.partialorder %v1582, 0.0
    %vm1647 = vcmp.gt.f32.partialorder %v1583, 0.0
    %vm1648 = vcmp.gt.f32.partialorder %v1584, 0.0
    %vm1649 = vcmp.gt.f32.partialorder %v1585, 0.0
    %vm1650 = vcmp.gt.f32.partialorder %v1586, 0.0
    %vm1651 = vcmp.gt.f32.partialorder %v1587, 0.0
    %vm1652 = vcmp.gt.f32.partialorder %v1588, 0.0
    %vm1653 = vcmp.gt.f32.partialorder %v1589, 0.0
    %vm1654 = vcmp.gt.f32.partialorder %v1590, 0.0
    %vm1655 = vcmp.gt.f32.partialorder %v1591, 0.0
    %vm1656 = vcmp.gt.f32.partialorder %v1592, 0.0
    %vm1657 = vcmp.gt.f32.partialorder %v1593, 0.0
    %vm1658 = vcmp.gt.f32.partialorder %v1594, 0.0
    %vm1659 = vcmp.gt.f32.partialorder %v1595, 0.0
    %vm1660 = vcmp.gt.f32.partialorder %v1596, 0.0
    %vm1661 = vcmp.gt.f32.partialorder %v1597, 0.0
    %vm1662 = vcmp.gt.f32.partialorder %v1598, 0.0
    %vm1663 = vcmp.gt.f32.partialorder %v1599, 0.0
    %vm1664 = vcmp.gt.f32.partialorder %v1600, 0.0
    %vm1665 = vcmp.gt.f32.partialorder %v1601, 0.0
    %v1666 = vmul.f32 %v1538, 0.01
    %v1667 = vmul.f32 %v1539, 0.01
    %v1668 = vmul.f32 %v1540, 0.01
    %v1669 = vmul.f32 %v1541, 0.01
    %v1670 = vmul.f32 %v1542, 0.01
    %v1671 = vmul.f32 %v1543, 0.01
    %v1672 = vmul.f32 %v1544, 0.01
    %v1673 = vmul.f32 %v1545, 0.01
    %v1674 = vmul.f32 %v1546, 0.01
    %v1675 = vmul.f32 %v1547, 0.01
    %v1676 = vmul.f32 %v1548, 0.01
    %v1677 = vmul.f32 %v1549, 0.01
    %v1678 = vmul.f32 %v1550, 0.01
    %v1679 = vmul.f32 %v1551, 0.01
    %v1680 = vmul.f32 %v1552, 0.01
    %v1681 = vmul.f32 %v1553, 0.01
    %v1682 = vmul.f32 %v1554, 0.01
    %v1683 = vmul.f32 %v1555, 0.01
    %v1684 = vmul.f32 %v1556, 0.01
    %v1685 = vmul.f32 %v1557, 0.01
    %v1686 = vmul.f32 %v1558, 0.01
    %v1687 = vmul.f32 %v1559, 0.01
    %v1688 = vmul.f32 %v1560, 0.01
    %v1689 = vmul.f32 %v1561, 0.01
    %v1690 = vmul.f32 %v1562, 0.01
    %v1691 = vmul.f32 %v1563, 0.01
    %v1692 = vmul.f32 %v1564, 0.01
    %v1693 = vmul.f32 %v1565, 0.01
    %v1694 = vmul.f32 %v1566, 0.01
    %v1695 = vmul.f32 %v1567, 0.01
    %v1696 = vmul.f32 %v1568, 0.01
    %v1697 = vmul.f32 %v1569, 0.01
    %v1698 = vmul.f32 %v1570, 0.01
    %v1699 = vmul.f32 %v1571, 0.01
    %v1700 = vmul.f32 %v1572, 0.01
    %v1701 = vmul.f32 %v1573, 0.01
    %v1702 = vmul.f32 %v1574, 0.01
    %v1703 = vmul.f32 %v1575, 0.01
    %v1704 = vmul.f32 %v1576, 0.01
    %v1705 = vmul.f32 %v1577, 0.01
    %v1706 = vmul.f32 %v1578, 0.01
    %v1707 = vmul.f32 %v1579, 0.01
    %v1708 = vmul.f32 %v1580, 0.01
    %v1709 = vmul.f32 %v1581, 0.01
    %v1710 = vmul.f32 %v1582, 0.01
    %v1711 = vmul.f32 %v1583, 0.01
    %v1712 = vmul.f32 %v1584, 0.01
    %v1713 = vmul.f32 %v1585, 0.01
    %v1714 = vmul.f32 %v1586, 0.01
    %v1715 = vmul.f32 %v1587, 0.01
    %v1716 = vmul.f32 %v1588, 0.01
    %v1717 = vmul.f32 %v1589, 0.01
    %v1718 = vmul.f32 %v1590, 0.01
    %v1719 = vmul.f32 %v1591, 0.01
    %v1720 = vmul.f32 %v1592, 0.01
    %v1721 = vmul.f32 %v1593, 0.01
    %v1722 = vmul.f32 %v1594, 0.01
    %v1723 = vmul.f32 %v1595, 0.01
    %v1724 = vmul.f32 %v1596, 0.01
    %v1725 = vmul.f32 %v1597, 0.01
    %v1726 = vmul.f32 %v1598, 0.01
    %v1727 = vmul.f32 %v1599, 0.01
    %v1728 = vmul.f32 %v1600, 0.01
    %v1729 = vmul.f32 %v1601, 0.01
    %v1730 = vsel %vm1602, %v1538, %v1666
    %v1731 = vsel %vm1603, %v1539, %v1667
    %v1732 = vsel %vm1604, %v1540, %v1668
    %v1733 = vsel %vm1605, %v1541, %v1669
    %v1734 = vsel %vm1606, %v1542, %v1670
    %v1735 = vsel %vm1607, %v1543, %v1671
    %v1736 = vsel %vm1608, %v1544, %v1672
    %v1737 = vsel %vm1609, %v1545, %v1673
    %v1738 = vsel %vm1610, %v1546, %v1674
    %v1739 = vsel %vm1611, %v1547, %v1675
    %v1740 = vsel %vm1612, %v1548, %v1676
    %v1741 = vsel %vm1613, %v1549, %v1677
    %v1742 = vsel %vm1614, %v1550, %v1678
    %v1743 = vsel %vm1615, %v1551, %v1679
    %v1744 = vsel %vm1616, %v1552, %v1680
    %v1745 = vsel %vm1617, %v1553, %v1681
    %v1746 = vsel %vm1618, %v1554, %v1682
    %v1747 = vsel %vm1619, %v1555, %v1683
    %v1748 = vsel %vm1620, %v1556, %v1684
    %v1749 = vsel %vm1621, %v1557, %v1685
    %v1750 = vsel %vm1622, %v1558, %v1686
    %v1751 = vsel %vm1623, %v1559, %v1687
    %v1752 = vsel %vm1624, %v1560, %v1688
    %v1753 = vsel %vm1625, %v1561, %v1689
    %v1754 = vsel %vm1626, %v1562, %v1690
    %v1755 = vsel %vm1627, %v1563, %v1691
    %v1756 = vsel %vm1628, %v1564, %v1692
    %v1757 = vsel %vm1629, %v1565, %v1693
    %v1758 = vsel %vm1630, %v1566, %v1694
    %v1759 = vsel %vm1631, %v1567, %v1695
    %v1760 = vsel %vm1632, %v1568, %v1696
    %v1761 = vsel %vm1633, %v1569, %v1697
    %v1762 = vsel %vm1634, %v1570, %v1698
    %v1763 = vsel %vm1635, %v1571, %v1699
    %v1764 = vsel %vm1636, %v1572, %v1700
    %v1765 = vsel %vm1637, %v1573, %v1701
    %v1766 = vsel %vm1638, %v1574, %v1702
    %v1767 = vsel %vm1639, %v1575, %v1703
    %v1768 = vsel %vm1640, %v1576, %v1704
    %v1769 = vsel %vm1641, %v1577, %v1705
    %v1770 = vsel %vm1642, %v1578, %v1706
    %v1771 = vsel %vm1643, %v1579, %v1707
    %v1772 = vsel %vm1644, %v1580, %v1708
    %v1773 = vsel %vm1645, %v1581, %v1709
    %v1774 = vsel %vm1646, %v1582, %v1710
    %v1775 = vsel %vm1647, %v1583, %v1711
    %v1776 = vsel %vm1648, %v1584, %v1712
    %v1777 = vsel %vm1649, %v1585, %v1713
    %v1778 = vsel %vm1650, %v1586, %v1714
    %v1779 = vsel %vm1651, %v1587, %v1715
    %v1780 = vsel %vm1652, %v1588, %v1716
    %v1781 = vsel %vm1653, %v1589, %v1717
    %v1782 = vsel %vm1654, %v1590, %v1718
    %v1783 = vsel %vm1655, %v1591, %v1719
    %v1784 = vsel %vm1656, %v1592, %v1720
    %v1785 = vsel %vm1657, %v1593, %v1721
    %v1786 = vsel %vm1658, %v1594, %v1722
    %v1787 = vsel %vm1659, %v1595, %v1723
    %v1788 = vsel %vm1660, %v1596, %v1724
    %v1789 = vsel %vm1661, %v1597, %v1725
    %v1790 = vsel %vm1662, %v1598, %v1726
    %v1791 = vsel %vm1663, %v1599, %v1727
    %v1792 = vsel %vm1664, %v1600, %v1728
    %v1793 = vsel %vm1665, %v1601, %v1729
    %1794 = vst [vmem:[%s10] sm:$0xff] %v1730
    %1795 = vst [vmem:[%s10 + $0x8] sm:$0xff] %v1731
    %1796 = vst [vmem:[%s10 + $0x10] sm:$0xff] %v1732
    %1797 = vst [vmem:[%s10 + $0x18] sm:$0xff] %v1733
    %1798 = vst [vmem:[%s10 + $0x20] sm:$0xff] %v1734
    %1799 = vst [vmem:[%s10 + $0x28] sm:$0xff] %v1735
    %1800 = vst [vmem:[%s10 + $0x30] sm:$0xff] %v1736
    %1801 = vst [vmem:[%s10 + $0x38] sm:$0xff] %v1737
    %1802 = vst [vmem:[%s10 + $0x40] sm:$0xff] %v1738
    %1803 = vst [vmem:[%s10 + $0x48] sm:$0xff] %v1739
    %1804 = vst [vmem:[%s10 + $0x50] sm:$0xff] %v1740
    %1805 = vst [vmem:[%s10 + $0x58] sm:$0xff] %v1741
    %1806 = vst [vmem:[%s10 + $0x60] sm:$0xff] %v1742
    %1807 = vst [vmem:[%s10 + $0x68] sm:$0xff] %v1743
    %1808 = vst [vmem:[%s10 + $0x70] sm:$0xff] %v1744
    %1809 = vst [vmem:[%s10 + $0x78] sm:$0xff] %v1745
    %1810 = vst [vmem:[%s10 + $0x80] sm:$0xff] %v1746
    %1811 = vst [vmem:[%s10 + $0x88] sm:$0xff] %v1747
    %1812 = vst [vmem:[%s10 + $0x90] sm:$0xff] %v1748
    %1813 = vst [vmem:[%s10 + $0x98] sm:$0xff] %v1749
    %1814 = vst [vmem:[%s10 + $0xa0] sm:$0xff] %v1750
    %1815 = vst [vmem:[%s10 + $0xa8] sm:$0xff] %v1751
    %1816 = vst [vmem:[%s10 + $0xb0] sm:$0xff] %v1752
    %1817 = vst [vmem:[%s10 + $0xb8] sm:$0xff] %v1753
    %1818 = vst [vmem:[%s10 + $0xc0] sm:$0xff] %v1754
    %1819 = vst [vmem:[%s10 + $0xc8] sm:$0xff] %v1755
    %1820 = vst [vmem:[%s10 + $0xd0] sm:$0xff] %v1756
    %1821 = vst [vmem:[%s10 + $0xd8] sm:$0xff] %v1757
    %1822 = vst [vmem:[%s10 + $0xe0] sm:$0xff] %v1758
    %1823 = vst [vmem:[%s10 + $0xe8] sm:$0xff] %v1759
    %1824 = vst [vmem:[%s10 + $0xf0] sm:$0xff] %v1760
    %1825 = vst [vmem:[%s10 + $0xf8] sm:$0xff] %v1761
    %1826 = vst [vmem:[%s10 + $0x100] sm:$0xff] %v1762
    %1827 = vst [vmem:[%s10 + $0x108] sm:$0xff] %v1763
    %1828 = vst [vmem:[%s10 + $0x110] sm:$0xff] %v1764
    %1829 = vst [vmem:[%s10 + $0x118] sm:$0xff] %v1765
    %1830 = vst [vmem:[%s10 + $0x120] sm:$0xff] %v1766
    %1831 = vst [vmem:[%s10 + $0x128] sm:$0xff] %v1767
    %1832 = vst [vmem:[%s10 + $0x130] sm:$0xff] %v1768
    %1833 = vst [vmem:[%s10 + $0x138] sm:$0xff] %v1769
    %1834 = vst [vmem:[%s10 + $0x140] sm:$0xff] %v1770
    %1835 = vst [vmem:[%s10 + $0x148] sm:$0xff] %v1771
    %1836 = vst [vmem:[%s10 + $0x150] sm:$0xff] %v1772
    %1837 = vst [vmem:[%s10 + $0x158] sm:$0xff] %v1773
    %1838 = vst [vmem:[%s10 + $0x160] sm:$0xff] %v1774
    %1839 = vst [vmem:[%s10 + $0x168] sm:$0xff] %v1775
    %1840 = vst [vmem:[%s10 + $0x170] sm:$0xff] %v1776
    %1841 = vst [vmem:[%s10 + $0x178] sm:$0xff] %v1777
    %1842 = vst [vmem:[%s10 + $0x180] sm:$0xff] %v1778
    %1843 = vst [vmem:[%s10 + $0x188] sm:$0xff] %v1779
    %1844 = vst [vmem:[%s10 + $0x190] sm:$0xff] %v1780
    %1845 = vst [vmem:[%s10 + $0x198] sm:$0xff] %v1781
    %1846 = vst [vmem:[%s10 + $0x1a0] sm:$0xff] %v1782
    %1847 = vst [vmem:[%s10 + $0x1a8] sm:$0xff] %v1783
    %1848 = vst [vmem:[%s10 + $0x1b0] sm:$0xff] %v1784
    %1849 = vst [vmem:[%s10 + $0x1b8] sm:$0xff] %v1785
    %1850 = vst [vmem:[%s10 + $0x1c0] sm:$0xff] %v1786
    %1851 = vst [vmem:[%s10 + $0x1c8] sm:$0xff] %v1787
    %1852 = vst [vmem:[%s10 + $0x1d0] sm:$0xff] %v1788
    %1853 = vst [vmem:[%s10 + $0x1d8] sm:$0xff] %v1789
    %1854 = vst [vmem:[%s10 + $0x1e0] sm:$0xff] %v1790
    %1855 = vst [vmem:[%s10 + $0x1e8] sm:$0xff] %v1791
    %1856 = vst [vmem:[%s10 + $0x1f0] sm:$0xff] %v1792
    %1857 = vst [vmem:[%s10 + $0x1f8] sm:$0xff] %v1793
  $region49: #{regc_forward.2} parent=0 // pred_fallthru
    _
  // Predicated region
  $region50: #{regc_forward.2} parent=0 // pred_check
    _
  $region51: #{regc_forward.2} parent=0 // pred_check_branch
    %1859 = sbr.rel (0) target = $region53
  $region52: #{regc_forward.2} parent=0 // pred_region
    _
  $region53: #{regc_forward.2} parent=0 // pred_fallthru
    _
  // Predicated region
  $region54: #{regc_forward.2} parent=0 // pred_check
    _
  $region55: #{regc_forward.2} parent=0 // pred_check_branch
    %1861 = sbr.rel (0) target = $region57
  $region56: #{regc_forward.2} parent=0 // pred_region
    _
  $region57: #{regc_forward.2} parent=0 // pred_fallthru
    _

// kernel: regc_forward.3
$region0: #{regc_forward.3}
  #allocation0 [shape = 'u32[]', space=smem, size = 0x4, offset = 0x4, fixed_abs, tag = 'smem constant byte address 0x4 - core index']
  #allocation1 [shape = 'u32[144,128]{1,0:T(1,128)}', space=vmem, size = 0x12000, scoped, tag = 'internal scratch']
  #allocation2 [shape = 'f32[256,256]{1,0:T(8,128)}', space=vmem, size = 0x40000, scoped, tag = 'scratch operand']
  %s0 = inlined_call_operand.vmem [shape: bf16[256,256], index: 0, kind: input, shape index: {}]
  %s1 = inlined_call_operand.vmem [shape: f32[256,256], index: 1, kind: input, shape index: {}, may-alias: {1,2}]
  %s2 = inlined_call_operand.vmem [shape: f32[256,256], index: 2, kind: input, shape index: {}, may-alias: {1,2}]
  %s3 = inlined_call_operand.vmem [shape: f32[1,256], index: 3, kind: input, shape index: {}]
  %s4 = inlined_call_operand.vmem [shape: f32[1,256], index: 4, kind: input, shape index: {}]
  %s5 = inlined_call_operand.vmem [shape: f32[1,256], index: 5, kind: input, shape index: {}]
  %s6 = inlined_call_operand.vmem [shape: f32[1,256], index: 6, kind: input, shape index: {}]
  %s7 = inlined_call_operand.vmem [shape: f32[256,128], index: 7, kind: input, shape index: {}]
  %s8 = inlined_call_operand.vmem [shape: f32[256,128], index: 8, kind: input, shape index: {}]
  %s9 = inlined_call_operand.vmem [shape: f32[1,128], index: 9, kind: input, shape index: {}]
  %s10 = inlined_call_operand.vmem [shape: f32[256,128], index: 10, kind: output, shape index: {}]
  %s11 = sld [smem:[#allocation0]]
  $region58: #{regc_forward.3} parent=0
    _
  %s13 = ssub.s32 1, %s11
  %s14 = scalar_select 0, %s13, %s11
  // Predicated region
  $region2: #{regc_forward.3} parent=0 // pred_check
    _
  $region3: #{regc_forward.3} parent=0 // pred_check_branch
    %16 = sbr.rel (0) target = $region5
  $region4: #{regc_forward.3} parent=0 // pred_region
    _
  $region5: #{regc_forward.3} parent=0 // pred_fallthru
    _
  // Predicated region
  $region6: #{regc_forward.3} parent=0 // pred_check
    _
  $region7: #{regc_forward.3} parent=0 // pred_check_branch
    %18 = sbr.rel (0) target = $region9
  $region8: #{regc_forward.3} parent=0 // pred_region
    _
  $region9: #{regc_forward.3} parent=0 // pred_fallthru
    _
  // Predicated region
  $region10: #{regc_forward.3} parent=0 // pred_check
    _
  $region11: #{regc_forward.3} parent=0 // pred_check_branch
    %20 = sbr.rel (0) target = $region13
  $region12: #{regc_forward.3} parent=0 // pred_region
    _
  $region13: #{regc_forward.3} parent=0 // pred_fallthru
    _
  // Predicated region
  $region14: #{regc_forward.3} parent=0 // pred_check
    _
  $region15: #{regc_forward.3} parent=0 // pred_check_branch
    %22 = sbr.rel (0) target = $region17
  $region16: #{regc_forward.3} parent=0 // pred_region
    _
  $region17: #{regc_forward.3} parent=0 // pred_fallthru
    _
  // Predicated region
  $region18: #{regc_forward.3} parent=0 // pred_check
    _
  $region19: #{regc_forward.3} parent=0 // pred_check_branch
    %24 = sbr.rel (0) target = $region21
  $region20: #{regc_forward.3} parent=0 // pred_region
    _
  $region21: #{regc_forward.3} parent=0 // pred_fallthru
    _
  // Predicated region
  $region22: #{regc_forward.3} parent=0 // pred_check
    _
  $region23: #{regc_forward.3} parent=0 // pred_check_branch
    %26 = sbr.rel (0) target = $region25
  $region24: #{regc_forward.3} parent=0 // pred_region
    _
  $region25: #{regc_forward.3} parent=0 // pred_fallthru
    _
  // Predicated region
  $region26: #{regc_forward.3} parent=0 // pred_check
    _
  $region27: #{regc_forward.3} parent=0 // pred_check_branch
    %28 = sbr.rel (0) target = $region29
  $region28: #{regc_forward.3} parent=0 // pred_region
    _
  $region29: #{regc_forward.3} parent=0 // pred_fallthru
    _
  // Predicated region
  $region30: #{regc_forward.3} parent=0 // pred_check
    _
  $region31: #{regc_forward.3} parent=0 // pred_check_branch
    %30 = sbr.rel (0) target = $region33
  $region32: #{regc_forward.3} parent=0 // pred_region
    _
  $region33: #{regc_forward.3} parent=0 // pred_fallthru
    _
  // Predicated region
  $region34: #{regc_forward.3} parent=0 // pred_check
    _
  $region35: #{regc_forward.3} parent=0 // pred_check_branch
    %32 = sbr.rel (0) target = $region37
  $region36: #{regc_forward.3} parent=0 // pred_region
    _
  $region37: #{regc_forward.3} parent=0 // pred_fallthru
    _
  // Predicated region
  $region38: #{regc_forward.3} parent=0 // pred_check
    _
  $region39: #{regc_forward.3} parent=0 // pred_check_branch
    %34 = sbr.rel (0) target = $region41
  $region40: #{regc_forward.3} parent=0 // pred_region
    _
  $region41: #{regc_forward.3} parent=0 // pred_fallthru
    _
  %p35 = scmp.eq.s32.totalorder 0, 0
  // Predicated region
  $region42: #{regc_forward.3} parent=0 // pred_check
    %p36 = pneg %p35
  $region43: #{regc_forward.3} parent=0 // pred_check_branch
    %38 = sbr.rel (%p36) target = $region45
  $region44: #{regc_forward.3} parent=0 // pred_region
    %39 = vst [vmem:[#allocation2] sm:$0xff] 0.0
    %40 = vst [vmem:[#allocation2 + $0x8] sm:$0xff] 0.0
    %41 = vst [vmem:[#allocation2 + $0x10] sm:$0xff] 0.0
    %42 = vst [vmem:[#allocation2 + $0x18] sm:$0xff] 0.0
    %43 = vst [vmem:[#allocation2 + $0x20] sm:$0xff] 0.0
    %44 = vst [vmem:[#allocation2 + $0x28] sm:$0xff] 0.0
    %45 = vst [vmem:[#allocation2 + $0x30] sm:$0xff] 0.0
    %46 = vst [vmem:[#allocation2 + $0x38] sm:$0xff] 0.0
    %47 = vst [vmem:[#allocation2 + $0x40] sm:$0xff] 0.0
    %48 = vst [vmem:[#allocation2 + $0x48] sm:$0xff] 0.0
    %49 = vst [vmem:[#allocation2 + $0x50] sm:$0xff] 0.0
    %50 = vst [vmem:[#allocation2 + $0x58] sm:$0xff] 0.0
    %51 = vst [vmem:[#allocation2 + $0x60] sm:$0xff] 0.0
    %52 = vst [vmem:[#allocation2 + $0x68] sm:$0xff] 0.0
    %53 = vst [vmem:[#allocation2 + $0x70] sm:$0xff] 0.0
    %54 = vst [vmem:[#allocation2 + $0x78] sm:$0xff] 0.0
    %55 = vst [vmem:[#allocation2 + $0x80] sm:$0xff] 0.0
    %56 = vst [vmem:[#allocation2 + $0x88] sm:$0xff] 0.0
    %57 = vst [vmem:[#allocation2 + $0x90] sm:$0xff] 0.0
    %58 = vst [vmem:[#allocation2 + $0x98] sm:$0xff] 0.0
    %59 = vst [vmem:[#allocation2 + $0xa0] sm:$0xff] 0.0
    %60 = vst [vmem:[#allocation2 + $0xa8] sm:$0xff] 0.0
    %61 = vst [vmem:[#allocation2 + $0xb0] sm:$0xff] 0.0
    %62 = vst [vmem:[#allocation2 + $0xb8] sm:$0xff] 0.0
    %63 = vst [vmem:[#allocation2 + $0xc0] sm:$0xff] 0.0
    %64 = vst [vmem:[#allocation2 + $0xc8] sm:$0xff] 0.0
    %65 = vst [vmem:[#allocation2 + $0xd0] sm:$0xff] 0.0
    %66 = vst [vmem:[#allocation2 + $0xd8] sm:$0xff] 0.0
    %67 = vst [vmem:[#allocation2 + $0xe0] sm:$0xff] 0.0
    %68 = vst [vmem:[#allocation2 + $0xe8] sm:$0xff] 0.0
    %69 = vst [vmem:[#allocation2 + $0xf0] sm:$0xff] 0.0
    %70 = vst [vmem:[#allocation2 + $0xf8] sm:$0xff] 0.0
    %71 = vst [vmem:[#allocation2 + $0x100] sm:$0xff] 0.0
    %72 = vst [vmem:[#allocation2 + $0x108] sm:$0xff] 0.0
    %73 = vst [vmem:[#allocation2 + $0x110] sm:$0xff] 0.0
    %74 = vst [vmem:[#allocation2 + $0x118] sm:$0xff] 0.0
    %75 = vst [vmem:[#allocation2 + $0x120] sm:$0xff] 0.0
    %76 = vst [vmem:[#allocation2 + $0x128] sm:$0xff] 0.0
    %77 = vst [vmem:[#allocation2 + $0x130] sm:$0xff] 0.0
    %78 = vst [vmem:[#allocation2 + $0x138] sm:$0xff] 0.0
    %79 = vst [vmem:[#allocation2 + $0x140] sm:$0xff] 0.0
    %80 = vst [vmem:[#allocation2 + $0x148] sm:$0xff] 0.0
    %81 = vst [vmem:[#allocation2 + $0x150] sm:$0xff] 0.0
    %82 = vst [vmem:[#allocation2 + $0x158] sm:$0xff] 0.0
    %83 = vst [vmem:[#allocation2 + $0x160] sm:$0xff] 0.0
    %84 = vst [vmem:[#allocation2 + $0x168] sm:$0xff] 0.0
    %85 = vst [vmem:[#allocation2 + $0x170] sm:$0xff] 0.0
    %86 = vst [vmem:[#allocation2 + $0x178] sm:$0xff] 0.0
    %87 = vst [vmem:[#allocation2 + $0x180] sm:$0xff] 0.0
    %88 = vst [vmem:[#allocation2 + $0x188] sm:$0xff] 0.0
    %89 = vst [vmem:[#allocation2 + $0x190] sm:$0xff] 0.0
    %90 = vst [vmem:[#allocation2 + $0x198] sm:$0xff] 0.0
    %91 = vst [vmem:[#allocation2 + $0x1a0] sm:$0xff] 0.0
    %92 = vst [vmem:[#allocation2 + $0x1a8] sm:$0xff] 0.0
    %93 = vst [vmem:[#allocation2 + $0x1b0] sm:$0xff] 0.0
    %94 = vst [vmem:[#allocation2 + $0x1b8] sm:$0xff] 0.0
    %95 = vst [vmem:[#allocation2 + $0x1c0] sm:$0xff] 0.0
    %96 = vst [vmem:[#allocation2 + $0x1c8] sm:$0xff] 0.0
    %97 = vst [vmem:[#allocation2 + $0x1d0] sm:$0xff] 0.0
    %98 = vst [vmem:[#allocation2 + $0x1d8] sm:$0xff] 0.0
    %99 = vst [vmem:[#allocation2 + $0x1e0] sm:$0xff] 0.0
    %100 = vst [vmem:[#allocation2 + $0x1e8] sm:$0xff] 0.0
    %101 = vst [vmem:[#allocation2 + $0x1f0] sm:$0xff] 0.0
    %102 = vst [vmem:[#allocation2 + $0x1f8] sm:$0xff] 0.0
  $region45: #{regc_forward.3} parent=0 // pred_fallthru
    _
  %v103 = vld [vmem:[%s1] sm:$0xff]
  %v104 = vld [vmem:[%s1 + $0x8] sm:$0xff]
  %v105 = vld [vmem:[%s1 + $0x10] sm:$0xff]
  %v106 = vld [vmem:[%s1 + $0x18] sm:$0xff]
  %v107 = vld [vmem:[%s1 + $0x20] sm:$0xff]
  %v108 = vld [vmem:[%s1 + $0x28] sm:$0xff]
  %v109 = vld [vmem:[%s1 + $0x30] sm:$0xff]
  %v110 = vld [vmem:[%s1 + $0x38] sm:$0xff]
  %v111 = vld [vmem:[%s1 + $0x40] sm:$0xff]
  %v112 = vld [vmem:[%s1 + $0x48] sm:$0xff]
  %v113 = vld [vmem:[%s1 + $0x50] sm:$0xff]
  %v114 = vld [vmem:[%s1 + $0x58] sm:$0xff]
  %v115 = vld [vmem:[%s1 + $0x60] sm:$0xff]
  %v116 = vld [vmem:[%s1 + $0x68] sm:$0xff]
  %v117 = vld [vmem:[%s1 + $0x70] sm:$0xff]
  %v118 = vld [vmem:[%s1 + $0x78] sm:$0xff]
  %v119 = vld [vmem:[%s1 + $0x80] sm:$0xff]
  %v120 = vld [vmem:[%s1 + $0x88] sm:$0xff]
  %v121 = vld [vmem:[%s1 + $0x90] sm:$0xff]
  %v122 = vld [vmem:[%s1 + $0x98] sm:$0xff]
  %v123 = vld [vmem:[%s1 + $0xa0] sm:$0xff]
  %v124 = vld [vmem:[%s1 + $0xa8] sm:$0xff]
  %v125 = vld [vmem:[%s1 + $0xb0] sm:$0xff]
  %v126 = vld [vmem:[%s1 + $0xb8] sm:$0xff]
  %v127 = vld [vmem:[%s1 + $0xc0] sm:$0xff]
  %v128 = vld [vmem:[%s1 + $0xc8] sm:$0xff]
  %v129 = vld [vmem:[%s1 + $0xd0] sm:$0xff]
  %v130 = vld [vmem:[%s1 + $0xd8] sm:$0xff]
  %v131 = vld [vmem:[%s1 + $0xe0] sm:$0xff]
  %v132 = vld [vmem:[%s1 + $0xe8] sm:$0xff]
  %v133 = vld [vmem:[%s1 + $0xf0] sm:$0xff]
  %v134 = vld [vmem:[%s1 + $0xf8] sm:$0xff]
  %v135 = vld [vmem:[%s1 + $0x100] sm:$0xff]
  %v136 = vld [vmem:[%s1 + $0x108] sm:$0xff]
  %v137 = vld [vmem:[%s1 + $0x110] sm:$0xff]
  %v138 = vld [vmem:[%s1 + $0x118] sm:$0xff]
  %v139 = vld [vmem:[%s1 + $0x120] sm:$0xff]
  %v140 = vld [vmem:[%s1 + $0x128] sm:$0xff]
  %v141 = vld [vmem:[%s1 + $0x130] sm:$0xff]
  %v142 = vld [vmem:[%s1 + $0x138] sm:$0xff]
  %v143 = vld [vmem:[%s1 + $0x140] sm:$0xff]
  %v144 = vld [vmem:[%s1 + $0x148] sm:$0xff]
  %v145 = vld [vmem:[%s1 + $0x150] sm:$0xff]
  %v146 = vld [vmem:[%s1 + $0x158] sm:$0xff]
  %v147 = vld [vmem:[%s1 + $0x160] sm:$0xff]
  %v148 = vld [vmem:[%s1 + $0x168] sm:$0xff]
  %v149 = vld [vmem:[%s1 + $0x170] sm:$0xff]
  %v150 = vld [vmem:[%s1 + $0x178] sm:$0xff]
  %v151 = vld [vmem:[%s1 + $0x180] sm:$0xff]
  %v152 = vld [vmem:[%s1 + $0x188] sm:$0xff]
  %v153 = vld [vmem:[%s1 + $0x190] sm:$0xff]
  %v154 = vld [vmem:[%s1 + $0x198] sm:$0xff]
  %v155 = vld [vmem:[%s1 + $0x1a0] sm:$0xff]
  %v156 = vld [vmem:[%s1 + $0x1a8] sm:$0xff]
  %v157 = vld [vmem:[%s1 + $0x1b0] sm:$0xff]
  %v158 = vld [vmem:[%s1 + $0x1b8] sm:$0xff]
  %v159 = vld [vmem:[%s1 + $0x1c0] sm:$0xff]
  %v160 = vld [vmem:[%s1 + $0x1c8] sm:$0xff]
  %v161 = vld [vmem:[%s1 + $0x1d0] sm:$0xff]
  %v162 = vld [vmem:[%s1 + $0x1d8] sm:$0xff]
  %v163 = vld [vmem:[%s1 + $0x1e0] sm:$0xff]
  %v164 = vld [vmem:[%s1 + $0x1e8] sm:$0xff]
  %v165 = vld [vmem:[%s1 + $0x1f0] sm:$0xff]
  %v166 = vld [vmem:[%s1 + $0x1f8] sm:$0xff]
  %v167 = vld [vmem:[%s3] sm:$0x3]
  %v169 = vlaneseq
  %v170 = vshrl.u32 %v169, 7
  %v171 = vsub.s32 0, %v170
  %v172 = vrot.slane %v167, %v171
  %v173 = vlaneseq
  %v174 = vshrl.u32 %v173, 7
  %v175 = vsub.s32 1, %v174
  %v176 = vrot.slane %v167, %v175
  %v179 = vsub.f32 %v103, %v172
  %v180 = vsub.f32 %v104, %v176
  %v181 = vsub.f32 %v105, %v172
  %v182 = vsub.f32 %v106, %v176
  %v183 = vsub.f32 %v107, %v172
  %v184 = vsub.f32 %v108, %v176
  %v185 = vsub.f32 %v109, %v172
  %v186 = vsub.f32 %v110, %v176
  %v187 = vsub.f32 %v111, %v172
  %v188 = vsub.f32 %v112, %v176
  %v189 = vsub.f32 %v113, %v172
  %v190 = vsub.f32 %v114, %v176
  %v191 = vsub.f32 %v115, %v172
  %v192 = vsub.f32 %v116, %v176
  %v193 = vsub.f32 %v117, %v172
  %v194 = vsub.f32 %v118, %v176
  %v195 = vsub.f32 %v119, %v172
  %v196 = vsub.f32 %v120, %v176
  %v197 = vsub.f32 %v121, %v172
  %v198 = vsub.f32 %v122, %v176
  %v199 = vsub.f32 %v123, %v172
  %v200 = vsub.f32 %v124, %v176
  %v201 = vsub.f32 %v125, %v172
  %v202 = vsub.f32 %v126, %v176
  %v203 = vsub.f32 %v127, %v172
  %v204 = vsub.f32 %v128, %v176
  %v205 = vsub.f32 %v129, %v172
  %v206 = vsub.f32 %v130, %v176
  %v207 = vsub.f32 %v131, %v172
  %v208 = vsub.f32 %v132, %v176
  %v209 = vsub.f32 %v133, %v172
  %v210 = vsub.f32 %v134, %v176
  %v211 = vsub.f32 %v135, %v172
  %v212 = vsub.f32 %v136, %v176
  %v213 = vsub.f32 %v137, %v172
  %v214 = vsub.f32 %v138, %v176
  %v215 = vsub.f32 %v139, %v172
  %v216 = vsub.f32 %v140, %v176
  %v217 = vsub.f32 %v141, %v172
  %v218 = vsub.f32 %v142, %v176
  %v219 = vsub.f32 %v143, %v172
  %v220 = vsub.f32 %v144, %v176
  %v221 = vsub.f32 %v145, %v172
  %v222 = vsub.f32 %v146, %v176
  %v223 = vsub.f32 %v147, %v172
  %v224 = vsub.f32 %v148, %v176
  %v225 = vsub.f32 %v149, %v172
  %v226 = vsub.f32 %v150, %v176
  %v227 = vsub.f32 %v151, %v172
  %v228 = vsub.f32 %v152, %v176
  %v229 = vsub.f32 %v153, %v172
  %v230 = vsub.f32 %v154, %v176
  %v231 = vsub.f32 %v155, %v172
  %v232 = vsub.f32 %v156, %v176
  %v233 = vsub.f32 %v157, %v172
  %v234 = vsub.f32 %v158, %v176
  %v235 = vsub.f32 %v159, %v172
  %v236 = vsub.f32 %v160, %v176
  %v237 = vsub.f32 %v161, %v172
  %v238 = vsub.f32 %v162, %v176
  %v239 = vsub.f32 %v163, %v172
  %v240 = vsub.f32 %v164, %v176
  %v241 = vsub.f32 %v165, %v172
  %v242 = vsub.f32 %v166, %v176
  %v243 = vld [vmem:[%s4] sm:$0x3]
  %v245 = vlaneseq
  %v246 = vshrl.u32 %v245, 7
  %v247 = vsub.s32 0, %v246
  %v248 = vrot.slane %v243, %v247
  %v249 = vlaneseq
  %v250 = vshrl.u32 %v249, 7
  %v251 = vsub.s32 1, %v250
  %v252 = vrot.slane %v243, %v251
  %v255 = vmul.f32 %v179, %v248
  %v256 = vmul.f32 %v180, %v252
  %v257 = vmul.f32 %v181, %v248
  %v258 = vmul.f32 %v182, %v252
  %v259 = vmul.f32 %v183, %v248
  %v260 = vmul.f32 %v184, %v252
  %v261 = vmul.f32 %v185, %v248
  %v262 = vmul.f32 %v186, %v252
  %v263 = vmul.f32 %v187, %v248
  %v264 = vmul.f32 %v188, %v252
  %v265 = vmul.f32 %v189, %v248
  %v266 = vmul.f32 %v190, %v252
  %v267 = vmul.f32 %v191, %v248
  %v268 = vmul.f32 %v192, %v252
  %v269 = vmul.f32 %v193, %v248
  %v270 = vmul.f32 %v194, %v252
  %v271 = vmul.f32 %v195, %v248
  %v272 = vmul.f32 %v196, %v252
  %v273 = vmul.f32 %v197, %v248
  %v274 = vmul.f32 %v198, %v252
  %v275 = vmul.f32 %v199, %v248
  %v276 = vmul.f32 %v200, %v252
  %v277 = vmul.f32 %v201, %v248
  %v278 = vmul.f32 %v202, %v252
  %v279 = vmul.f32 %v203, %v248
  %v280 = vmul.f32 %v204, %v252
  %v281 = vmul.f32 %v205, %v248
  %v282 = vmul.f32 %v206, %v252
  %v283 = vmul.f32 %v207, %v248
  %v284 = vmul.f32 %v208, %v252
  %v285 = vmul.f32 %v209, %v248
  %v286 = vmul.f32 %v210, %v252
  %v287 = vmul.f32 %v211, %v248
  %v288 = vmul.f32 %v212, %v252
  %v289 = vmul.f32 %v213, %v248
  %v290 = vmul.f32 %v214, %v252
  %v291 = vmul.f32 %v215, %v248
  %v292 = vmul.f32 %v216, %v252
  %v293 = vmul.f32 %v217, %v248
  %v294 = vmul.f32 %v218, %v252
  %v295 = vmul.f32 %v219, %v248
  %v296 = vmul.f32 %v220, %v252
  %v297 = vmul.f32 %v221, %v248
  %v298 = vmul.f32 %v222, %v252
  %v299 = vmul.f32 %v223, %v248
  %v300 = vmul.f32 %v224, %v252
  %v301 = vmul.f32 %v225, %v248
  %v302 = vmul.f32 %v226, %v252
  %v303 = vmul.f32 %v227, %v248
  %v304 = vmul.f32 %v228, %v252
  %v305 = vmul.f32 %v229, %v248
  %v306 = vmul.f32 %v230, %v252
  %v307 = vmul.f32 %v231, %v248
  %v308 = vmul.f32 %v232, %v252
  %v309 = vmul.f32 %v233, %v248
  %v310 = vmul.f32 %v234, %v252
  %v311 = vmul.f32 %v235, %v248
  %v312 = vmul.f32 %v236, %v252
  %v313 = vmul.f32 %v237, %v248
  %v314 = vmul.f32 %v238, %v252
  %v315 = vmul.f32 %v239, %v248
  %v316 = vmul.f32 %v240, %v252
  %v317 = vmul.f32 %v241, %v248
  %v318 = vmul.f32 %v242, %v252
  %v319 = vld [vmem:[%s5] sm:$0x3]
  %v321 = vlaneseq
  %v322 = vshrl.u32 %v321, 7
  %v323 = vsub.s32 0, %v322
  %v324 = vrot.slane %v319, %v323
  %v325 = vlaneseq
  %v326 = vshrl.u32 %v325, 7
  %v327 = vsub.s32 1, %v326
  %v328 = vrot.slane %v319, %v327
  %v331 = vmul.f32 %v255, %v324
  %v332 = vmul.f32 %v256, %v328
  %v333 = vmul.f32 %v257, %v324
  %v334 = vmul.f32 %v258, %v328
  %v335 = vmul.f32 %v259, %v324
  %v336 = vmul.f32 %v260, %v328
  %v337 = vmul.f32 %v261, %v324
  %v338 = vmul.f32 %v262, %v328
  %v339 = vmul.f32 %v263, %v324
  %v340 = vmul.f32 %v264, %v328
  %v341 = vmul.f32 %v265, %v324
  %v342 = vmul.f32 %v266, %v328
  %v343 = vmul.f32 %v267, %v324
  %v344 = vmul.f32 %v268, %v328
  %v345 = vmul.f32 %v269, %v324
  %v346 = vmul.f32 %v270, %v328
  %v347 = vmul.f32 %v271, %v324
  %v348 = vmul.f32 %v272, %v328
  %v349 = vmul.f32 %v273, %v324
  %v350 = vmul.f32 %v274, %v328
  %v351 = vmul.f32 %v275, %v324
  %v352 = vmul.f32 %v276, %v328
  %v353 = vmul.f32 %v277, %v324
  %v354 = vmul.f32 %v278, %v328
  %v355 = vmul.f32 %v279, %v324
  %v356 = vmul.f32 %v280, %v328
  %v357 = vmul.f32 %v281, %v324
  %v358 = vmul.f32 %v282, %v328
  %v359 = vmul.f32 %v283, %v324
  %v360 = vmul.f32 %v284, %v328
  %v361 = vmul.f32 %v285, %v324
  %v362 = vmul.f32 %v286, %v328
  %v363 = vmul.f32 %v287, %v324
  %v364 = vmul.f32 %v288, %v328
  %v365 = vmul.f32 %v289, %v324
  %v366 = vmul.f32 %v290, %v328
  %v367 = vmul.f32 %v291, %v324
  %v368 = vmul.f32 %v292, %v328
  %v369 = vmul.f32 %v293, %v324
  %v370 = vmul.f32 %v294, %v328
  %v371 = vmul.f32 %v295, %v324
  %v372 = vmul.f32 %v296, %v328
  %v373 = vmul.f32 %v297, %v324
  %v374 = vmul.f32 %v298, %v328
  %v375 = vmul.f32 %v299, %v324
  %v376 = vmul.f32 %v300, %v328
  %v377 = vmul.f32 %v301, %v324
  %v378 = vmul.f32 %v302, %v328
  %v379 = vmul.f32 %v303, %v324
  %v380 = vmul.f32 %v304, %v328
  %v381 = vmul.f32 %v305, %v324
  %v382 = vmul.f32 %v306, %v328
  %v383 = vmul.f32 %v307, %v324
  %v384 = vmul.f32 %v308, %v328
  %v385 = vmul.f32 %v309, %v324
  %v386 = vmul.f32 %v310, %v328
  %v387 = vmul.f32 %v311, %v324
  %v388 = vmul.f32 %v312, %v328
  %v389 = vmul.f32 %v313, %v324
  %v390 = vmul.f32 %v314, %v328
  %v391 = vmul.f32 %v315, %v324
  %v392 = vmul.f32 %v316, %v328
  %v393 = vmul.f32 %v317, %v324
  %v394 = vmul.f32 %v318, %v328
  %v395 = vld [vmem:[%s6] sm:$0x3]
  %v397 = vlaneseq
  %v398 = vshrl.u32 %v397, 7
  %v399 = vsub.s32 0, %v398
  %v400 = vrot.slane %v395, %v399
  %v401 = vlaneseq
  %v402 = vshrl.u32 %v401, 7
  %v403 = vsub.s32 1, %v402
  %v404 = vrot.slane %v395, %v403
  %v407 = vadd.f32 %v331, %v400
  %v408 = vadd.f32 %v332, %v404
  %v409 = vadd.f32 %v333, %v400
  %v410 = vadd.f32 %v334, %v404
  %v411 = vadd.f32 %v335, %v400
  %v412 = vadd.f32 %v336, %v404
  %v413 = vadd.f32 %v337, %v400
  %v414 = vadd.f32 %v338, %v404
  %v415 = vadd.f32 %v339, %v400
  %v416 = vadd.f32 %v340, %v404
  %v417 = vadd.f32 %v341, %v400
  %v418 = vadd.f32 %v342, %v404
  %v419 = vadd.f32 %v343, %v400
  %v420 = vadd.f32 %v344, %v404
  %v421 = vadd.f32 %v345, %v400
  %v422 = vadd.f32 %v346, %v404
  %v423 = vadd.f32 %v347, %v400
  %v424 = vadd.f32 %v348, %v404
  %v425 = vadd.f32 %v349, %v400
  %v426 = vadd.f32 %v350, %v404
  %v427 = vadd.f32 %v351, %v400
  %v428 = vadd.f32 %v352, %v404
  %v429 = vadd.f32 %v353, %v400
  %v430 = vadd.f32 %v354, %v404
  %v431 = vadd.f32 %v355, %v400
  %v432 = vadd.f32 %v356, %v404
  %v433 = vadd.f32 %v357, %v400
  %v434 = vadd.f32 %v358, %v404
  %v435 = vadd.f32 %v359, %v400
  %v436 = vadd.f32 %v360, %v404
  %v437 = vadd.f32 %v361, %v400
  %v438 = vadd.f32 %v362, %v404
  %v439 = vadd.f32 %v363, %v400
  %v440 = vadd.f32 %v364, %v404
  %v441 = vadd.f32 %v365, %v400
  %v442 = vadd.f32 %v366, %v404
  %v443 = vadd.f32 %v367, %v400
  %v444 = vadd.f32 %v368, %v404
  %v445 = vadd.f32 %v369, %v400
  %v446 = vadd.f32 %v370, %v404
  %v447 = vadd.f32 %v371, %v400
  %v448 = vadd.f32 %v372, %v404
  %v449 = vadd.f32 %v373, %v400
  %v450 = vadd.f32 %v374, %v404
  %v451 = vadd.f32 %v375, %v400
  %v452 = vadd.f32 %v376, %v404
  %v453 = vadd.f32 %v377, %v400
  %v454 = vadd.f32 %v378, %v404
  %v455 = vadd.f32 %v379, %v400
  %v456 = vadd.f32 %v380, %v404
  %v457 = vadd.f32 %v381, %v400
  %v458 = vadd.f32 %v382, %v404
  %v459 = vadd.f32 %v383, %v400
  %v460 = vadd.f32 %v384, %v404
  %v461 = vadd.f32 %v385, %v400
  %v462 = vadd.f32 %v386, %v404
  %v463 = vadd.f32 %v387, %v400
  %v464 = vadd.f32 %v388, %v404
  %v465 = vadd.f32 %v389, %v400
  %v466 = vadd.f32 %v390, %v404
  %v467 = vadd.f32 %v391, %v400
  %v468 = vadd.f32 %v392, %v404
  %v469 = vadd.f32 %v393, %v400
  %v470 = vadd.f32 %v394, %v404
  %v471 = vld [vmem:[#allocation2] sm:$0xff]
  %v472 = vld [vmem:[#allocation2 + $0x8] sm:$0xff]
  %v473 = vld [vmem:[#allocation2 + $0x10] sm:$0xff]
  %v474 = vld [vmem:[#allocation2 + $0x18] sm:$0xff]
  %v475 = vld [vmem:[#allocation2 + $0x20] sm:$0xff]
  %v476 = vld [vmem:[#allocation2 + $0x28] sm:$0xff]
  %v477 = vld [vmem:[#allocation2 + $0x30] sm:$0xff]
  %v478 = vld [vmem:[#allocation2 + $0x38] sm:$0xff]
  %v479 = vld [vmem:[#allocation2 + $0x40] sm:$0xff]
  %v480 = vld [vmem:[#allocation2 + $0x48] sm:$0xff]
  %v481 = vld [vmem:[#allocation2 + $0x50] sm:$0xff]
  %v482 = vld [vmem:[#allocation2 + $0x58] sm:$0xff]
  %v483 = vld [vmem:[#allocation2 + $0x60] sm:$0xff]
  %v484 = vld [vmem:[#allocation2 + $0x68] sm:$0xff]
  %v485 = vld [vmem:[#allocation2 + $0x70] sm:$0xff]
  %v486 = vld [vmem:[#allocation2 + $0x78] sm:$0xff]
  %v487 = vld [vmem:[#allocation2 + $0x80] sm:$0xff]
  %v488 = vld [vmem:[#allocation2 + $0x88] sm:$0xff]
  %v489 = vld [vmem:[#allocation2 + $0x90] sm:$0xff]
  %v490 = vld [vmem:[#allocation2 + $0x98] sm:$0xff]
  %v491 = vld [vmem:[#allocation2 + $0xa0] sm:$0xff]
  %v492 = vld [vmem:[#allocation2 + $0xa8] sm:$0xff]
  %v493 = vld [vmem:[#allocation2 + $0xb0] sm:$0xff]
  %v494 = vld [vmem:[#allocation2 + $0xb8] sm:$0xff]
  %v495 = vld [vmem:[#allocation2 + $0xc0] sm:$0xff]
  %v496 = vld [vmem:[#allocation2 + $0xc8] sm:$0xff]
  %v497 = vld [vmem:[#allocation2 + $0xd0] sm:$0xff]
  %v498 = vld [vmem:[#allocation2 + $0xd8] sm:$0xff]
  %v499 = vld [vmem:[#allocation2 + $0xe0] sm:$0xff]
  %v500 = vld [vmem:[#allocation2 + $0xe8] sm:$0xff]
  %v501 = vld [vmem:[#allocation2 + $0xf0] sm:$0xff]
  %v502 = vld [vmem:[#allocation2 + $0xf8] sm:$0xff]
  %v503 = vld [vmem:[#allocation2 + $0x100] sm:$0xff]
  %v504 = vld [vmem:[#allocation2 + $0x108] sm:$0xff]
  %v505 = vld [vmem:[#allocation2 + $0x110] sm:$0xff]
  %v506 = vld [vmem:[#allocation2 + $0x118] sm:$0xff]
  %v507 = vld [vmem:[#allocation2 + $0x120] sm:$0xff]
  %v508 = vld [vmem:[#allocation2 + $0x128] sm:$0xff]
  %v509 = vld [vmem:[#allocation2 + $0x130] sm:$0xff]
  %v510 = vld [vmem:[#allocation2 + $0x138] sm:$0xff]
  %v511 = vld [vmem:[#allocation2 + $0x140] sm:$0xff]
  %v512 = vld [vmem:[#allocation2 + $0x148] sm:$0xff]
  %v513 = vld [vmem:[#allocation2 + $0x150] sm:$0xff]
  %v514 = vld [vmem:[#allocation2 + $0x158] sm:$0xff]
  %v515 = vld [vmem:[#allocation2 + $0x160] sm:$0xff]
  %v516 = vld [vmem:[#allocation2 + $0x168] sm:$0xff]
  %v517 = vld [vmem:[#allocation2 + $0x170] sm:$0xff]
  %v518 = vld [vmem:[#allocation2 + $0x178] sm:$0xff]
  %v519 = vld [vmem:[#allocation2 + $0x180] sm:$0xff]
  %v520 = vld [vmem:[#allocation2 + $0x188] sm:$0xff]
  %v521 = vld [vmem:[#allocation2 + $0x190] sm:$0xff]
  %v522 = vld [vmem:[#allocation2 + $0x198] sm:$0xff]
  %v523 = vld [vmem:[#allocation2 + $0x1a0] sm:$0xff]
  %v524 = vld [vmem:[#allocation2 + $0x1a8] sm:$0xff]
  %v525 = vld [vmem:[#allocation2 + $0x1b0] sm:$0xff]
  %v526 = vld [vmem:[#allocation2 + $0x1b8] sm:$0xff]
  %v527 = vld [vmem:[#allocation2 + $0x1c0] sm:$0xff]
  %v528 = vld [vmem:[#allocation2 + $0x1c8] sm:$0xff]
  %v529 = vld [vmem:[#allocation2 + $0x1d0] sm:$0xff]
  %v530 = vld [vmem:[#allocation2 + $0x1d8] sm:$0xff]
  %v531 = vld [vmem:[#allocation2 + $0x1e0] sm:$0xff]
  %v532 = vld [vmem:[#allocation2 + $0x1e8] sm:$0xff]
  %v533 = vld [vmem:[#allocation2 + $0x1f0] sm:$0xff]
  %v534 = vld [vmem:[#allocation2 + $0x1f8] sm:$0xff]
  %v535 = vld [vmem:[%s0] sm:$0xff]
  %v536 = vld [vmem:[%s0 + $0x8] sm:$0xff]
  %v537 = vld [vmem:[%s0 + $0x10] sm:$0xff]
  %v538 = vld [vmem:[%s0 + $0x18] sm:$0xff]
  %v539 = vld [vmem:[%s0 + $0x20] sm:$0xff]
  %v540 = vld [vmem:[%s0 + $0x28] sm:$0xff]
  %v541 = vld [vmem:[%s0 + $0x30] sm:$0xff]
  %v542 = vld [vmem:[%s0 + $0x38] sm:$0xff]
  %v543 = vld [vmem:[%s0 + $0x40] sm:$0xff]
  %v544 = vld [vmem:[%s0 + $0x48] sm:$0xff]
  %v545 = vld [vmem:[%s0 + $0x50] sm:$0xff]
  %v546 = vld [vmem:[%s0 + $0x58] sm:$0xff]
  %v547 = vld [vmem:[%s0 + $0x60] sm:$0xff]
  %v548 = vld [vmem:[%s0 + $0x68] sm:$0xff]
  %v549 = vld [vmem:[%s0 + $0x70] sm:$0xff]
  %v550 = vld [vmem:[%s0 + $0x78] sm:$0xff]
  %v551 = vld [vmem:[%s0 + $0x80] sm:$0xff]
  %v552 = vld [vmem:[%s0 + $0x88] sm:$0xff]
  %v553 = vld [vmem:[%s0 + $0x90] sm:$0xff]
  %v554 = vld [vmem:[%s0 + $0x98] sm:$0xff]
  %v555 = vld [vmem:[%s0 + $0xa0] sm:$0xff]
  %v556 = vld [vmem:[%s0 + $0xa8] sm:$0xff]
  %v557 = vld [vmem:[%s0 + $0xb0] sm:$0xff]
  %v558 = vld [vmem:[%s0 + $0xb8] sm:$0xff]
  %v559 = vld [vmem:[%s0 + $0xc0] sm:$0xff]
  %v560 = vld [vmem:[%s0 + $0xc8] sm:$0xff]
  %v561 = vld [vmem:[%s0 + $0xd0] sm:$0xff]
  %v562 = vld [vmem:[%s0 + $0xd8] sm:$0xff]
  %v563 = vld [vmem:[%s0 + $0xe0] sm:$0xff]
  %v564 = vld [vmem:[%s0 + $0xe8] sm:$0xff]
  %v565 = vld [vmem:[%s0 + $0xf0] sm:$0xff]
  %v566 = vld [vmem:[%s0 + $0xf8] sm:$0xff]
  %v567 = vpack.c.bf16 %v409, %v407
  %v568 = vpack.c.bf16 %v410, %v408
  %v569 = vpack.c.bf16 %v413, %v411
  %v570 = vpack.c.bf16 %v414, %v412
  %v571 = vpack.c.bf16 %v417, %v415
  %v572 = vpack.c.bf16 %v418, %v416
  %v573 = vpack.c.bf16 %v421, %v419
  %v574 = vpack.c.bf16 %v422, %v420
  %v575 = vpack.c.bf16 %v425, %v423
  %v576 = vpack.c.bf16 %v426, %v424
  %v577 = vpack.c.bf16 %v429, %v427
  %v578 = vpack.c.bf16 %v430, %v428
  %v579 = vpack.c.bf16 %v433, %v431
  %v580 = vpack.c.bf16 %v434, %v432
  %v581 = vpack.c.bf16 %v437, %v435
  %v582 = vpack.c.bf16 %v438, %v436
  %v583 = vpack.c.bf16 %v441, %v439
  %v584 = vpack.c.bf16 %v442, %v440
  %v585 = vpack.c.bf16 %v445, %v443
  %v586 = vpack.c.bf16 %v446, %v444
  %v587 = vpack.c.bf16 %v449, %v447
  %v588 = vpack.c.bf16 %v450, %v448
  %v589 = vpack.c.bf16 %v453, %v451
  %v590 = vpack.c.bf16 %v454, %v452
  %v591 = vpack.c.bf16 %v457, %v455
  %v592 = vpack.c.bf16 %v458, %v456
  %v593 = vpack.c.bf16 %v461, %v459
  %v594 = vpack.c.bf16 %v462, %v460
  %v595 = vpack.c.bf16 %v465, %v463
  %v596 = vpack.c.bf16 %v466, %v464
  %v597 = vpack.c.bf16 %v469, %v467
  %v598 = vpack.c.bf16 %v470, %v468
  %v631 = vunpack.c.l.b16 %v535
  %v632 = vunpack.c.h.b16 %v535
  %v633 = vunpack.c.l.b16 %v536
  %v634 = vunpack.c.h.b16 %v536
  %v635 = vunpack.c.l.b16 %v537
  %v636 = vunpack.c.h.b16 %v537
  %v637 = vunpack.c.l.b16 %v538
  %v638 = vunpack.c.h.b16 %v538
  %v639 = vunpack.c.l.b16 %v539
  %v640 = vunpack.c.h.b16 %v539
  %v641 = vunpack.c.l.b16 %v540
  %v642 = vunpack.c.h.b16 %v540
  %v643 = vunpack.c.l.b16 %v541
  %v644 = vunpack.c.h.b16 %v541
  %v645 = vunpack.c.l.b16 %v542
  %v646 = vunpack.c.h.b16 %v542
  %v647 = vunpack.c.l.b16 %v543
  %v648 = vunpack.c.h.b16 %v543
  %v649 = vunpack.c.l.b16 %v544
  %v650 = vunpack.c.h.b16 %v544
  %v651 = vunpack.c.l.b16 %v545
  %v652 = vunpack.c.h.b16 %v545
  %v653 = vunpack.c.l.b16 %v546
  %v654 = vunpack.c.h.b16 %v546
  %v655 = vunpack.c.l.b16 %v547
  %v656 = vunpack.c.h.b16 %v547
  %v657 = vunpack.c.l.b16 %v548
  %v658 = vunpack.c.h.b16 %v548
  %v659 = vunpack.c.l.b16 %v549
  %v660 = vunpack.c.h.b16 %v549
  %v661 = vunpack.c.l.b16 %v550
  %v662 = vunpack.c.h.b16 %v550
  %v663 = vunpack.c.l.b16 %v551
  %v664 = vunpack.c.h.b16 %v551
  %v665 = vunpack.c.l.b16 %v552
  %v666 = vunpack.c.h.b16 %v552
  %v667 = vunpack.c.l.b16 %v553
  %v668 = vunpack.c.h.b16 %v553
  %v669 = vunpack.c.l.b16 %v554
  %v670 = vunpack.c.h.b16 %v554
  %v671 = vunpack.c.l.b16 %v555
  %v672 = vunpack.c.h.b16 %v555
  %v673 = vunpack.c.l.b16 %v556
  %v674 = vunpack.c.h.b16 %v556
  %v675 = vunpack.c.l.b16 %v557
  %v676 = vunpack.c.h.b16 %v557
  %v677 = vunpack.c.l.b16 %v558
  %v678 = vunpack.c.h.b16 %v558
  %v679 = vunpack.c.l.b16 %v559
  %v680 = vunpack.c.h.b16 %v559
  %v681 = vunpack.c.l.b16 %v560
  %v682 = vunpack.c.h.b16 %v560
  %v683 = vunpack.c.l.b16 %v561
  %v684 = vunpack.c.h.b16 %v561
  %v685 = vunpack.c.l.b16 %v562
  %v686 = vunpack.c.h.b16 %v562
  %v687 = vunpack.c.l.b16 %v563
  %v688 = vunpack.c.h.b16 %v563
  %v689 = vunpack.c.l.b16 %v564
  %v690 = vunpack.c.h.b16 %v564
  %v691 = vunpack.c.l.b16 %v565
  %v692 = vunpack.c.h.b16 %v565
  %v693 = vunpack.c.l.b16 %v566
  %v694 = vunpack.c.h.b16 %v566
  %v695 = vpack.c.b16 %v633, %v631
  %v696 = vpack.c.b16 %v634, %v632
  %v697 = vpack.c.b16 %v637, %v635
  %v698 = vpack.c.b16 %v638, %v636
  %v699 = vpack.c.b16 %v641, %v639
  %v700 = vpack.c.b16 %v642, %v640
  %v701 = vpack.c.b16 %v645, %v643
  %v702 = vpack.c.b16 %v646, %v644
  %v703 = vpack.c.b16 %v649, %v647
  %v704 = vpack.c.b16 %v650, %v648
  %v705 = vpack.c.b16 %v653, %v651
  %v706 = vpack.c.b16 %v654, %v652
  %v707 = vpack.c.b16 %v657, %v655
  %v708 = vpack.c.b16 %v658, %v656
  %v709 = vpack.c.b16 %v661, %v659
  %v710 = vpack.c.b16 %v662, %v660
  %v711 = vpack.c.b16 %v665, %v663
  %v712 = vpack.c.b16 %v666, %v664
  %v713 = vpack.c.b16 %v669, %v667
  %v714 = vpack.c.b16 %v670, %v668
  %v715 = vpack.c.b16 %v673, %v671
  %v716 = vpack.c.b16 %v674, %v672
  %v717 = vpack.c.b16 %v677, %v675
  %v718 = vpack.c.b16 %v678, %v676
  %v719 = vpack.c.b16 %v681, %v679
  %v720 = vpack.c.b16 %v682, %v680
  %v721 = vpack.c.b16 %v685, %v683
  %v722 = vpack.c.b16 %v686, %v684
  %v723 = vpack.c.b16 %v689, %v687
  %v724 = vpack.c.b16 %v690, %v688
  %v725 = vpack.c.b16 %v693, %v691
  %v726 = vpack.c.b16 %v694, %v692
  %759 = vmatprep.subr.bf16.mxu0 %v568
  %760 = vmatpush1.bf16.msra.mxu0 %v567
  %761 = vmatprep.subr.bf16.mxu0 %v570
  %762 = vmatpush1.bf16.msra.mxu0 %v569
  %763 = vmatprep.subr.bf16.mxu0 %v572
  %764 = vmatpush1.bf16.msra.mxu0 %v571
  %765 = vmatprep.subr.bf16.mxu0 %v574
  %766 = vmatpush1.bf16.msra.mxu0 %v573
  %767 = vmatprep.subr.bf16.mxu0 %v576
  %768 = vmatpush1.bf16.msra.mxu0 %v575
  %769 = vmatprep.subr.bf16.mxu0 %v578
  %770 = vmatpush1.bf16.msra.mxu0 %v577
  %771 = vmatprep.subr.bf16.mxu0 %v580
  %772 = vmatpush1.bf16.msra.mxu0 %v579
  %773 = vmatprep.subr.bf16.mxu0 %v582
  %774 = vmatpush1.bf16.msra.mxu0 %v581
  %775 = vmatprep.subr.bf16.mxu0 %v584
  %776 = vmatpush1.bf16.msra.mxu0 %v583
  %777 = vmatprep.subr.bf16.mxu0 %v586
  %778 = vmatpush1.bf16.msra.mxu0 %v585
  %779 = vmatprep.subr.bf16.mxu0 %v588
  %780 = vmatpush1.bf16.msra.mxu0 %v587
  %781 = vmatprep.subr.bf16.mxu0 %v590
  %782 = vmatpush1.bf16.msra.mxu0 %v589
  %783 = vmatprep.subr.bf16.mxu0 %v592
  %784 = vmatpush1.bf16.msra.mxu0 %v591
  %785 = vmatprep.subr.bf16.mxu0 %v594
  %786 = vmatpush1.bf16.msra.mxu0 %v593
  %787 = vmatprep.subr.bf16.mxu0 %v596
  %788 = vmatpush1.bf16.msra.mxu0 %v595
  %789 = vmatprep.subr.bf16.mxu0 %v598
  %790 = vmatpush1.bf16.msra.mxu0 %v597
  %791 = vmatprep.mubr.bf16.mxu0 %v696
  %792 = vmatmul.mubr.bf16.gmra.mrb[0].mxu0 %v695
  %v793 = vpop.f32.mrb[0].mxu0
  %v794 = vadd.f32 0.0, %v793
  %v795 = vpop.f32.mrb[0].mxu0
  %v796 = vadd.f32 0.0, %v795
  %v797 = vpop.f32.mrb[0].mxu0
  %v798 = vadd.f32 0.0, %v797
  %v799 = vpop.f32.mrb[0].mxu0
  %v800 = vadd.f32 0.0, %v799
  %801 = vmatprep.mubr.bf16.mxu0 %v698
  %802 = vmatmul.mubr.bf16.gmra.mrb[0].mxu0 %v697
  %v803 = vpop.f32.mrb[0].mxu0
  %v804 = vadd.f32 0.0, %v803
  %v805 = vpop.f32.mrb[0].mxu0
  %v806 = vadd.f32 0.0, %v805
  %v807 = vpop.f32.mrb[0].mxu0
  %v808 = vadd.f32 0.0, %v807
  %v809 = vpop.f32.mrb[0].mxu0
  %v810 = vadd.f32 0.0, %v809
  %811 = vmatprep.mubr.bf16.mxu0 %v700
  %812 = vmatmul.mubr.bf16.gmra.mrb[0].mxu0 %v699
  %v813 = vpop.f32.mrb[0].mxu0
  %v814 = vadd.f32 0.0, %v813
  %v815 = vpop.f32.mrb[0].mxu0
  %v816 = vadd.f32 0.0, %v815
  %v817 = vpop.f32.mrb[0].mxu0
  %v818 = vadd.f32 0.0, %v817
  %v819 = vpop.f32.mrb[0].mxu0
  %v820 = vadd.f32 0.0, %v819
  %821 = vmatprep.mubr.bf16.mxu0 %v702
  %822 = vmatmul.mubr.bf16.gmra.mrb[0].mxu0 %v701
  %v823 = vpop.f32.mrb[0].mxu0
  %v824 = vadd.f32 0.0, %v823
  %v825 = vpop.f32.mrb[0].mxu0
  %v826 = vadd.f32 0.0, %v825
  %v827 = vpop.f32.mrb[0].mxu0
  %v828 = vadd.f32 0.0, %v827
  %v829 = vpop.f32.mrb[0].mxu0
  %v830 = vadd.f32 0.0, %v829
  %831 = vmatprep.mubr.bf16.mxu0 %v704
  %832 = vmatmul.mubr.bf16.gmra.mrb[0].mxu0 %v703
  %v833 = vpop.f32.mrb[0].mxu0
  %v834 = vadd.f32 0.0, %v833
  %v835 = vpop.f32.mrb[0].mxu0
  %v836 = vadd.f32 0.0, %v835
  %v837 = vpop.f32.mrb[0].mxu0
  %v838 = vadd.f32 0.0, %v837
  %v839 = vpop.f32.mrb[0].mxu0
  %v840 = vadd.f32 0.0, %v839
  %841 = vmatprep.mubr.bf16.mxu0 %v706
  %842 = vmatmul.mubr.bf16.gmra.mrb[0].mxu0 %v705
  %v843 = vpop.f32.mrb[0].mxu0
  %v844 = vadd.f32 0.0, %v843
  %v845 = vpop.f32.mrb[0].mxu0
  %v846 = vadd.f32 0.0, %v845
  %v847 = vpop.f32.mrb[0].mxu0
  %v848 = vadd.f32 0.0, %v847
  %v849 = vpop.f32.mrb[0].mxu0
  %v850 = vadd.f32 0.0, %v849
  %851 = vmatprep.mubr.bf16.mxu0 %v708
  %852 = vmatmul.mubr.bf16.gmra.mrb[0].mxu0 %v707
  %v853 = vpop.f32.mrb[0].mxu0
  %v854 = vadd.f32 0.0, %v853
  %v855 = vpop.f32.mrb[0].mxu0
  %v856 = vadd.f32 0.0, %v855
  %v857 = vpop.f32.mrb[0].mxu0
  %v858 = vadd.f32 0.0, %v857
  %v859 = vpop.f32.mrb[0].mxu0
  %v860 = vadd.f32 0.0, %v859
  %861 = vmatprep.mubr.bf16.mxu0 %v710
  %862 = vmatmul.mubr.bf16.gmra.mrb[0].mxu0 %v709
  %v863 = vpop.f32.mrb[0].mxu0
  %v864 = vadd.f32 0.0, %v863
  %v865 = vpop.f32.mrb[0].mxu0
  %v866 = vadd.f32 0.0, %v865
  %v867 = vpop.f32.mrb[0].mxu0
  %v868 = vadd.f32 0.0, %v867
  %v869 = vpop.f32.mrb[0].mxu0
  %v870 = vadd.f32 0.0, %v869
  %871 = vmatprep.mubr.bf16.mxu0 %v712
  %872 = vmatmul.mubr.bf16.gmra.mrb[0].mxu0 %v711
  %v873 = vpop.f32.mrb[0].mxu0
  %v874 = vadd.f32 0.0, %v873
  %v875 = vpop.f32.mrb[0].mxu0
  %v876 = vadd.f32 0.0, %v875
  %v877 = vpop.f32.mrb[0].mxu0
  %v878 = vadd.f32 0.0, %v877
  %v879 = vpop.f32.mrb[0].mxu0
  %v880 = vadd.f32 0.0, %v879
  %881 = vmatprep.mubr.bf16.mxu0 %v714
  %882 = vmatmul.mubr.bf16.gmra.mrb[0].mxu0 %v713
  %v883 = vpop.f32.mrb[0].mxu0
  %v884 = vadd.f32 0.0, %v883
  %v885 = vpop.f32.mrb[0].mxu0
  %v886 = vadd.f32 0.0, %v885
  %v887 = vpop.f32.mrb[0].mxu0
  %v888 = vadd.f32 0.0, %v887
  %v889 = vpop.f32.mrb[0].mxu0
  %v890 = vadd.f32 0.0, %v889
  %891 = vmatprep.mubr.bf16.mxu0 %v716
  %892 = vmatmul.mubr.bf16.gmra.mrb[0].mxu0 %v715
  %v893 = vpop.f32.mrb[0].mxu0
  %v894 = vadd.f32 0.0, %v893
  %v895 = vpop.f32.mrb[0].mxu0
  %v896 = vadd.f32 0.0, %v895
  %v897 = vpop.f32.mrb[0].mxu0
  %v898 = vadd.f32 0.0, %v897
  %v899 = vpop.f32.mrb[0].mxu0
  %v900 = vadd.f32 0.0, %v899
  %901 = vmatprep.mubr.bf16.mxu0 %v718
  %902 = vmatmul.mubr.bf16.gmra.mrb[0].mxu0 %v717
  %v903 = vpop.f32.mrb[0].mxu0
  %v904 = vadd.f32 0.0, %v903
  %v905 = vpop.f32.mrb[0].mxu0
  %v906 = vadd.f32 0.0, %v905
  %v907 = vpop.f32.mrb[0].mxu0
  %v908 = vadd.f32 0.0, %v907
  %v909 = vpop.f32.mrb[0].mxu0
  %v910 = vadd.f32 0.0, %v909
  %911 = vmatprep.mubr.bf16.mxu0 %v720
  %912 = vmatmul.mubr.bf16.gmra.mrb[0].mxu0 %v719
  %v913 = vpop.f32.mrb[0].mxu0
  %v914 = vadd.f32 0.0, %v913
  %v915 = vpop.f32.mrb[0].mxu0
  %v916 = vadd.f32 0.0, %v915
  %v917 = vpop.f32.mrb[0].mxu0
  %v918 = vadd.f32 0.0, %v917
  %v919 = vpop.f32.mrb[0].mxu0
  %v920 = vadd.f32 0.0, %v919
  %921 = vmatprep.mubr.bf16.mxu0 %v722
  %922 = vmatmul.mubr.bf16.gmra.mrb[0].mxu0 %v721
  %v923 = vpop.f32.mrb[0].mxu0
  %v924 = vadd.f32 0.0, %v923
  %v925 = vpop.f32.mrb[0].mxu0
  %v926 = vadd.f32 0.0, %v925
  %v927 = vpop.f32.mrb[0].mxu0
  %v928 = vadd.f32 0.0, %v927
  %v929 = vpop.f32.mrb[0].mxu0
  %v930 = vadd.f32 0.0, %v929
  %931 = vmatprep.mubr.bf16.mxu0 %v724
  %932 = vmatmul.mubr.bf16.gmra.mrb[0].mxu0 %v723
  %v933 = vpop.f32.mrb[0].mxu0
  %v934 = vadd.f32 0.0, %v933
  %v935 = vpop.f32.mrb[0].mxu0
  %v936 = vadd.f32 0.0, %v935
  %v937 = vpop.f32.mrb[0].mxu0
  %v938 = vadd.f32 0.0, %v937
  %v939 = vpop.f32.mrb[0].mxu0
  %v940 = vadd.f32 0.0, %v939
  %941 = vmatprep.mubr.bf16.mxu0 %v726
  %942 = vmatmul.mubr.bf16.gmra.mrb[0].mxu0 %v725
  %v943 = vpop.f32.mrb[0].mxu0
  %v944 = vadd.f32 0.0, %v943
  %v945 = vpop.f32.mrb[0].mxu0
  %v946 = vadd.f32 0.0, %v945
  %v947 = vpop.f32.mrb[0].mxu0
  %v948 = vadd.f32 0.0, %v947
  %v949 = vpop.f32.mrb[0].mxu0
  %v950 = vadd.f32 0.0, %v949
  %951 = vdwg.mxu0
  %v952 = vadd.f32 %v471, %v794
  %v953 = vadd.f32 %v472, %v796
  %v954 = vadd.f32 %v473, %v798
  %v955 = vadd.f32 %v474, %v800
  %v956 = vadd.f32 %v475, %v804
  %v957 = vadd.f32 %v476, %v806
  %v958 = vadd.f32 %v477, %v808
  %v959 = vadd.f32 %v478, %v810
  %v960 = vadd.f32 %v479, %v814
  %v961 = vadd.f32 %v480, %v816
  %v962 = vadd.f32 %v481, %v818
  %v963 = vadd.f32 %v482, %v820
  %v964 = vadd.f32 %v483, %v824
  %v965 = vadd.f32 %v484, %v826
  %v966 = vadd.f32 %v485, %v828
  %v967 = vadd.f32 %v486, %v830
  %v968 = vadd.f32 %v487, %v834
  %v969 = vadd.f32 %v488, %v836
  %v970 = vadd.f32 %v489, %v838
  %v971 = vadd.f32 %v490, %v840
  %v972 = vadd.f32 %v491, %v844
  %v973 = vadd.f32 %v492, %v846
  %v974 = vadd.f32 %v493, %v848
  %v975 = vadd.f32 %v494, %v850
  %v976 = vadd.f32 %v495, %v854
  %v977 = vadd.f32 %v496, %v856
  %v978 = vadd.f32 %v497, %v858
  %v979 = vadd.f32 %v498, %v860
  %v980 = vadd.f32 %v499, %v864
  %v981 = vadd.f32 %v500, %v866
  %v982 = vadd.f32 %v501, %v868
  %v983 = vadd.f32 %v502, %v870
  %v984 = vadd.f32 %v503, %v874
  %v985 = vadd.f32 %v504, %v876
  %v986 = vadd.f32 %v505, %v878
  %v987 = vadd.f32 %v506, %v880
  %v988 = vadd.f32 %v507, %v884
  %v989 = vadd.f32 %v508, %v886
  %v990 = vadd.f32 %v509, %v888
  %v991 = vadd.f32 %v510, %v890
  %v992 = vadd.f32 %v511, %v894
  %v993 = vadd.f32 %v512, %v896
  %v994 = vadd.f32 %v513, %v898
  %v995 = vadd.f32 %v514, %v900
  %v996 = vadd.f32 %v515, %v904
  %v997 = vadd.f32 %v516, %v906
  %v998 = vadd.f32 %v517, %v908
  %v999 = vadd.f32 %v518, %v910
  %v1000 = vadd.f32 %v519, %v914
  %v1001 = vadd.f32 %v520, %v916
  %v1002 = vadd.f32 %v521, %v918
  %v1003 = vadd.f32 %v522, %v920
  %v1004 = vadd.f32 %v523, %v924
  %v1005 = vadd.f32 %v524, %v926
  %v1006 = vadd.f32 %v525, %v928
  %v1007 = vadd.f32 %v526, %v930
  %v1008 = vadd.f32 %v527, %v934
  %v1009 = vadd.f32 %v528, %v936
  %v1010 = vadd.f32 %v529, %v938
  %v1011 = vadd.f32 %v530, %v940
  %v1012 = vadd.f32 %v531, %v944
  %v1013 = vadd.f32 %v532, %v946
  %v1014 = vadd.f32 %v533, %v948
  %v1015 = vadd.f32 %v534, %v950
  %1016 = vst [vmem:[#allocation2] sm:$0xff] %v952
  %1017 = vst [vmem:[#allocation2 + $0x8] sm:$0xff] %v953
  %1018 = vst [vmem:[#allocation2 + $0x10] sm:$0xff] %v954
  %1019 = vst [vmem:[#allocation2 + $0x18] sm:$0xff] %v955
  %1020 = vst [vmem:[#allocation2 + $0x20] sm:$0xff] %v956
  %1021 = vst [vmem:[#allocation2 + $0x28] sm:$0xff] %v957
  %1022 = vst [vmem:[#allocation2 + $0x30] sm:$0xff] %v958
  %1023 = vst [vmem:[#allocation2 + $0x38] sm:$0xff] %v959
  %1024 = vst [vmem:[#allocation2 + $0x40] sm:$0xff] %v960
  %1025 = vst [vmem:[#allocation2 + $0x48] sm:$0xff] %v961
  %1026 = vst [vmem:[#allocation2 + $0x50] sm:$0xff] %v962
  %1027 = vst [vmem:[#allocation2 + $0x58] sm:$0xff] %v963
  %1028 = vst [vmem:[#allocation2 + $0x60] sm:$0xff] %v964
  %1029 = vst [vmem:[#allocation2 + $0x68] sm:$0xff] %v965
  %1030 = vst [vmem:[#allocation2 + $0x70] sm:$0xff] %v966
  %1031 = vst [vmem:[#allocation2 + $0x78] sm:$0xff] %v967
  %1032 = vst [vmem:[#allocation2 + $0x80] sm:$0xff] %v968
  %1033 = vst [vmem:[#allocation2 + $0x88] sm:$0xff] %v969
  %1034 = vst [vmem:[#allocation2 + $0x90] sm:$0xff] %v970
  %1035 = vst [vmem:[#allocation2 + $0x98] sm:$0xff] %v971
  %1036 = vst [vmem:[#allocation2 + $0xa0] sm:$0xff] %v972
  %1037 = vst [vmem:[#allocation2 + $0xa8] sm:$0xff] %v973
  %1038 = vst [vmem:[#allocation2 + $0xb0] sm:$0xff] %v974
  %1039 = vst [vmem:[#allocation2 + $0xb8] sm:$0xff] %v975
  %1040 = vst [vmem:[#allocation2 + $0xc0] sm:$0xff] %v976
  %1041 = vst [vmem:[#allocation2 + $0xc8] sm:$0xff] %v977
  %1042 = vst [vmem:[#allocation2 + $0xd0] sm:$0xff] %v978
  %1043 = vst [vmem:[#allocation2 + $0xd8] sm:$0xff] %v979
  %1044 = vst [vmem:[#allocation2 + $0xe0] sm:$0xff] %v980
  %1045 = vst [vmem:[#allocation2 + $0xe8] sm:$0xff] %v981
  %1046 = vst [vmem:[#allocation2 + $0xf0] sm:$0xff] %v982
  %1047 = vst [vmem:[#allocation2 + $0xf8] sm:$0xff] %v983
  %1048 = vst [vmem:[#allocation2 + $0x100] sm:$0xff] %v984
  %1049 = vst [vmem:[#allocation2 + $0x108] sm:$0xff] %v985
  %1050 = vst [vmem:[#allocation2 + $0x110] sm:$0xff] %v986
  %1051 = vst [vmem:[#allocation2 + $0x118] sm:$0xff] %v987
  %1052 = vst [vmem:[#allocation2 + $0x120] sm:$0xff] %v988
  %1053 = vst [vmem:[#allocation2 + $0x128] sm:$0xff] %v989
  %1054 = vst [vmem:[#allocation2 + $0x130] sm:$0xff] %v990
  %1055 = vst [vmem:[#allocation2 + $0x138] sm:$0xff] %v991
  %1056 = vst [vmem:[#allocation2 + $0x140] sm:$0xff] %v992
  %1057 = vst [vmem:[#allocation2 + $0x148] sm:$0xff] %v993
  %1058 = vst [vmem:[#allocation2 + $0x150] sm:$0xff] %v994
  %1059 = vst [vmem:[#allocation2 + $0x158] sm:$0xff] %v995
  %1060 = vst [vmem:[#allocation2 + $0x160] sm:$0xff] %v996
  %1061 = vst [vmem:[#allocation2 + $0x168] sm:$0xff] %v997
  %1062 = vst [vmem:[#allocation2 + $0x170] sm:$0xff] %v998
  %1063 = vst [vmem:[#allocation2 + $0x178] sm:$0xff] %v999
  %1064 = vst [vmem:[#allocation2 + $0x180] sm:$0xff] %v1000
  %1065 = vst [vmem:[#allocation2 + $0x188] sm:$0xff] %v1001
  %1066 = vst [vmem:[#allocation2 + $0x190] sm:$0xff] %v1002
  %1067 = vst [vmem:[#allocation2 + $0x198] sm:$0xff] %v1003
  %1068 = vst [vmem:[#allocation2 + $0x1a0] sm:$0xff] %v1004
  %1069 = vst [vmem:[#allocation2 + $0x1a8] sm:$0xff] %v1005
  %1070 = vst [vmem:[#allocation2 + $0x1b0] sm:$0xff] %v1006
  %1071 = vst [vmem:[#allocation2 + $0x1b8] sm:$0xff] %v1007
  %1072 = vst [vmem:[#allocation2 + $0x1c0] sm:$0xff] %v1008
  %1073 = vst [vmem:[#allocation2 + $0x1c8] sm:$0xff] %v1009
  %1074 = vst [vmem:[#allocation2 + $0x1d0] sm:$0xff] %v1010
  %1075 = vst [vmem:[#allocation2 + $0x1d8] sm:$0xff] %v1011
  %1076 = vst [vmem:[#allocation2 + $0x1e0] sm:$0xff] %v1012
  %1077 = vst [vmem:[#allocation2 + $0x1e8] sm:$0xff] %v1013
  %1078 = vst [vmem:[#allocation2 + $0x1f0] sm:$0xff] %v1014
  %1079 = vst [vmem:[#allocation2 + $0x1f8] sm:$0xff] %v1015
  // Predicated region
  $region46: #{regc_forward.3} parent=0 // pred_check
    %p1080 = pneg %p35
  $region47: #{regc_forward.3} parent=0 // pred_check_branch
    %1082 = sbr.rel (%p1080) target = $region49
  $region48: #{regc_forward.3} parent=0 // pred_region
    %v1083 = vld [vmem:[%s2] sm:$0xff]
    %v1084 = vld [vmem:[%s2 + $0x8] sm:$0xff]
    %v1085 = vld [vmem:[%s2 + $0x10] sm:$0xff]
    %v1086 = vld [vmem:[%s2 + $0x18] sm:$0xff]
    %v1087 = vld [vmem:[%s2 + $0x20] sm:$0xff]
    %v1088 = vld [vmem:[%s2 + $0x28] sm:$0xff]
    %v1089 = vld [vmem:[%s2 + $0x30] sm:$0xff]
    %v1090 = vld [vmem:[%s2 + $0x38] sm:$0xff]
    %v1091 = vld [vmem:[%s2 + $0x40] sm:$0xff]
    %v1092 = vld [vmem:[%s2 + $0x48] sm:$0xff]
    %v1093 = vld [vmem:[%s2 + $0x50] sm:$0xff]
    %v1094 = vld [vmem:[%s2 + $0x58] sm:$0xff]
    %v1095 = vld [vmem:[%s2 + $0x60] sm:$0xff]
    %v1096 = vld [vmem:[%s2 + $0x68] sm:$0xff]
    %v1097 = vld [vmem:[%s2 + $0x70] sm:$0xff]
    %v1098 = vld [vmem:[%s2 + $0x78] sm:$0xff]
    %v1099 = vld [vmem:[%s2 + $0x80] sm:$0xff]
    %v1100 = vld [vmem:[%s2 + $0x88] sm:$0xff]
    %v1101 = vld [vmem:[%s2 + $0x90] sm:$0xff]
    %v1102 = vld [vmem:[%s2 + $0x98] sm:$0xff]
    %v1103 = vld [vmem:[%s2 + $0xa0] sm:$0xff]
    %v1104 = vld [vmem:[%s2 + $0xa8] sm:$0xff]
    %v1105 = vld [vmem:[%s2 + $0xb0] sm:$0xff]
    %v1106 = vld [vmem:[%s2 + $0xb8] sm:$0xff]
    %v1107 = vld [vmem:[%s2 + $0xc0] sm:$0xff]
    %v1108 = vld [vmem:[%s2 + $0xc8] sm:$0xff]
    %v1109 = vld [vmem:[%s2 + $0xd0] sm:$0xff]
    %v1110 = vld [vmem:[%s2 + $0xd8] sm:$0xff]
    %v1111 = vld [vmem:[%s2 + $0xe0] sm:$0xff]
    %v1112 = vld [vmem:[%s2 + $0xe8] sm:$0xff]
    %v1113 = vld [vmem:[%s2 + $0xf0] sm:$0xff]
    %v1114 = vld [vmem:[%s2 + $0xf8] sm:$0xff]
    %v1115 = vld [vmem:[%s2 + $0x100] sm:$0xff]
    %v1116 = vld [vmem:[%s2 + $0x108] sm:$0xff]
    %v1117 = vld [vmem:[%s2 + $0x110] sm:$0xff]
    %v1118 = vld [vmem:[%s2 + $0x118] sm:$0xff]
    %v1119 = vld [vmem:[%s2 + $0x120] sm:$0xff]
    %v1120 = vld [vmem:[%s2 + $0x128] sm:$0xff]
    %v1121 = vld [vmem:[%s2 + $0x130] sm:$0xff]
    %v1122 = vld [vmem:[%s2 + $0x138] sm:$0xff]
    %v1123 = vld [vmem:[%s2 + $0x140] sm:$0xff]
    %v1124 = vld [vmem:[%s2 + $0x148] sm:$0xff]
    %v1125 = vld [vmem:[%s2 + $0x150] sm:$0xff]
    %v1126 = vld [vmem:[%s2 + $0x158] sm:$0xff]
    %v1127 = vld [vmem:[%s2 + $0x160] sm:$0xff]
    %v1128 = vld [vmem:[%s2 + $0x168] sm:$0xff]
    %v1129 = vld [vmem:[%s2 + $0x170] sm:$0xff]
    %v1130 = vld [vmem:[%s2 + $0x178] sm:$0xff]
    %v1131 = vld [vmem:[%s2 + $0x180] sm:$0xff]
    %v1132 = vld [vmem:[%s2 + $0x188] sm:$0xff]
    %v1133 = vld [vmem:[%s2 + $0x190] sm:$0xff]
    %v1134 = vld [vmem:[%s2 + $0x198] sm:$0xff]
    %v1135 = vld [vmem:[%s2 + $0x1a0] sm:$0xff]
    %v1136 = vld [vmem:[%s2 + $0x1a8] sm:$0xff]
    %v1137 = vld [vmem:[%s2 + $0x1b0] sm:$0xff]
    %v1138 = vld [vmem:[%s2 + $0x1b8] sm:$0xff]
    %v1139 = vld [vmem:[%s2 + $0x1c0] sm:$0xff]
    %v1140 = vld [vmem:[%s2 + $0x1c8] sm:$0xff]
    %v1141 = vld [vmem:[%s2 + $0x1d0] sm:$0xff]
    %v1142 = vld [vmem:[%s2 + $0x1d8] sm:$0xff]
    %v1143 = vld [vmem:[%s2 + $0x1e0] sm:$0xff]
    %v1144 = vld [vmem:[%s2 + $0x1e8] sm:$0xff]
    %v1145 = vld [vmem:[%s2 + $0x1f0] sm:$0xff]
    %v1146 = vld [vmem:[%s2 + $0x1f8] sm:$0xff]
    %v1147 = vld [vmem:[%s3] sm:$0x3]
    %v1149 = vlaneseq
    %v1150 = vshrl.u32 %v1149, 7
    %v1151 = vsub.s32 0, %v1150
    %v1152 = vrot.slane %v1147, %v1151
    %v1153 = vlaneseq
    %v1154 = vshrl.u32 %v1153, 7
    %v1155 = vsub.s32 1, %v1154
    %v1156 = vrot.slane %v1147, %v1155
    %v1159 = vsub.f32 %v1083, %v1152
    %v1160 = vsub.f32 %v1084, %v1156
    %v1161 = vsub.f32 %v1085, %v1152
    %v1162 = vsub.f32 %v1086, %v1156
    %v1163 = vsub.f32 %v1087, %v1152
    %v1164 = vsub.f32 %v1088, %v1156
    %v1165 = vsub.f32 %v1089, %v1152
    %v1166 = vsub.f32 %v1090, %v1156
    %v1167 = vsub.f32 %v1091, %v1152
    %v1168 = vsub.f32 %v1092, %v1156
    %v1169 = vsub.f32 %v1093, %v1152
    %v1170 = vsub.f32 %v1094, %v1156
    %v1171 = vsub.f32 %v1095, %v1152
    %v1172 = vsub.f32 %v1096, %v1156
    %v1173 = vsub.f32 %v1097, %v1152
    %v1174 = vsub.f32 %v1098, %v1156
    %v1175 = vsub.f32 %v1099, %v1152
    %v1176 = vsub.f32 %v1100, %v1156
    %v1177 = vsub.f32 %v1101, %v1152
    %v1178 = vsub.f32 %v1102, %v1156
    %v1179 = vsub.f32 %v1103, %v1152
    %v1180 = vsub.f32 %v1104, %v1156
    %v1181 = vsub.f32 %v1105, %v1152
    %v1182 = vsub.f32 %v1106, %v1156
    %v1183 = vsub.f32 %v1107, %v1152
    %v1184 = vsub.f32 %v1108, %v1156
    %v1185 = vsub.f32 %v1109, %v1152
    %v1186 = vsub.f32 %v1110, %v1156
    %v1187 = vsub.f32 %v1111, %v1152
    %v1188 = vsub.f32 %v1112, %v1156
    %v1189 = vsub.f32 %v1113, %v1152
    %v1190 = vsub.f32 %v1114, %v1156
    %v1191 = vsub.f32 %v1115, %v1152
    %v1192 = vsub.f32 %v1116, %v1156
    %v1193 = vsub.f32 %v1117, %v1152
    %v1194 = vsub.f32 %v1118, %v1156
    %v1195 = vsub.f32 %v1119, %v1152
    %v1196 = vsub.f32 %v1120, %v1156
    %v1197 = vsub.f32 %v1121, %v1152
    %v1198 = vsub.f32 %v1122, %v1156
    %v1199 = vsub.f32 %v1123, %v1152
    %v1200 = vsub.f32 %v1124, %v1156
    %v1201 = vsub.f32 %v1125, %v1152
    %v1202 = vsub.f32 %v1126, %v1156
    %v1203 = vsub.f32 %v1127, %v1152
    %v1204 = vsub.f32 %v1128, %v1156
    %v1205 = vsub.f32 %v1129, %v1152
    %v1206 = vsub.f32 %v1130, %v1156
    %v1207 = vsub.f32 %v1131, %v1152
    %v1208 = vsub.f32 %v1132, %v1156
    %v1209 = vsub.f32 %v1133, %v1152
    %v1210 = vsub.f32 %v1134, %v1156
    %v1211 = vsub.f32 %v1135, %v1152
    %v1212 = vsub.f32 %v1136, %v1156
    %v1213 = vsub.f32 %v1137, %v1152
    %v1214 = vsub.f32 %v1138, %v1156
    %v1215 = vsub.f32 %v1139, %v1152
    %v1216 = vsub.f32 %v1140, %v1156
    %v1217 = vsub.f32 %v1141, %v1152
    %v1218 = vsub.f32 %v1142, %v1156
    %v1219 = vsub.f32 %v1143, %v1152
    %v1220 = vsub.f32 %v1144, %v1156
    %v1221 = vsub.f32 %v1145, %v1152
    %v1222 = vsub.f32 %v1146, %v1156
    %v1223 = vld [vmem:[%s4] sm:$0x3]
    %v1225 = vlaneseq
    %v1226 = vshrl.u32 %v1225, 7
    %v1227 = vsub.s32 0, %v1226
    %v1228 = vrot.slane %v1223, %v1227
    %v1229 = vlaneseq
    %v1230 = vshrl.u32 %v1229, 7
    %v1231 = vsub.s32 1, %v1230
    %v1232 = vrot.slane %v1223, %v1231
    %v1235 = vmul.f32 %v1159, %v1228
    %v1236 = vmul.f32 %v1160, %v1232
    %v1237 = vmul.f32 %v1161, %v1228
    %v1238 = vmul.f32 %v1162, %v1232
    %v1239 = vmul.f32 %v1163, %v1228
    %v1240 = vmul.f32 %v1164, %v1232
    %v1241 = vmul.f32 %v1165, %v1228
    %v1242 = vmul.f32 %v1166, %v1232
    %v1243 = vmul.f32 %v1167, %v1228
    %v1244 = vmul.f32 %v1168, %v1232
    %v1245 = vmul.f32 %v1169, %v1228
    %v1246 = vmul.f32 %v1170, %v1232
    %v1247 = vmul.f32 %v1171, %v1228
    %v1248 = vmul.f32 %v1172, %v1232
    %v1249 = vmul.f32 %v1173, %v1228
    %v1250 = vmul.f32 %v1174, %v1232
    %v1251 = vmul.f32 %v1175, %v1228
    %v1252 = vmul.f32 %v1176, %v1232
    %v1253 = vmul.f32 %v1177, %v1228
    %v1254 = vmul.f32 %v1178, %v1232
    %v1255 = vmul.f32 %v1179, %v1228
    %v1256 = vmul.f32 %v1180, %v1232
    %v1257 = vmul.f32 %v1181, %v1228
    %v1258 = vmul.f32 %v1182, %v1232
    %v1259 = vmul.f32 %v1183, %v1228
    %v1260 = vmul.f32 %v1184, %v1232
    %v1261 = vmul.f32 %v1185, %v1228
    %v1262 = vmul.f32 %v1186, %v1232
    %v1263 = vmul.f32 %v1187, %v1228
    %v1264 = vmul.f32 %v1188, %v1232
    %v1265 = vmul.f32 %v1189, %v1228
    %v1266 = vmul.f32 %v1190, %v1232
    %v1267 = vmul.f32 %v1191, %v1228
    %v1268 = vmul.f32 %v1192, %v1232
    %v1269 = vmul.f32 %v1193, %v1228
    %v1270 = vmul.f32 %v1194, %v1232
    %v1271 = vmul.f32 %v1195, %v1228
    %v1272 = vmul.f32 %v1196, %v1232
    %v1273 = vmul.f32 %v1197, %v1228
    %v1274 = vmul.f32 %v1198, %v1232
    %v1275 = vmul.f32 %v1199, %v1228
    %v1276 = vmul.f32 %v1200, %v1232
    %v1277 = vmul.f32 %v1201, %v1228
    %v1278 = vmul.f32 %v1202, %v1232
    %v1279 = vmul.f32 %v1203, %v1228
    %v1280 = vmul.f32 %v1204, %v1232
    %v1281 = vmul.f32 %v1205, %v1228
    %v1282 = vmul.f32 %v1206, %v1232
    %v1283 = vmul.f32 %v1207, %v1228
    %v1284 = vmul.f32 %v1208, %v1232
    %v1285 = vmul.f32 %v1209, %v1228
    %v1286 = vmul.f32 %v1210, %v1232
    %v1287 = vmul.f32 %v1211, %v1228
    %v1288 = vmul.f32 %v1212, %v1232
    %v1289 = vmul.f32 %v1213, %v1228
    %v1290 = vmul.f32 %v1214, %v1232
    %v1291 = vmul.f32 %v1215, %v1228
    %v1292 = vmul.f32 %v1216, %v1232
    %v1293 = vmul.f32 %v1217, %v1228
    %v1294 = vmul.f32 %v1218, %v1232
    %v1295 = vmul.f32 %v1219, %v1228
    %v1296 = vmul.f32 %v1220, %v1232
    %v1297 = vmul.f32 %v1221, %v1228
    %v1298 = vmul.f32 %v1222, %v1232
    %v1299 = vld [vmem:[%s5] sm:$0x3]
    %v1301 = vlaneseq
    %v1302 = vshrl.u32 %v1301, 7
    %v1303 = vsub.s32 0, %v1302
    %v1304 = vrot.slane %v1299, %v1303
    %v1305 = vlaneseq
    %v1306 = vshrl.u32 %v1305, 7
    %v1307 = vsub.s32 1, %v1306
    %v1308 = vrot.slane %v1299, %v1307
    %v1311 = vmul.f32 %v1235, %v1304
    %v1312 = vmul.f32 %v1236, %v1308
    %v1313 = vmul.f32 %v1237, %v1304
    %v1314 = vmul.f32 %v1238, %v1308
    %v1315 = vmul.f32 %v1239, %v1304
    %v1316 = vmul.f32 %v1240, %v1308
    %v1317 = vmul.f32 %v1241, %v1304
    %v1318 = vmul.f32 %v1242, %v1308
    %v1319 = vmul.f32 %v1243, %v1304
    %v1320 = vmul.f32 %v1244, %v1308
    %v1321 = vmul.f32 %v1245, %v1304
    %v1322 = vmul.f32 %v1246, %v1308
    %v1323 = vmul.f32 %v1247, %v1304
    %v1324 = vmul.f32 %v1248, %v1308
    %v1325 = vmul.f32 %v1249, %v1304
    %v1326 = vmul.f32 %v1250, %v1308
    %v1327 = vmul.f32 %v1251, %v1304
    %v1328 = vmul.f32 %v1252, %v1308
    %v1329 = vmul.f32 %v1253, %v1304
    %v1330 = vmul.f32 %v1254, %v1308
    %v1331 = vmul.f32 %v1255, %v1304
    %v1332 = vmul.f32 %v1256, %v1308
    %v1333 = vmul.f32 %v1257, %v1304
    %v1334 = vmul.f32 %v1258, %v1308
    %v1335 = vmul.f32 %v1259, %v1304
    %v1336 = vmul.f32 %v1260, %v1308
    %v1337 = vmul.f32 %v1261, %v1304
    %v1338 = vmul.f32 %v1262, %v1308
    %v1339 = vmul.f32 %v1263, %v1304
    %v1340 = vmul.f32 %v1264, %v1308
    %v1341 = vmul.f32 %v1265, %v1304
    %v1342 = vmul.f32 %v1266, %v1308
    %v1343 = vmul.f32 %v1267, %v1304
    %v1344 = vmul.f32 %v1268, %v1308
    %v1345 = vmul.f32 %v1269, %v1304
    %v1346 = vmul.f32 %v1270, %v1308
    %v1347 = vmul.f32 %v1271, %v1304
    %v1348 = vmul.f32 %v1272, %v1308
    %v1349 = vmul.f32 %v1273, %v1304
    %v1350 = vmul.f32 %v1274, %v1308
    %v1351 = vmul.f32 %v1275, %v1304
    %v1352 = vmul.f32 %v1276, %v1308
    %v1353 = vmul.f32 %v1277, %v1304
    %v1354 = vmul.f32 %v1278, %v1308
    %v1355 = vmul.f32 %v1279, %v1304
    %v1356 = vmul.f32 %v1280, %v1308
    %v1357 = vmul.f32 %v1281, %v1304
    %v1358 = vmul.f32 %v1282, %v1308
    %v1359 = vmul.f32 %v1283, %v1304
    %v1360 = vmul.f32 %v1284, %v1308
    %v1361 = vmul.f32 %v1285, %v1304
    %v1362 = vmul.f32 %v1286, %v1308
    %v1363 = vmul.f32 %v1287, %v1304
    %v1364 = vmul.f32 %v1288, %v1308
    %v1365 = vmul.f32 %v1289, %v1304
    %v1366 = vmul.f32 %v1290, %v1308
    %v1367 = vmul.f32 %v1291, %v1304
    %v1368 = vmul.f32 %v1292, %v1308
    %v1369 = vmul.f32 %v1293, %v1304
    %v1370 = vmul.f32 %v1294, %v1308
    %v1371 = vmul.f32 %v1295, %v1304
    %v1372 = vmul.f32 %v1296, %v1308
    %v1373 = vmul.f32 %v1297, %v1304
    %v1374 = vmul.f32 %v1298, %v1308
    %v1375 = vld [vmem:[%s6] sm:$0x3]
    %v1377 = vlaneseq
    %v1378 = vshrl.u32 %v1377, 7
    %v1379 = vsub.s32 0, %v1378
    %v1380 = vrot.slane %v1375, %v1379
    %v1381 = vlaneseq
    %v1382 = vshrl.u32 %v1381, 7
    %v1383 = vsub.s32 1, %v1382
    %v1384 = vrot.slane %v1375, %v1383
    %v1387 = vadd.f32 %v1311, %v1380
    %v1388 = vadd.f32 %v1312, %v1384
    %v1389 = vadd.f32 %v1313, %v1380
    %v1390 = vadd.f32 %v1314, %v1384
    %v1391 = vadd.f32 %v1315, %v1380
    %v1392 = vadd.f32 %v1316, %v1384
    %v1393 = vadd.f32 %v1317, %v1380
    %v1394 = vadd.f32 %v1318, %v1384
    %v1395 = vadd.f32 %v1319, %v1380
    %v1396 = vadd.f32 %v1320, %v1384
    %v1397 = vadd.f32 %v1321, %v1380
    %v1398 = vadd.f32 %v1322, %v1384
    %v1399 = vadd.f32 %v1323, %v1380
    %v1400 = vadd.f32 %v1324, %v1384
    %v1401 = vadd.f32 %v1325, %v1380
    %v1402 = vadd.f32 %v1326, %v1384
    %v1403 = vadd.f32 %v1327, %v1380
    %v1404 = vadd.f32 %v1328, %v1384
    %v1405 = vadd.f32 %v1329, %v1380
    %v1406 = vadd.f32 %v1330, %v1384
    %v1407 = vadd.f32 %v1331, %v1380
    %v1408 = vadd.f32 %v1332, %v1384
    %v1409 = vadd.f32 %v1333, %v1380
    %v1410 = vadd.f32 %v1334, %v1384
    %v1411 = vadd.f32 %v1335, %v1380
    %v1412 = vadd.f32 %v1336, %v1384
    %v1413 = vadd.f32 %v1337, %v1380
    %v1414 = vadd.f32 %v1338, %v1384
    %v1415 = vadd.f32 %v1339, %v1380
    %v1416 = vadd.f32 %v1340, %v1384
    %v1417 = vadd.f32 %v1341, %v1380
    %v1418 = vadd.f32 %v1342, %v1384
    %v1419 = vadd.f32 %v1343, %v1380
    %v1420 = vadd.f32 %v1344, %v1384
    %v1421 = vadd.f32 %v1345, %v1380
    %v1422 = vadd.f32 %v1346, %v1384
    %v1423 = vadd.f32 %v1347, %v1380
    %v1424 = vadd.f32 %v1348, %v1384
    %v1425 = vadd.f32 %v1349, %v1380
    %v1426 = vadd.f32 %v1350, %v1384
    %v1427 = vadd.f32 %v1351, %v1380
    %v1428 = vadd.f32 %v1352, %v1384
    %v1429 = vadd.f32 %v1353, %v1380
    %v1430 = vadd.f32 %v1354, %v1384
    %v1431 = vadd.f32 %v1355, %v1380
    %v1432 = vadd.f32 %v1356, %v1384
    %v1433 = vadd.f32 %v1357, %v1380
    %v1434 = vadd.f32 %v1358, %v1384
    %v1435 = vadd.f32 %v1359, %v1380
    %v1436 = vadd.f32 %v1360, %v1384
    %v1437 = vadd.f32 %v1361, %v1380
    %v1438 = vadd.f32 %v1362, %v1384
    %v1439 = vadd.f32 %v1363, %v1380
    %v1440 = vadd.f32 %v1364, %v1384
    %v1441 = vadd.f32 %v1365, %v1380
    %v1442 = vadd.f32 %v1366, %v1384
    %v1443 = vadd.f32 %v1367, %v1380
    %v1444 = vadd.f32 %v1368, %v1384
    %v1445 = vadd.f32 %v1369, %v1380
    %v1446 = vadd.f32 %v1370, %v1384
    %v1447 = vadd.f32 %v1371, %v1380
    %v1448 = vadd.f32 %v1372, %v1384
    %v1449 = vadd.f32 %v1373, %v1380
    %v1450 = vadd.f32 %v1374, %v1384
    %v1451 = vld [vmem:[#allocation2] sm:$0xff]
    %v1452 = vld [vmem:[#allocation2 + $0x8] sm:$0xff]
    %v1453 = vld [vmem:[#allocation2 + $0x10] sm:$0xff]
    %v1454 = vld [vmem:[#allocation2 + $0x18] sm:$0xff]
    %v1455 = vld [vmem:[#allocation2 + $0x20] sm:$0xff]
    %v1456 = vld [vmem:[#allocation2 + $0x28] sm:$0xff]
    %v1457 = vld [vmem:[#allocation2 + $0x30] sm:$0xff]
    %v1458 = vld [vmem:[#allocation2 + $0x38] sm:$0xff]
    %v1459 = vld [vmem:[#allocation2 + $0x40] sm:$0xff]
    %v1460 = vld [vmem:[#allocation2 + $0x48] sm:$0xff]
    %v1461 = vld [vmem:[#allocation2 + $0x50] sm:$0xff]
    %v1462 = vld [vmem:[#allocation2 + $0x58] sm:$0xff]
    %v1463 = vld [vmem:[#allocation2 + $0x60] sm:$0xff]
    %v1464 = vld [vmem:[#allocation2 + $0x68] sm:$0xff]
    %v1465 = vld [vmem:[#allocation2 + $0x70] sm:$0xff]
    %v1466 = vld [vmem:[#allocation2 + $0x78] sm:$0xff]
    %v1467 = vld [vmem:[#allocation2 + $0x80] sm:$0xff]
    %v1468 = vld [vmem:[#allocation2 + $0x88] sm:$0xff]
    %v1469 = vld [vmem:[#allocation2 + $0x90] sm:$0xff]
    %v1470 = vld [vmem:[#allocation2 + $0x98] sm:$0xff]
    %v1471 = vld [vmem:[#allocation2 + $0xa0] sm:$0xff]
    %v1472 = vld [vmem:[#allocation2 + $0xa8] sm:$0xff]
    %v1473 = vld [vmem:[#allocation2 + $0xb0] sm:$0xff]
    %v1474 = vld [vmem:[#allocation2 + $0xb8] sm:$0xff]
    %v1475 = vld [vmem:[#allocation2 + $0xc0] sm:$0xff]
    %v1476 = vld [vmem:[#allocation2 + $0xc8] sm:$0xff]
    %v1477 = vld [vmem:[#allocation2 + $0xd0] sm:$0xff]
    %v1478 = vld [vmem:[#allocation2 + $0xd8] sm:$0xff]
    %v1479 = vld [vmem:[#allocation2 + $0xe0] sm:$0xff]
    %v1480 = vld [vmem:[#allocation2 + $0xe8] sm:$0xff]
    %v1481 = vld [vmem:[#allocation2 + $0xf0] sm:$0xff]
    %v1482 = vld [vmem:[#allocation2 + $0xf8] sm:$0xff]
    %v1483 = vld [vmem:[#allocation2 + $0x100] sm:$0xff]
    %v1484 = vld [vmem:[#allocation2 + $0x108] sm:$0xff]
    %v1485 = vld [vmem:[#allocation2 + $0x110] sm:$0xff]
    %v1486 = vld [vmem:[#allocation2 + $0x118] sm:$0xff]
    %v1487 = vld [vmem:[#allocation2 + $0x120] sm:$0xff]
    %v1488 = vld [vmem:[#allocation2 + $0x128] sm:$0xff]
    %v1489 = vld [vmem:[#allocation2 + $0x130] sm:$0xff]
    %v1490 = vld [vmem:[#allocation2 + $0x138] sm:$0xff]
    %v1491 = vld [vmem:[#allocation2 + $0x140] sm:$0xff]
    %v1492 = vld [vmem:[#allocation2 + $0x148] sm:$0xff]
    %v1493 = vld [vmem:[#allocation2 + $0x150] sm:$0xff]
    %v1494 = vld [vmem:[#allocation2 + $0x158] sm:$0xff]
    %v1495 = vld [vmem:[#allocation2 + $0x160] sm:$0xff]
    %v1496 = vld [vmem:[#allocation2 + $0x168] sm:$0xff]
    %v1497 = vld [vmem:[#allocation2 + $0x170] sm:$0xff]
    %v1498 = vld [vmem:[#allocation2 + $0x178] sm:$0xff]
    %v1499 = vld [vmem:[#allocation2 + $0x180] sm:$0xff]
    %v1500 = vld [vmem:[#allocation2 + $0x188] sm:$0xff]
    %v1501 = vld [vmem:[#allocation2 + $0x190] sm:$0xff]
    %v1502 = vld [vmem:[#allocation2 + $0x198] sm:$0xff]
    %v1503 = vld [vmem:[#allocation2 + $0x1a0] sm:$0xff]
    %v1504 = vld [vmem:[#allocation2 + $0x1a8] sm:$0xff]
    %v1505 = vld [vmem:[#allocation2 + $0x1b0] sm:$0xff]
    %v1506 = vld [vmem:[#allocation2 + $0x1b8] sm:$0xff]
    %v1507 = vld [vmem:[#allocation2 + $0x1c0] sm:$0xff]
    %v1508 = vld [vmem:[#allocation2 + $0x1c8] sm:$0xff]
    %v1509 = vld [vmem:[#allocation2 + $0x1d0] sm:$0xff]
    %v1510 = vld [vmem:[#allocation2 + $0x1d8] sm:$0xff]
    %v1511 = vld [vmem:[#allocation2 + $0x1e0] sm:$0xff]
    %v1512 = vld [vmem:[#allocation2 + $0x1e8] sm:$0xff]
    %v1513 = vld [vmem:[#allocation2 + $0x1f0] sm:$0xff]
    %v1514 = vld [vmem:[#allocation2 + $0x1f8] sm:$0xff]
    %v1515 = vld [vmem:[%s7] sm:$0xff]
    %v1516 = vld [vmem:[%s7 + $0x8] sm:$0xff]
    %v1517 = vld [vmem:[%s7 + $0x10] sm:$0xff]
    %v1518 = vld [vmem:[%s7 + $0x18] sm:$0xff]
    %v1519 = vld [vmem:[%s7 + $0x20] sm:$0xff]
    %v1520 = vld [vmem:[%s7 + $0x28] sm:$0xff]
    %v1521 = vld [vmem:[%s7 + $0x30] sm:$0xff]
    %v1522 = vld [vmem:[%s7 + $0x38] sm:$0xff]
    %v1523 = vld [vmem:[%s7 + $0x40] sm:$0xff]
    %v1524 = vld [vmem:[%s7 + $0x48] sm:$0xff]
    %v1525 = vld [vmem:[%s7 + $0x50] sm:$0xff]
    %v1526 = vld [vmem:[%s7 + $0x58] sm:$0xff]
    %v1527 = vld [vmem:[%s7 + $0x60] sm:$0xff]
    %v1528 = vld [vmem:[%s7 + $0x68] sm:$0xff]
    %v1529 = vld [vmem:[%s7 + $0x70] sm:$0xff]
    %v1530 = vld [vmem:[%s7 + $0x78] sm:$0xff]
    %v1531 = vld [vmem:[%s7 + $0x80] sm:$0xff]
    %v1532 = vld [vmem:[%s7 + $0x88] sm:$0xff]
    %v1533 = vld [vmem:[%s7 + $0x90] sm:$0xff]
    %v1534 = vld [vmem:[%s7 + $0x98] sm:$0xff]
    %v1535 = vld [vmem:[%s7 + $0xa0] sm:$0xff]
    %v1536 = vld [vmem:[%s7 + $0xa8] sm:$0xff]
    %v1537 = vld [vmem:[%s7 + $0xb0] sm:$0xff]
    %v1538 = vld [vmem:[%s7 + $0xb8] sm:$0xff]
    %v1539 = vld [vmem:[%s7 + $0xc0] sm:$0xff]
    %v1540 = vld [vmem:[%s7 + $0xc8] sm:$0xff]
    %v1541 = vld [vmem:[%s7 + $0xd0] sm:$0xff]
    %v1542 = vld [vmem:[%s7 + $0xd8] sm:$0xff]
    %v1543 = vld [vmem:[%s7 + $0xe0] sm:$0xff]
    %v1544 = vld [vmem:[%s7 + $0xe8] sm:$0xff]
    %v1545 = vld [vmem:[%s7 + $0xf0] sm:$0xff]
    %v1546 = vld [vmem:[%s7 + $0xf8] sm:$0xff]
    %v1547 = vld [vmem:[%s9] sm:$0x1]
    %v1549 = vlaneseq
    %v1550 = vshrl.u32 %v1549, 7
    %v1551 = vsub.s32 0, %v1550
    %v1552 = vrot.slane %v1547, %v1551
    %1554 = vmatprep.subr.mxu0 0.0
    %1555 = vmatpush1.msra.mxu0 %v1515
    %1556 = vmatprep.subr.mxu0 0.0
    %1557 = vmatpush1.msra.mxu0 %v1516
    %1558 = vmatprep.subr.mxu0 0.0
    %1559 = vmatpush1.msra.mxu0 %v1517
    %1560 = vmatprep.subr.mxu0 0.0
    %1561 = vmatpush1.msra.mxu0 %v1518
    %1562 = vmatprep.subr.mxu0 0.0
    %1563 = vmatpush1.msra.mxu0 %v1519
    %1564 = vmatprep.subr.mxu0 0.0
    %1565 = vmatpush1.msra.mxu0 %v1520
    %1566 = vmatprep.subr.mxu0 0.0
    %1567 = vmatpush1.msra.mxu0 %v1521
    %1568 = vmatprep.subr.mxu0 0.0
    %1569 = vmatpush1.msra.mxu0 %v1522
    %1570 = vmatprep.subr.mxu0 0.0
    %1571 = vmatpush1.msra.mxu0 %v1523
    %1572 = vmatprep.subr.mxu0 0.0
    %1573 = vmatpush1.msra.mxu0 %v1524
    %1574 = vmatprep.subr.mxu0 0.0
    %1575 = vmatpush1.msra.mxu0 %v1525
    %1576 = vmatprep.subr.mxu0 0.0
    %1577 = vmatpush1.msra.mxu0 %v1526
    %1578 = vmatprep.subr.mxu0 0.0
    %1579 = vmatpush1.msra.mxu0 %v1527
    %1580 = vmatprep.subr.mxu0 0.0
    %1581 = vmatpush1.msra.mxu0 %v1528
    %1582 = vmatprep.subr.mxu0 0.0
    %1583 = vmatpush1.msra.mxu0 %v1529
    %1584 = vmatprep.subr.mxu0 0.0
    %1585 = vmatpush1.msra.mxu0 %v1530
    %1586 = vmatprep.subr.mxu0 0.0
    %1587 = vmatpush1.msra.mxu0 %v1531
    %1588 = vmatprep.subr.mxu0 0.0
    %1589 = vmatpush1.msra.mxu0 %v1532
    %1590 = vmatprep.subr.mxu0 0.0
    %1591 = vmatpush1.msra.mxu0 %v1533
    %1592 = vmatprep.subr.mxu0 0.0
    %1593 = vmatpush1.msra.mxu0 %v1534
    %1594 = vmatprep.subr.mxu0 0.0
    %1595 = vmatpush1.msra.mxu0 %v1535
    %1596 = vmatprep.subr.mxu0 0.0
    %1597 = vmatpush1.msra.mxu0 %v1536
    %1598 = vmatprep.subr.mxu0 0.0
    %1599 = vmatpush1.msra.mxu0 %v1537
    %1600 = vmatprep.subr.mxu0 0.0
    %1601 = vmatpush1.msra.mxu0 %v1538
    %1602 = vmatprep.subr.mxu0 0.0
    %1603 = vmatpush1.msra.mxu0 %v1539
    %1604 = vmatprep.subr.mxu0 0.0
    %1605 = vmatpush1.msra.mxu0 %v1540
    %1606 = vmatprep.subr.mxu0 0.0
    %1607 = vmatpush1.msra.mxu0 %v1541
    %1608 = vmatprep.subr.mxu0 0.0
    %1609 = vmatpush1.msra.mxu0 %v1542
    %1610 = vmatprep.subr.mxu0 0.0
    %1611 = vmatpush1.msra.mxu0 %v1543
    %1612 = vmatprep.subr.mxu0 0.0
    %1613 = vmatpush1.msra.mxu0 %v1544
    %1614 = vmatprep.subr.mxu0 0.0
    %1615 = vmatpush1.msra.mxu0 %v1545
    %1616 = vmatprep.subr.mxu0 0.0
    %1617 = vmatpush1.msra.mxu0 %v1546
    %1618 = vmatprep.mubr.f32.mxu0 %v1452
    %1619 = vmatmul.mubr.f32.gmra.mrb[0].mxu0 %v1451
    %v1620 = vpop.f32.mrb[0].mxu0
    %v1621 = vadd.f32 %v1552, %v1620
    %v1622 = vpop.f32.mrb[0].mxu0
    %1623 = vmatprep.mubr.f32.mxu0 %v1454
    %1624 = vmatmul.mubr.f32.gmra.mrb[0].mxu0 %v1453
    %v1625 = vpop.f32.mrb[0].mxu0
    %v1626 = vadd.f32 %v1552, %v1625
    %v1627 = vpop.f32.mrb[0].mxu0
    %1628 = vmatprep.mubr.f32.mxu0 %v1456
    %1629 = vmatmul.mubr.f32.gmra.mrb[0].mxu0 %v1455
    %v1630 = vpop.f32.mrb[0].mxu0
    %v1631 = vadd.f32 %v1552, %v1630
    %v1632 = vpop.f32.mrb[0].mxu0
    %1633 = vmatprep.mubr.f32.mxu0 %v1458
    %1634 = vmatmul.mubr.f32.gmra.mrb[0].mxu0 %v1457
    %v1635 = vpop.f32.mrb[0].mxu0
    %v1636 = vadd.f32 %v1552, %v1635
    %v1637 = vpop.f32.mrb[0].mxu0
    %1638 = vmatprep.mubr.f32.mxu0 %v1460
    %1639 = vmatmul.mubr.f32.gmra.mrb[0].mxu0 %v1459
    %v1640 = vpop.f32.mrb[0].mxu0
    %v1641 = vadd.f32 %v1552, %v1640
    %v1642 = vpop.f32.mrb[0].mxu0
    %1643 = vmatprep.mubr.f32.mxu0 %v1462
    %1644 = vmatmul.mubr.f32.gmra.mrb[0].mxu0 %v1461
    %v1645 = vpop.f32.mrb[0].mxu0
    %v1646 = vadd.f32 %v1552, %v1645
    %v1647 = vpop.f32.mrb[0].mxu0
    %1648 = vmatprep.mubr.f32.mxu0 %v1464
    %1649 = vmatmul.mubr.f32.gmra.mrb[0].mxu0 %v1463
    %v1650 = vpop.f32.mrb[0].mxu0
    %v1651 = vadd.f32 %v1552, %v1650
    %v1652 = vpop.f32.mrb[0].mxu0
    %1653 = vmatprep.mubr.f32.mxu0 %v1466
    %1654 = vmatmul.mubr.f32.gmra.mrb[0].mxu0 %v1465
    %v1655 = vpop.f32.mrb[0].mxu0
    %v1656 = vadd.f32 %v1552, %v1655
    %v1657 = vpop.f32.mrb[0].mxu0
    %1658 = vmatprep.mubr.f32.mxu0 %v1468
    %1659 = vmatmul.mubr.f32.gmra.mrb[0].mxu0 %v1467
    %v1660 = vpop.f32.mrb[0].mxu0
    %v1661 = vadd.f32 %v1552, %v1660
    %v1662 = vpop.f32.mrb[0].mxu0
    %1663 = vmatprep.mubr.f32.mxu0 %v1470
    %1664 = vmatmul.mubr.f32.gmra.mrb[0].mxu0 %v1469
    %v1665 = vpop.f32.mrb[0].mxu0
    %v1666 = vadd.f32 %v1552, %v1665
    %v1667 = vpop.f32.mrb[0].mxu0
    %1668 = vmatprep.mubr.f32.mxu0 %v1472
    %1669 = vmatmul.mubr.f32.gmra.mrb[0].mxu0 %v1471
    %v1670 = vpop.f32.mrb[0].mxu0
    %v1671 = vadd.f32 %v1552, %v1670
    %v1672 = vpop.f32.mrb[0].mxu0
    %1673 = vmatprep.mubr.f32.mxu0 %v1474
    %1674 = vmatmul.mubr.f32.gmra.mrb[0].mxu0 %v1473
    %v1675 = vpop.f32.mrb[0].mxu0
    %v1676 = vadd.f32 %v1552, %v1675
    %v1677 = vpop.f32.mrb[0].mxu0
    %1678 = vmatprep.mubr.f32.mxu0 %v1476
    %1679 = vmatmul.mubr.f32.gmra.mrb[0].mxu0 %v1475
    %v1680 = vpop.f32.mrb[0].mxu0
    %v1681 = vadd.f32 %v1552, %v1680
    %v1682 = vpop.f32.mrb[0].mxu0
    %1683 = vmatprep.mubr.f32.mxu0 %v1478
    %1684 = vmatmul.mubr.f32.gmra.mrb[0].mxu0 %v1477
    %v1685 = vpop.f32.mrb[0].mxu0
    %v1686 = vadd.f32 %v1552, %v1685
    %v1687 = vpop.f32.mrb[0].mxu0
    %1688 = vmatprep.mubr.f32.mxu0 %v1480
    %1689 = vmatmul.mubr.f32.gmra.mrb[0].mxu0 %v1479
    %v1690 = vpop.f32.mrb[0].mxu0
    %v1691 = vadd.f32 %v1552, %v1690
    %v1692 = vpop.f32.mrb[0].mxu0
    %1693 = vmatprep.mubr.f32.mxu0 %v1482
    %1694 = vmatmul.mubr.f32.gmra.mrb[0].mxu0 %v1481
    %v1695 = vpop.f32.mrb[0].mxu0
    %v1696 = vadd.f32 %v1552, %v1695
    %v1697 = vpop.f32.mrb[0].mxu0
    %1698 = vmatprep.mubr.f32.mxu0 %v1484
    %1699 = vmatmul.mubr.f32.gmra.mrb[0].mxu0 %v1483
    %v1700 = vpop.f32.mrb[0].mxu0
    %v1701 = vadd.f32 %v1552, %v1700
    %v1702 = vpop.f32.mrb[0].mxu0
    %1703 = vmatprep.mubr.f32.mxu0 %v1486
    %1704 = vmatmul.mubr.f32.gmra.mrb[0].mxu0 %v1485
    %v1705 = vpop.f32.mrb[0].mxu0
    %v1706 = vadd.f32 %v1552, %v1705
    %v1707 = vpop.f32.mrb[0].mxu0
    %1708 = vmatprep.mubr.f32.mxu0 %v1488
    %1709 = vmatmul.mubr.f32.gmra.mrb[0].mxu0 %v1487
    %v1710 = vpop.f32.mrb[0].mxu0
    %v1711 = vadd.f32 %v1552, %v1710
    %v1712 = vpop.f32.mrb[0].mxu0
    %1713 = vmatprep.mubr.f32.mxu0 %v1490
    %1714 = vmatmul.mubr.f32.gmra.mrb[0].mxu0 %v1489
    %v1715 = vpop.f32.mrb[0].mxu0
    %v1716 = vadd.f32 %v1552, %v1715
    %v1717 = vpop.f32.mrb[0].mxu0
    %1718 = vmatprep.mubr.f32.mxu0 %v1492
    %1719 = vmatmul.mubr.f32.gmra.mrb[0].mxu0 %v1491
    %v1720 = vpop.f32.mrb[0].mxu0
    %v1721 = vadd.f32 %v1552, %v1720
    %v1722 = vpop.f32.mrb[0].mxu0
    %1723 = vmatprep.mubr.f32.mxu0 %v1494
    %1724 = vmatmul.mubr.f32.gmra.mrb[0].mxu0 %v1493
    %v1725 = vpop.f32.mrb[0].mxu0
    %v1726 = vadd.f32 %v1552, %v1725
    %v1727 = vpop.f32.mrb[0].mxu0
    %1728 = vmatprep.mubr.f32.mxu0 %v1496
    %1729 = vmatmul.mubr.f32.gmra.mrb[0].mxu0 %v1495
    %v1730 = vpop.f32.mrb[0].mxu0
    %v1731 = vadd.f32 %v1552, %v1730
    %v1732 = vpop.f32.mrb[0].mxu0
    %1733 = vmatprep.mubr.f32.mxu0 %v1498
    %1734 = vmatmul.mubr.f32.gmra.mrb[0].mxu0 %v1497
    %v1735 = vpop.f32.mrb[0].mxu0
    %v1736 = vadd.f32 %v1552, %v1735
    %v1737 = vpop.f32.mrb[0].mxu0
    %1738 = vmatprep.mubr.f32.mxu0 %v1500
    %1739 = vmatmul.mubr.f32.gmra.mrb[0].mxu0 %v1499
    %v1740 = vpop.f32.mrb[0].mxu0
    %v1741 = vadd.f32 %v1552, %v1740
    %v1742 = vpop.f32.mrb[0].mxu0
    %1743 = vmatprep.mubr.f32.mxu0 %v1502
    %1744 = vmatmul.mubr.f32.gmra.mrb[0].mxu0 %v1501
    %v1745 = vpop.f32.mrb[0].mxu0
    %v1746 = vadd.f32 %v1552, %v1745
    %v1747 = vpop.f32.mrb[0].mxu0
    %1748 = vmatprep.mubr.f32.mxu0 %v1504
    %1749 = vmatmul.mubr.f32.gmra.mrb[0].mxu0 %v1503
    %v1750 = vpop.f32.mrb[0].mxu0
    %v1751 = vadd.f32 %v1552, %v1750
    %v1752 = vpop.f32.mrb[0].mxu0
    %1753 = vmatprep.mubr.f32.mxu0 %v1506
    %1754 = vmatmul.mubr.f32.gmra.mrb[0].mxu0 %v1505
    %v1755 = vpop.f32.mrb[0].mxu0
    %v1756 = vadd.f32 %v1552, %v1755
    %v1757 = vpop.f32.mrb[0].mxu0
    %1758 = vmatprep.mubr.f32.mxu0 %v1508
    %1759 = vmatmul.mubr.f32.gmra.mrb[0].mxu0 %v1507
    %v1760 = vpop.f32.mrb[0].mxu0
    %v1761 = vadd.f32 %v1552, %v1760
    %v1762 = vpop.f32.mrb[0].mxu0
    %1763 = vmatprep.mubr.f32.mxu0 %v1510
    %1764 = vmatmul.mubr.f32.gmra.mrb[0].mxu0 %v1509
    %v1765 = vpop.f32.mrb[0].mxu0
    %v1766 = vadd.f32 %v1552, %v1765
    %v1767 = vpop.f32.mrb[0].mxu0
    %1768 = vmatprep.mubr.f32.mxu0 %v1512
    %1769 = vmatmul.mubr.f32.gmra.mrb[0].mxu0 %v1511
    %v1770 = vpop.f32.mrb[0].mxu0
    %v1771 = vadd.f32 %v1552, %v1770
    %v1772 = vpop.f32.mrb[0].mxu0
    %1773 = vmatprep.mubr.f32.mxu0 %v1514
    %1774 = vmatmul.mubr.f32.gmra.mrb[0].mxu0 %v1513
    %v1775 = vpop.f32.mrb[0].mxu0
    %v1776 = vadd.f32 %v1552, %v1775
    %v1777 = vpop.f32.mrb[0].mxu0
    %1778 = vdwg.mxu0
    %v1779 = vld [vmem:[%s8] sm:$0xff]
    %v1780 = vld [vmem:[%s8 + $0x8] sm:$0xff]
    %v1781 = vld [vmem:[%s8 + $0x10] sm:$0xff]
    %v1782 = vld [vmem:[%s8 + $0x18] sm:$0xff]
    %v1783 = vld [vmem:[%s8 + $0x20] sm:$0xff]
    %v1784 = vld [vmem:[%s8 + $0x28] sm:$0xff]
    %v1785 = vld [vmem:[%s8 + $0x30] sm:$0xff]
    %v1786 = vld [vmem:[%s8 + $0x38] sm:$0xff]
    %v1787 = vld [vmem:[%s8 + $0x40] sm:$0xff]
    %v1788 = vld [vmem:[%s8 + $0x48] sm:$0xff]
    %v1789 = vld [vmem:[%s8 + $0x50] sm:$0xff]
    %v1790 = vld [vmem:[%s8 + $0x58] sm:$0xff]
    %v1791 = vld [vmem:[%s8 + $0x60] sm:$0xff]
    %v1792 = vld [vmem:[%s8 + $0x68] sm:$0xff]
    %v1793 = vld [vmem:[%s8 + $0x70] sm:$0xff]
    %v1794 = vld [vmem:[%s8 + $0x78] sm:$0xff]
    %v1795 = vld [vmem:[%s8 + $0x80] sm:$0xff]
    %v1796 = vld [vmem:[%s8 + $0x88] sm:$0xff]
    %v1797 = vld [vmem:[%s8 + $0x90] sm:$0xff]
    %v1798 = vld [vmem:[%s8 + $0x98] sm:$0xff]
    %v1799 = vld [vmem:[%s8 + $0xa0] sm:$0xff]
    %v1800 = vld [vmem:[%s8 + $0xa8] sm:$0xff]
    %v1801 = vld [vmem:[%s8 + $0xb0] sm:$0xff]
    %v1802 = vld [vmem:[%s8 + $0xb8] sm:$0xff]
    %v1803 = vld [vmem:[%s8 + $0xc0] sm:$0xff]
    %v1804 = vld [vmem:[%s8 + $0xc8] sm:$0xff]
    %v1805 = vld [vmem:[%s8 + $0xd0] sm:$0xff]
    %v1806 = vld [vmem:[%s8 + $0xd8] sm:$0xff]
    %v1807 = vld [vmem:[%s8 + $0xe0] sm:$0xff]
    %v1808 = vld [vmem:[%s8 + $0xe8] sm:$0xff]
    %v1809 = vld [vmem:[%s8 + $0xf0] sm:$0xff]
    %v1810 = vld [vmem:[%s8 + $0xf8] sm:$0xff]
    %1811 = vmatprep.subr.mxu0 0.0
    %1812 = vmatpush1.msra.mxu0 %v1779
    %1813 = vmatprep.subr.mxu0 0.0
    %1814 = vmatpush1.msra.mxu0 %v1780
    %1815 = vmatprep.subr.mxu0 0.0
    %1816 = vmatpush1.msra.mxu0 %v1781
    %1817 = vmatprep.subr.mxu0 0.0
    %1818 = vmatpush1.msra.mxu0 %v1782
    %1819 = vmatprep.subr.mxu0 0.0
    %1820 = vmatpush1.msra.mxu0 %v1783
    %1821 = vmatprep.subr.mxu0 0.0
    %1822 = vmatpush1.msra.mxu0 %v1784
    %1823 = vmatprep.subr.mxu0 0.0
    %1824 = vmatpush1.msra.mxu0 %v1785
    %1825 = vmatprep.subr.mxu0 0.0
    %1826 = vmatpush1.msra.mxu0 %v1786
    %1827 = vmatprep.subr.mxu0 0.0
    %1828 = vmatpush1.msra.mxu0 %v1787
    %1829 = vmatprep.subr.mxu0 0.0
    %1830 = vmatpush1.msra.mxu0 %v1788
    %1831 = vmatprep.subr.mxu0 0.0
    %1832 = vmatpush1.msra.mxu0 %v1789
    %1833 = vmatprep.subr.mxu0 0.0
    %1834 = vmatpush1.msra.mxu0 %v1790
    %1835 = vmatprep.subr.mxu0 0.0
    %1836 = vmatpush1.msra.mxu0 %v1791
    %1837 = vmatprep.subr.mxu0 0.0
    %1838 = vmatpush1.msra.mxu0 %v1792
    %1839 = vmatprep.subr.mxu0 0.0
    %1840 = vmatpush1.msra.mxu0 %v1793
    %1841 = vmatprep.subr.mxu0 0.0
    %1842 = vmatpush1.msra.mxu0 %v1794
    %1843 = vmatprep.subr.mxu0 0.0
    %1844 = vmatpush1.msra.mxu0 %v1795
    %1845 = vmatprep.subr.mxu0 0.0
    %1846 = vmatpush1.msra.mxu0 %v1796
    %1847 = vmatprep.subr.mxu0 0.0
    %1848 = vmatpush1.msra.mxu0 %v1797
    %1849 = vmatprep.subr.mxu0 0.0
    %1850 = vmatpush1.msra.mxu0 %v1798
    %1851 = vmatprep.subr.mxu0 0.0
    %1852 = vmatpush1.msra.mxu0 %v1799
    %1853 = vmatprep.subr.mxu0 0.0
    %1854 = vmatpush1.msra.mxu0 %v1800
    %1855 = vmatprep.subr.mxu0 0.0
    %1856 = vmatpush1.msra.mxu0 %v1801
    %1857 = vmatprep.subr.mxu0 0.0
    %1858 = vmatpush1.msra.mxu0 %v1802
    %1859 = vmatprep.subr.mxu0 0.0
    %1860 = vmatpush1.msra.mxu0 %v1803
    %1861 = vmatprep.subr.mxu0 0.0
    %1862 = vmatpush1.msra.mxu0 %v1804
    %1863 = vmatprep.subr.mxu0 0.0
    %1864 = vmatpush1.msra.mxu0 %v1805
    %1865 = vmatprep.subr.mxu0 0.0
    %1866 = vmatpush1.msra.mxu0 %v1806
    %1867 = vmatprep.subr.mxu0 0.0
    %1868 = vmatpush1.msra.mxu0 %v1807
    %1869 = vmatprep.subr.mxu0 0.0
    %1870 = vmatpush1.msra.mxu0 %v1808
    %1871 = vmatprep.subr.mxu0 0.0
    %1872 = vmatpush1.msra.mxu0 %v1809
    %1873 = vmatprep.subr.mxu0 0.0
    %1874 = vmatpush1.msra.mxu0 %v1810
    %1875 = vmatprep.mubr.f32.mxu0 %v1388
    %1876 = vmatmul.mubr.f32.gmra.mrb[0].mxu0 %v1387
    %v1877 = vpop.f32.mrb[0].mxu0
    %v1878 = vadd.f32 0.0, %v1877
    %v1879 = vpop.f32.mrb[0].mxu0
    %1880 = vmatprep.mubr.f32.mxu0 %v1390
    %1881 = vmatmul.mubr.f32.gmra.mrb[0].mxu0 %v1389
    %v1882 = vpop.f32.mrb[0].mxu0
    %v1883 = vadd.f32 0.0, %v1882
    %v1884 = vpop.f32.mrb[0].mxu0
    %1885 = vmatprep.mubr.f32.mxu0 %v1392
    %1886 = vmatmul.mubr.f32.gmra.mrb[0].mxu0 %v1391
    %v1887 = vpop.f32.mrb[0].mxu0
    %v1888 = vadd.f32 0.0, %v1887
    %v1889 = vpop.f32.mrb[0].mxu0
    %1890 = vmatprep.mubr.f32.mxu0 %v1394
    %1891 = vmatmul.mubr.f32.gmra.mrb[0].mxu0 %v1393
    %v1892 = vpop.f32.mrb[0].mxu0
    %v1893 = vadd.f32 0.0, %v1892
    %v1894 = vpop.f32.mrb[0].mxu0
    %1895 = vmatprep.mubr.f32.mxu0 %v1396
    %1896 = vmatmul.mubr.f32.gmra.mrb[0].mxu0 %v1395
    %v1897 = vpop.f32.mrb[0].mxu0
    %v1898 = vadd.f32 0.0, %v1897
    %v1899 = vpop.f32.mrb[0].mxu0
    %1900 = vmatprep.mubr.f32.mxu0 %v1398
    %1901 = vmatmul.mubr.f32.gmra.mrb[0].mxu0 %v1397
    %v1902 = vpop.f32.mrb[0].mxu0
    %v1903 = vadd.f32 0.0, %v1902
    %v1904 = vpop.f32.mrb[0].mxu0
    %1905 = vmatprep.mubr.f32.mxu0 %v1400
    %1906 = vmatmul.mubr.f32.gmra.mrb[0].mxu0 %v1399
    %v1907 = vpop.f32.mrb[0].mxu0
    %v1908 = vadd.f32 0.0, %v1907
    %v1909 = vpop.f32.mrb[0].mxu0
    %1910 = vmatprep.mubr.f32.mxu0 %v1402
    %1911 = vmatmul.mubr.f32.gmra.mrb[0].mxu0 %v1401
    %v1912 = vpop.f32.mrb[0].mxu0
    %v1913 = vadd.f32 0.0, %v1912
    %v1914 = vpop.f32.mrb[0].mxu0
    %1915 = vmatprep.mubr.f32.mxu0 %v1404
    %1916 = vmatmul.mubr.f32.gmra.mrb[0].mxu0 %v1403
    %v1917 = vpop.f32.mrb[0].mxu0
    %v1918 = vadd.f32 0.0, %v1917
    %v1919 = vpop.f32.mrb[0].mxu0
    %1920 = vmatprep.mubr.f32.mxu0 %v1406
    %1921 = vmatmul.mubr.f32.gmra.mrb[0].mxu0 %v1405
    %v1922 = vpop.f32.mrb[0].mxu0
    %v1923 = vadd.f32 0.0, %v1922
    %v1924 = vpop.f32.mrb[0].mxu0
    %1925 = vmatprep.mubr.f32.mxu0 %v1408
    %1926 = vmatmul.mubr.f32.gmra.mrb[0].mxu0 %v1407
    %v1927 = vpop.f32.mrb[0].mxu0
    %v1928 = vadd.f32 0.0, %v1927
    %v1929 = vpop.f32.mrb[0].mxu0
    %1930 = vmatprep.mubr.f32.mxu0 %v1410
    %1931 = vmatmul.mubr.f32.gmra.mrb[0].mxu0 %v1409
    %v1932 = vpop.f32.mrb[0].mxu0
    %v1933 = vadd.f32 0.0, %v1932
    %v1934 = vpop.f32.mrb[0].mxu0
    %1935 = vmatprep.mubr.f32.mxu0 %v1412
    %1936 = vmatmul.mubr.f32.gmra.mrb[0].mxu0 %v1411
    %v1937 = vpop.f32.mrb[0].mxu0
    %v1938 = vadd.f32 0.0, %v1937
    %v1939 = vpop.f32.mrb[0].mxu0
    %1940 = vmatprep.mubr.f32.mxu0 %v1414
    %1941 = vmatmul.mubr.f32.gmra.mrb[0].mxu0 %v1413
    %v1942 = vpop.f32.mrb[0].mxu0
    %v1943 = vadd.f32 0.0, %v1942
    %v1944 = vpop.f32.mrb[0].mxu0
    %1945 = vmatprep.mubr.f32.mxu0 %v1416
    %1946 = vmatmul.mubr.f32.gmra.mrb[0].mxu0 %v1415
    %v1947 = vpop.f32.mrb[0].mxu0
    %v1948 = vadd.f32 0.0, %v1947
    %v1949 = vpop.f32.mrb[0].mxu0
    %1950 = vmatprep.mubr.f32.mxu0 %v1418
    %1951 = vmatmul.mubr.f32.gmra.mrb[0].mxu0 %v1417
    %v1952 = vpop.f32.mrb[0].mxu0
    %v1953 = vadd.f32 0.0, %v1952
    %v1954 = vpop.f32.mrb[0].mxu0
    %1955 = vmatprep.mubr.f32.mxu0 %v1420
    %1956 = vmatmul.mubr.f32.gmra.mrb[0].mxu0 %v1419
    %v1957 = vpop.f32.mrb[0].mxu0
    %v1958 = vadd.f32 0.0, %v1957
    %v1959 = vpop.f32.mrb[0].mxu0
    %1960 = vmatprep.mubr.f32.mxu0 %v1422
    %1961 = vmatmul.mubr.f32.gmra.mrb[0].mxu0 %v1421
    %v1962 = vpop.f32.mrb[0].mxu0
    %v1963 = vadd.f32 0.0, %v1962
    %v1964 = vpop.f32.mrb[0].mxu0
    %1965 = vmatprep.mubr.f32.mxu0 %v1424
    %1966 = vmatmul.mubr.f32.gmra.mrb[0].mxu0 %v1423
    %v1967 = vpop.f32.mrb[0].mxu0
    %v1968 = vadd.f32 0.0, %v1967
    %v1969 = vpop.f32.mrb[0].mxu0
    %1970 = vmatprep.mubr.f32.mxu0 %v1426
    %1971 = vmatmul.mubr.f32.gmra.mrb[0].mxu0 %v1425
    %v1972 = vpop.f32.mrb[0].mxu0
    %v1973 = vadd.f32 0.0, %v1972
    %v1974 = vpop.f32.mrb[0].mxu0
    %1975 = vmatprep.mubr.f32.mxu0 %v1428
    %1976 = vmatmul.mubr.f32.gmra.mrb[0].mxu0 %v1427
    %v1977 = vpop.f32.mrb[0].mxu0
    %v1978 = vadd.f32 0.0, %v1977
    %v1979 = vpop.f32.mrb[0].mxu0
    %1980 = vmatprep.mubr.f32.mxu0 %v1430
    %1981 = vmatmul.mubr.f32.gmra.mrb[0].mxu0 %v1429
    %v1982 = vpop.f32.mrb[0].mxu0
    %v1983 = vadd.f32 0.0, %v1982
    %v1984 = vpop.f32.mrb[0].mxu0
    %1985 = vmatprep.mubr.f32.mxu0 %v1432
    %1986 = vmatmul.mubr.f32.gmra.mrb[0].mxu0 %v1431
    %v1987 = vpop.f32.mrb[0].mxu0
    %v1988 = vadd.f32 0.0, %v1987
    %v1989 = vpop.f32.mrb[0].mxu0
    %1990 = vmatprep.mubr.f32.mxu0 %v1434
    %1991 = vmatmul.mubr.f32.gmra.mrb[0].mxu0 %v1433
    %v1992 = vpop.f32.mrb[0].mxu0
    %v1993 = vadd.f32 0.0, %v1992
    %v1994 = vpop.f32.mrb[0].mxu0
    %1995 = vmatprep.mubr.f32.mxu0 %v1436
    %1996 = vmatmul.mubr.f32.gmra.mrb[0].mxu0 %v1435
    %v1997 = vpop.f32.mrb[0].mxu0
    %v1998 = vadd.f32 0.0, %v1997
    %v1999 = vpop.f32.mrb[0].mxu0
    %2000 = vmatprep.mubr.f32.mxu0 %v1438
    %2001 = vmatmul.mubr.f32.gmra.mrb[0].mxu0 %v1437
    %v2002 = vpop.f32.mrb[0].mxu0
    %v2003 = vadd.f32 0.0, %v2002
    %v2004 = vpop.f32.mrb[0].mxu0
    %2005 = vmatprep.mubr.f32.mxu0 %v1440
    %2006 = vmatmul.mubr.f32.gmra.mrb[0].mxu0 %v1439
    %v2007 = vpop.f32.mrb[0].mxu0
    %v2008 = vadd.f32 0.0, %v2007
    %v2009 = vpop.f32.mrb[0].mxu0
    %2010 = vmatprep.mubr.f32.mxu0 %v1442
    %2011 = vmatmul.mubr.f32.gmra.mrb[0].mxu0 %v1441
    %v2012 = vpop.f32.mrb[0].mxu0
    %v2013 = vadd.f32 0.0, %v2012
    %v2014 = vpop.f32.mrb[0].mxu0
    %2015 = vmatprep.mubr.f32.mxu0 %v1444
    %2016 = vmatmul.mubr.f32.gmra.mrb[0].mxu0 %v1443
    %v2017 = vpop.f32.mrb[0].mxu0
    %v2018 = vadd.f32 0.0, %v2017
    %v2019 = vpop.f32.mrb[0].mxu0
    %2020 = vmatprep.mubr.f32.mxu0 %v1446
    %2021 = vmatmul.mubr.f32.gmra.mrb[0].mxu0 %v1445
    %v2022 = vpop.f32.mrb[0].mxu0
    %v2023 = vadd.f32 0.0, %v2022
    %v2024 = vpop.f32.mrb[0].mxu0
    %2025 = vmatprep.mubr.f32.mxu0 %v1448
    %2026 = vmatmul.mubr.f32.gmra.mrb[0].mxu0 %v1447
    %v2027 = vpop.f32.mrb[0].mxu0
    %v2028 = vadd.f32 0.0, %v2027
    %v2029 = vpop.f32.mrb[0].mxu0
    %2030 = vmatprep.mubr.f32.mxu0 %v1450
    %2031 = vmatmul.mubr.f32.gmra.mrb[0].mxu0 %v1449
    %v2032 = vpop.f32.mrb[0].mxu0
    %v2033 = vadd.f32 0.0, %v2032
    %v2034 = vpop.f32.mrb[0].mxu0
    %2035 = vdwg.mxu0
    %v2036 = vadd.f32 %v1621, %v1878
    %v2037 = vadd.f32 %v1626, %v1883
    %v2038 = vadd.f32 %v1631, %v1888
    %v2039 = vadd.f32 %v1636, %v1893
    %v2040 = vadd.f32 %v1641, %v1898
    %v2041 = vadd.f32 %v1646, %v1903
    %v2042 = vadd.f32 %v1651, %v1908
    %v2043 = vadd.f32 %v1656, %v1913
    %v2044 = vadd.f32 %v1661, %v1918
    %v2045 = vadd.f32 %v1666, %v1923
    %v2046 = vadd.f32 %v1671, %v1928
    %v2047 = vadd.f32 %v1676, %v1933
    %v2048 = vadd.f32 %v1681, %v1938
    %v2049 = vadd.f32 %v1686, %v1943
    %v2050 = vadd.f32 %v1691, %v1948
    %v2051 = vadd.f32 %v1696, %v1953
    %v2052 = vadd.f32 %v1701, %v1958
    %v2053 = vadd.f32 %v1706, %v1963
    %v2054 = vadd.f32 %v1711, %v1968
    %v2055 = vadd.f32 %v1716, %v1973
    %v2056 = vadd.f32 %v1721, %v1978
    %v2057 = vadd.f32 %v1726, %v1983
    %v2058 = vadd.f32 %v1731, %v1988
    %v2059 = vadd.f32 %v1736, %v1993
    %v2060 = vadd.f32 %v1741, %v1998
    %v2061 = vadd.f32 %v1746, %v2003
    %v2062 = vadd.f32 %v1751, %v2008
    %v2063 = vadd.f32 %v1756, %v2013
    %v2064 = vadd.f32 %v1761, %v2018
    %v2065 = vadd.f32 %v1766, %v2023
    %v2066 = vadd.f32 %v1771, %v2028
    %v2067 = vadd.f32 %v1776, %v2033
    %vm2068 = vcmp.gt.f32.partialorder %v2036, 0.0
    %vm2069 = vcmp.gt.f32.partialorder %v2037, 0.0
    %vm2070 = vcmp.gt.f32.partialorder %v2038, 0.0
    %vm2071 = vcmp.gt.f32.partialorder %v2039, 0.0
    %vm2072 = vcmp.gt.f32.partialorder %v2040, 0.0
    %vm2073 = vcmp.gt.f32.partialorder %v2041, 0.0
    %vm2074 = vcmp.gt.f32.partialorder %v2042, 0.0
    %vm2075 = vcmp.gt.f32.partialorder %v2043, 0.0
    %vm2076 = vcmp.gt.f32.partialorder %v2044, 0.0
    %vm2077 = vcmp.gt.f32.partialorder %v2045, 0.0
    %vm2078 = vcmp.gt.f32.partialorder %v2046, 0.0
    %vm2079 = vcmp.gt.f32.partialorder %v2047, 0.0
    %vm2080 = vcmp.gt.f32.partialorder %v2048, 0.0
    %vm2081 = vcmp.gt.f32.partialorder %v2049, 0.0
    %vm2082 = vcmp.gt.f32.partialorder %v2050, 0.0
    %vm2083 = vcmp.gt.f32.partialorder %v2051, 0.0
    %vm2084 = vcmp.gt.f32.partialorder %v2052, 0.0
    %vm2085 = vcmp.gt.f32.partialorder %v2053, 0.0
    %vm2086 = vcmp.gt.f32.partialorder %v2054, 0.0
    %vm2087 = vcmp.gt.f32.partialorder %v2055, 0.0
    %vm2088 = vcmp.gt.f32.partialorder %v2056, 0.0
    %vm2089 = vcmp.gt.f32.partialorder %v2057, 0.0
    %vm2090 = vcmp.gt.f32.partialorder %v2058, 0.0
    %vm2091 = vcmp.gt.f32.partialorder %v2059, 0.0
    %vm2092 = vcmp.gt.f32.partialorder %v2060, 0.0
    %vm2093 = vcmp.gt.f32.partialorder %v2061, 0.0
    %vm2094 = vcmp.gt.f32.partialorder %v2062, 0.0
    %vm2095 = vcmp.gt.f32.partialorder %v2063, 0.0
    %vm2096 = vcmp.gt.f32.partialorder %v2064, 0.0
    %vm2097 = vcmp.gt.f32.partialorder %v2065, 0.0
    %vm2098 = vcmp.gt.f32.partialorder %v2066, 0.0
    %vm2099 = vcmp.gt.f32.partialorder %v2067, 0.0
    %v2100 = vmul.f32 %v2036, 0.01
    %v2101 = vmul.f32 %v2037, 0.01
    %v2102 = vmul.f32 %v2038, 0.01
    %v2103 = vmul.f32 %v2039, 0.01
    %v2104 = vmul.f32 %v2040, 0.01
    %v2105 = vmul.f32 %v2041, 0.01
    %v2106 = vmul.f32 %v2042, 0.01
    %v2107 = vmul.f32 %v2043, 0.01
    %v2108 = vmul.f32 %v2044, 0.01
    %v2109 = vmul.f32 %v2045, 0.01
    %v2110 = vmul.f32 %v2046, 0.01
    %v2111 = vmul.f32 %v2047, 0.01
    %v2112 = vmul.f32 %v2048, 0.01
    %v2113 = vmul.f32 %v2049, 0.01
    %v2114 = vmul.f32 %v2050, 0.01
    %v2115 = vmul.f32 %v2051, 0.01
    %v2116 = vmul.f32 %v2052, 0.01
    %v2117 = vmul.f32 %v2053, 0.01
    %v2118 = vmul.f32 %v2054, 0.01
    %v2119 = vmul.f32 %v2055, 0.01
    %v2120 = vmul.f32 %v2056, 0.01
    %v2121 = vmul.f32 %v2057, 0.01
    %v2122 = vmul.f32 %v2058, 0.01
    %v2123 = vmul.f32 %v2059, 0.01
    %v2124 = vmul.f32 %v2060, 0.01
    %v2125 = vmul.f32 %v2061, 0.01
    %v2126 = vmul.f32 %v2062, 0.01
    %v2127 = vmul.f32 %v2063, 0.01
    %v2128 = vmul.f32 %v2064, 0.01
    %v2129 = vmul.f32 %v2065, 0.01
    %v2130 = vmul.f32 %v2066, 0.01
    %v2131 = vmul.f32 %v2067, 0.01
    %v2132 = vsel %vm2068, %v2036, %v2100
    %v2133 = vsel %vm2069, %v2037, %v2101
    %v2134 = vsel %vm2070, %v2038, %v2102
    %v2135 = vsel %vm2071, %v2039, %v2103
    %v2136 = vsel %vm2072, %v2040, %v2104
    %v2137 = vsel %vm2073, %v2041, %v2105
    %v2138 = vsel %vm2074, %v2042, %v2106
    %v2139 = vsel %vm2075, %v2043, %v2107
    %v2140 = vsel %vm2076, %v2044, %v2108
    %v2141 = vsel %vm2077, %v2045, %v2109
    %v2142 = vsel %vm2078, %v2046, %v2110
    %v2143 = vsel %vm2079, %v2047, %v2111
    %v2144 = vsel %vm2080, %v2048, %v2112
    %v2145 = vsel %vm2081, %v2049, %v2113
    %v2146 = vsel %vm2082, %v2050, %v2114
    %v2147 = vsel %vm2083, %v2051, %v2115
    %v2148 = vsel %vm2084, %v2052, %v2116
    %v2149 = vsel %vm2085, %v2053, %v2117
    %v2150 = vsel %vm2086, %v2054, %v2118
    %v2151 = vsel %vm2087, %v2055, %v2119
    %v2152 = vsel %vm2088, %v2056, %v2120
    %v2153 = vsel %vm2089, %v2057, %v2121
    %v2154 = vsel %vm2090, %v2058, %v2122
    %v2155 = vsel %vm2091, %v2059, %v2123
    %v2156 = vsel %vm2092, %v2060, %v2124
    %v2157 = vsel %vm2093, %v2061, %v2125
    %v2158 = vsel %vm2094, %v2062, %v2126
    %v2159 = vsel %vm2095, %v2063, %v2127
    %v2160 = vsel %vm2096, %v2064, %v2128
    %v2161 = vsel %vm2097, %v2065, %v2129
    %v2162 = vsel %vm2098, %v2066, %v2130
    %v2163 = vsel %vm2099, %v2067, %v2131
    %v2164 = vlaneseq
    %v2165 = vand.u32 %v2164, 127
    %vm2166 = vcmp.lt.s32.totalorder %v2165, 8
    %v2167 = vsel %vm2166, %v2132, -inf
    %v2168 = vsel %vm2166, %v2133, -inf
    %v2169 = vsel %vm2166, %v2134, -inf
    %v2170 = vsel %vm2166, %v2135, -inf
    %v2171 = vsel %vm2166, %v2136, -inf
    %v2172 = vsel %vm2166, %v2137, -inf
    %v2173 = vsel %vm2166, %v2138, -inf
    %v2174 = vsel %vm2166, %v2139, -inf
    %v2175 = vsel %vm2166, %v2140, -inf
    %v2176 = vsel %vm2166, %v2141, -inf
    %v2177 = vsel %vm2166, %v2142, -inf
    %v2178 = vsel %vm2166, %v2143, -inf
    %v2179 = vsel %vm2166, %v2144, -inf
    %v2180 = vsel %vm2166, %v2145, -inf
    %v2181 = vsel %vm2166, %v2146, -inf
    %v2182 = vsel %vm2166, %v2147, -inf
    %v2183 = vsel %vm2166, %v2148, -inf
    %v2184 = vsel %vm2166, %v2149, -inf
    %v2185 = vsel %vm2166, %v2150, -inf
    %v2186 = vsel %vm2166, %v2151, -inf
    %v2187 = vsel %vm2166, %v2152, -inf
    %v2188 = vsel %vm2166, %v2153, -inf
    %v2189 = vsel %vm2166, %v2154, -inf
    %v2190 = vsel %vm2166, %v2155, -inf
    %v2191 = vsel %vm2166, %v2156, -inf
    %v2192 = vsel %vm2166, %v2157, -inf
    %v2193 = vsel %vm2166, %v2158, -inf
    %v2194 = vsel %vm2166, %v2159, -inf
    %v2195 = vsel %vm2166, %v2160, -inf
    %v2196 = vsel %vm2166, %v2161, -inf
    %v2197 = vsel %vm2166, %v2162, -inf
    %v2198 = vsel %vm2166, %v2163, -inf
    %2199 = vmax.xlane.f32.xlu0 %v2167
    %v2200 = vpop.xlane.xlu0 %2199
    %2201 = vmax.xlane.f32.xlu0 %v2168
    %v2202 = vpop.xlane.xlu0 %2201
    %2203 = vmax.xlane.f32.xlu0 %v2169
    %v2204 = vpop.xlane.xlu0 %2203
    %2205 = vmax.xlane.f32.xlu0 %v2170
    %v2206 = vpop.xlane.xlu0 %2205
    %2207 = vmax.xlane.f32.xlu0 %v2171
    %v2208 = vpop.xlane.xlu0 %2207
    %2209 = vmax.xlane.f32.xlu0 %v2172
    %v2210 = vpop.xlane.xlu0 %2209
    %2211 = vmax.xlane.f32.xlu0 %v2173
    %v2212 = vpop.xlane.xlu0 %2211
    %2213 = vmax.xlane.f32.xlu0 %v2174
    %v2214 = vpop.xlane.xlu0 %2213
    %2215 = vmax.xlane.f32.xlu0 %v2175
    %v2216 = vpop.xlane.xlu0 %2215
    %2217 = vmax.xlane.f32.xlu0 %v2176
    %v2218 = vpop.xlane.xlu0 %2217
    %2219 = vmax.xlane.f32.xlu0 %v2177
    %v2220 = vpop.xlane.xlu0 %2219
    %2221 = vmax.xlane.f32.xlu0 %v2178
    %v2222 = vpop.xlane.xlu0 %2221
    %2223 = vmax.xlane.f32.xlu0 %v2179
    %v2224 = vpop.xlane.xlu0 %2223
    %2225 = vmax.xlane.f32.xlu0 %v2180
    %v2226 = vpop.xlane.xlu0 %2225
    %2227 = vmax.xlane.f32.xlu0 %v2181
    %v2228 = vpop.xlane.xlu0 %2227
    %2229 = vmax.xlane.f32.xlu0 %v2182
    %v2230 = vpop.xlane.xlu0 %2229
    %2231 = vmax.xlane.f32.xlu0 %v2183
    %v2232 = vpop.xlane.xlu0 %2231
    %2233 = vmax.xlane.f32.xlu0 %v2184
    %v2234 = vpop.xlane.xlu0 %2233
    %2235 = vmax.xlane.f32.xlu0 %v2185
    %v2236 = vpop.xlane.xlu0 %2235
    %2237 = vmax.xlane.f32.xlu0 %v2186
    %v2238 = vpop.xlane.xlu0 %2237
    %2239 = vmax.xlane.f32.xlu0 %v2187
    %v2240 = vpop.xlane.xlu0 %2239
    %2241 = vmax.xlane.f32.xlu0 %v2188
    %v2242 = vpop.xlane.xlu0 %2241
    %2243 = vmax.xlane.f32.xlu0 %v2189
    %v2244 = vpop.xlane.xlu0 %2243
    %2245 = vmax.xlane.f32.xlu0 %v2190
    %v2246 = vpop.xlane.xlu0 %2245
    %2247 = vmax.xlane.f32.xlu0 %v2191
    %v2248 = vpop.xlane.xlu0 %2247
    %2249 = vmax.xlane.f32.xlu0 %v2192
    %v2250 = vpop.xlane.xlu0 %2249
    %2251 = vmax.xlane.f32.xlu0 %v2193
    %v2252 = vpop.xlane.xlu0 %2251
    %2253 = vmax.xlane.f32.xlu0 %v2194
    %v2254 = vpop.xlane.xlu0 %2253
    %2255 = vmax.xlane.f32.xlu0 %v2195
    %v2256 = vpop.xlane.xlu0 %2255
    %2257 = vmax.xlane.f32.xlu0 %v2196
    %v2258 = vpop.xlane.xlu0 %2257
    %2259 = vmax.xlane.f32.xlu0 %v2197
    %v2260 = vpop.xlane.xlu0 %2259
    %2261 = vmax.xlane.f32.xlu0 %v2198
    %v2262 = vpop.xlane.xlu0 %2261
    %v2263 = vsub.f32 %v2167, %v2200
    %v2264 = vsub.f32 %v2168, %v2202
    %v2265 = vsub.f32 %v2169, %v2204
    %v2266 = vsub.f32 %v2170, %v2206
    %v2267 = vsub.f32 %v2171, %v2208
    %v2268 = vsub.f32 %v2172, %v2210
    %v2269 = vsub.f32 %v2173, %v2212
    %v2270 = vsub.f32 %v2174, %v2214
    %v2271 = vsub.f32 %v2175, %v2216
    %v2272 = vsub.f32 %v2176, %v2218
    %v2273 = vsub.f32 %v2177, %v2220
    %v2274 = vsub.f32 %v2178, %v2222
    %v2275 = vsub.f32 %v2179, %v2224
    %v2276 = vsub.f32 %v2180, %v2226
    %v2277 = vsub.f32 %v2181, %v2228
    %v2278 = vsub.f32 %v2182, %v2230
    %v2279 = vsub.f32 %v2183, %v2232
    %v2280 = vsub.f32 %v2184, %v2234
    %v2281 = vsub.f32 %v2185, %v2236
    %v2282 = vsub.f32 %v2186, %v2238
    %v2283 = vsub.f32 %v2187, %v2240
    %v2284 = vsub.f32 %v2188, %v2242
    %v2285 = vsub.f32 %v2189, %v2244
    %v2286 = vsub.f32 %v2190, %v2246
    %v2287 = vsub.f32 %v2191, %v2248
    %v2288 = vsub.f32 %v2192, %v2250
    %v2289 = vsub.f32 %v2193, %v2252
    %v2290 = vsub.f32 %v2194, %v2254
    %v2291 = vsub.f32 %v2195, %v2256
    %v2292 = vsub.f32 %v2196, %v2258
    %v2293 = vsub.f32 %v2197, %v2260
    %v2294 = vsub.f32 %v2198, %v2262
    %v2295 = vmul.f32 %v2263, 1.442695
    %v2296 = vpow.pop %v2295
    %v2297 = vmul.f32 %v2264, 1.442695
    %v2298 = vpow.pop %v2297
    %v2299 = vmul.f32 %v2265, 1.442695
    %v2300 = vpow.pop %v2299
    %v2301 = vmul.f32 %v2266, 1.442695
    %v2302 = vpow.pop %v2301
    %v2303 = vmul.f32 %v2267, 1.442695
    %v2304 = vpow.pop %v2303
    %v2305 = vmul.f32 %v2268, 1.442695
    %v2306 = vpow.pop %v2305
    %v2307 = vmul.f32 %v2269, 1.442695
    %v2308 = vpow.pop %v2307
    %v2309 = vmul.f32 %v2270, 1.442695
    %v2310 = vpow.pop %v2309
    %v2311 = vmul.f32 %v2271, 1.442695
    %v2312 = vpow.pop %v2311
    %v2313 = vmul.f32 %v2272, 1.442695
    %v2314 = vpow.pop %v2313
    %v2315 = vmul.f32 %v2273, 1.442695
    %v2316 = vpow.pop %v2315
    %v2317 = vmul.f32 %v2274, 1.442695
    %v2318 = vpow.pop %v2317
    %v2319 = vmul.f32 %v2275, 1.442695
    %v2320 = vpow.pop %v2319
    %v2321 = vmul.f32 %v2276, 1.442695
    %v2322 = vpow.pop %v2321
    %v2323 = vmul.f32 %v2277, 1.442695
    %v2324 = vpow.pop %v2323
    %v2325 = vmul.f32 %v2278, 1.442695
    %v2326 = vpow.pop %v2325
    %v2327 = vmul.f32 %v2279, 1.442695
    %v2328 = vpow.pop %v2327
    %v2329 = vmul.f32 %v2280, 1.442695
    %v2330 = vpow.pop %v2329
    %v2331 = vmul.f32 %v2281, 1.442695
    %v2332 = vpow.pop %v2331
    %v2333 = vmul.f32 %v2282, 1.442695
    %v2334 = vpow.pop %v2333
    %v2335 = vmul.f32 %v2283, 1.442695
    %v2336 = vpow.pop %v2335
    %v2337 = vmul.f32 %v2284, 1.442695
    %v2338 = vpow.pop %v2337
    %v2339 = vmul.f32 %v2285, 1.442695
    %v2340 = vpow.pop %v2339
    %v2341 = vmul.f32 %v2286, 1.442695
    %v2342 = vpow.pop %v2341
    %v2343 = vmul.f32 %v2287, 1.442695
    %v2344 = vpow.pop %v2343
    %v2345 = vmul.f32 %v2288, 1.442695
    %v2346 = vpow.pop %v2345
    %v2347 = vmul.f32 %v2289, 1.442695
    %v2348 = vpow.pop %v2347
    %v2349 = vmul.f32 %v2290, 1.442695
    %v2350 = vpow.pop %v2349
    %v2351 = vmul.f32 %v2291, 1.442695
    %v2352 = vpow.pop %v2351
    %v2353 = vmul.f32 %v2292, 1.442695
    %v2354 = vpow.pop %v2353
    %v2355 = vmul.f32 %v2293, 1.442695
    %v2356 = vpow.pop %v2355
    %v2357 = vmul.f32 %v2294, 1.442695
    %v2358 = vpow.pop %v2357
    %2359 = vadd.xlane.f32.xlu0 %v2296
    %v2360 = vpop.xlane.xlu0 %2359
    %2361 = vadd.xlane.f32.xlu0 %v2298
    %v2362 = vpop.xlane.xlu0 %2361
    %2363 = vadd.xlane.f32.xlu0 %v2300
    %v2364 = vpop.xlane.xlu0 %2363
    %2365 = vadd.xlane.f32.xlu0 %v2302
    %v2366 = vpop.xlane.xlu0 %2365
    %2367 = vadd.xlane.f32.xlu0 %v2304
    %v2368 = vpop.xlane.xlu0 %2367
    %2369 = vadd.xlane.f32.xlu0 %v2306
    %v2370 = vpop.xlane.xlu0 %2369
    %2371 = vadd.xlane.f32.xlu0 %v2308
    %v2372 = vpop.xlane.xlu0 %2371
    %2373 = vadd.xlane.f32.xlu0 %v2310
    %v2374 = vpop.xlane.xlu0 %2373
    %2375 = vadd.xlane.f32.xlu0 %v2312
    %v2376 = vpop.xlane.xlu0 %2375
    %2377 = vadd.xlane.f32.xlu0 %v2314
    %v2378 = vpop.xlane.xlu0 %2377
    %2379 = vadd.xlane.f32.xlu0 %v2316
    %v2380 = vpop.xlane.xlu0 %2379
    %2381 = vadd.xlane.f32.xlu0 %v2318
    %v2382 = vpop.xlane.xlu0 %2381
    %2383 = vadd.xlane.f32.xlu0 %v2320
    %v2384 = vpop.xlane.xlu0 %2383
    %2385 = vadd.xlane.f32.xlu0 %v2322
    %v2386 = vpop.xlane.xlu0 %2385
    %2387 = vadd.xlane.f32.xlu0 %v2324
    %v2388 = vpop.xlane.xlu0 %2387
    %2389 = vadd.xlane.f32.xlu0 %v2326
    %v2390 = vpop.xlane.xlu0 %2389
    %2391 = vadd.xlane.f32.xlu0 %v2328
    %v2392 = vpop.xlane.xlu0 %2391
    %2393 = vadd.xlane.f32.xlu0 %v2330
    %v2394 = vpop.xlane.xlu0 %2393
    %2395 = vadd.xlane.f32.xlu0 %v2332
    %v2396 = vpop.xlane.xlu0 %2395
    %2397 = vadd.xlane.f32.xlu0 %v2334
    %v2398 = vpop.xlane.xlu0 %2397
    %2399 = vadd.xlane.f32.xlu0 %v2336
    %v2400 = vpop.xlane.xlu0 %2399
    %2401 = vadd.xlane.f32.xlu0 %v2338
    %v2402 = vpop.xlane.xlu0 %2401
    %2403 = vadd.xlane.f32.xlu0 %v2340
    %v2404 = vpop.xlane.xlu0 %2403
    %2405 = vadd.xlane.f32.xlu0 %v2342
    %v2406 = vpop.xlane.xlu0 %2405
    %2407 = vadd.xlane.f32.xlu0 %v2344
    %v2408 = vpop.xlane.xlu0 %2407
    %2409 = vadd.xlane.f32.xlu0 %v2346
    %v2410 = vpop.xlane.xlu0 %2409
    %2411 = vadd.xlane.f32.xlu0 %v2348
    %v2412 = vpop.xlane.xlu0 %2411
    %2413 = vadd.xlane.f32.xlu0 %v2350
    %v2414 = vpop.xlane.xlu0 %2413
    %2415 = vadd.xlane.f32.xlu0 %v2352
    %v2416 = vpop.xlane.xlu0 %2415
    %2417 = vadd.xlane.f32.xlu0 %v2354
    %v2418 = vpop.xlane.xlu0 %2417
    %2419 = vadd.xlane.f32.xlu0 %v2356
    %v2420 = vpop.xlane.xlu0 %2419
    %2421 = vadd.xlane.f32.xlu0 %v2358
    %v2422 = vpop.xlane.xlu0 %2421
    %v2423 = vrcp.pop %v2360
    %v2424 = vrcp.pop %v2362
    %v2425 = vrcp.pop %v2364
    %v2426 = vrcp.pop %v2366
    %v2427 = vrcp.pop %v2368
    %v2428 = vrcp.pop %v2370
    %v2429 = vrcp.pop %v2372
    %v2430 = vrcp.pop %v2374
    %v2431 = vrcp.pop %v2376
    %v2432 = vrcp.pop %v2378
    %v2433 = vrcp.pop %v2380
    %v2434 = vrcp.pop %v2382
    %v2435 = vrcp.pop %v2384
    %v2436 = vrcp.pop %v2386
    %v2437 = vrcp.pop %v2388
    %v2438 = vrcp.pop %v2390
    %v2439 = vrcp.pop %v2392
    %v2440 = vrcp.pop %v2394
    %v2441 = vrcp.pop %v2396
    %v2442 = vrcp.pop %v2398
    %v2443 = vrcp.pop %v2400
    %v2444 = vrcp.pop %v2402
    %v2445 = vrcp.pop %v2404
    %v2446 = vrcp.pop %v2406
    %v2447 = vrcp.pop %v2408
    %v2448 = vrcp.pop %v2410
    %v2449 = vrcp.pop %v2412
    %v2450 = vrcp.pop %v2414
    %v2451 = vrcp.pop %v2416
    %v2452 = vrcp.pop %v2418
    %v2453 = vrcp.pop %v2420
    %v2454 = vrcp.pop %v2422
    %v2455 = vmul.f32 %v2296, %v2423
    %v2456 = vmul.f32 %v2298, %v2424
    %v2457 = vmul.f32 %v2300, %v2425
    %v2458 = vmul.f32 %v2302, %v2426
    %v2459 = vmul.f32 %v2304, %v2427
    %v2460 = vmul.f32 %v2306, %v2428
    %v2461 = vmul.f32 %v2308, %v2429
    %v2462 = vmul.f32 %v2310, %v2430
    %v2463 = vmul.f32 %v2312, %v2431
    %v2464 = vmul.f32 %v2314, %v2432
    %v2465 = vmul.f32 %v2316, %v2433
    %v2466 = vmul.f32 %v2318, %v2434
    %v2467 = vmul.f32 %v2320, %v2435
    %v2468 = vmul.f32 %v2322, %v2436
    %v2469 = vmul.f32 %v2324, %v2437
    %v2470 = vmul.f32 %v2326, %v2438
    %v2471 = vmul.f32 %v2328, %v2439
    %v2472 = vmul.f32 %v2330, %v2440
    %v2473 = vmul.f32 %v2332, %v2441
    %v2474 = vmul.f32 %v2334, %v2442
    %v2475 = vmul.f32 %v2336, %v2443
    %v2476 = vmul.f32 %v2338, %v2444
    %v2477 = vmul.f32 %v2340, %v2445
    %v2478 = vmul.f32 %v2342, %v2446
    %v2479 = vmul.f32 %v2344, %v2447
    %v2480 = vmul.f32 %v2346, %v2448
    %v2481 = vmul.f32 %v2348, %v2449
    %v2482 = vmul.f32 %v2350, %v2450
    %v2483 = vmul.f32 %v2352, %v2451
    %v2484 = vmul.f32 %v2354, %v2452
    %v2485 = vmul.f32 %v2356, %v2453
    %v2486 = vmul.f32 %v2358, %v2454
    %2487 = vst [vmem:[%s10] sm:$0xff] %v2455
    %2488 = vst [vmem:[%s10 + $0x8] sm:$0xff] %v2456
    %2489 = vst [vmem:[%s10 + $0x10] sm:$0xff] %v2457
    %2490 = vst [vmem:[%s10 + $0x18] sm:$0xff] %v2458
    %2491 = vst [vmem:[%s10 + $0x20] sm:$0xff] %v2459
    %2492 = vst [vmem:[%s10 + $0x28] sm:$0xff] %v2460
    %2493 = vst [vmem:[%s10 + $0x30] sm:$0xff] %v2461
    %2494 = vst [vmem:[%s10 + $0x38] sm:$0xff] %v2462
    %2495 = vst [vmem:[%s10 + $0x40] sm:$0xff] %v2463
    %2496 = vst [vmem:[%s10 + $0x48] sm:$0xff] %v2464
    %2497 = vst [vmem:[%s10 + $0x50] sm:$0xff] %v2465
    %2498 = vst [vmem:[%s10 + $0x58] sm:$0xff] %v2466
    %2499 = vst [vmem:[%s10 + $0x60] sm:$0xff] %v2467
    %2500 = vst [vmem:[%s10 + $0x68] sm:$0xff] %v2468
    %2501 = vst [vmem:[%s10 + $0x70] sm:$0xff] %v2469
    %2502 = vst [vmem:[%s10 + $0x78] sm:$0xff] %v2470
    %2503 = vst [vmem:[%s10 + $0x80] sm:$0xff] %v2471
    %2504 = vst [vmem:[%s10 + $0x88] sm:$0xff] %v2472
    %2505 = vst [vmem:[%s10 + $0x90] sm:$0xff] %v2473
    %2506 = vst [vmem:[%s10 + $0x98] sm:$0xff] %v2474
    %2507 = vst [vmem:[%s10 + $0xa0] sm:$0xff] %v2475
    %2508 = vst [vmem:[%s10 + $0xa8] sm:$0xff] %v2476
    %2509 = vst [vmem:[%s10 + $0xb0] sm:$0xff] %v2477
    %2510 = vst [vmem:[%s10 + $0xb8] sm:$0xff] %v2478
    %2511 = vst [vmem:[%s10 + $0xc0] sm:$0xff] %v2479
    %2512 = vst [vmem:[%s10 + $0xc8] sm:$0xff] %v2480
    %2513 = vst [vmem:[%s10 + $0xd0] sm:$0xff] %v2481
    %2514 = vst [vmem:[%s10 + $0xd8] sm:$0xff] %v2482
    %2515 = vst [vmem:[%s10 + $0xe0] sm:$0xff] %v2483
    %2516 = vst [vmem:[%s10 + $0xe8] sm:$0xff] %v2484
    %2517 = vst [vmem:[%s10 + $0xf0] sm:$0xff] %v2485
    %2518 = vst [vmem:[%s10 + $0xf8] sm:$0xff] %v2486
  $region49: #{regc_forward.3} parent=0 // pred_fallthru
    _
  // Predicated region
  $region50: #{regc_forward.3} parent=0 // pred_check
    _
  $region51: #{regc_forward.3} parent=0 // pred_check_branch
    %2520 = sbr.rel (0) target = $region53
  $region52: #{regc_forward.3} parent=0 // pred_region
    _
  $region53: #{regc_forward.3} parent=0 // pred_fallthru
    _
  // Predicated region
  $region54: #{regc_forward.3} parent=0 // pred_check
    _
  $region55: #{regc_forward.3} parent=0 // pred_check_branch
    %2522 = sbr.rel (0) target = $region57
  $region56: #{regc_forward.3} parent=0 // pred_region
    _
  $region57: #{regc_forward.3} parent=0 // pred_fallthru
    _

</llo_original>
